<compile_context>
chip_gen: v6e
topology: v6e:2x2x1
jax: 0.10.0
libtpu: 0.0.40
codegen_flags: <defaults>
</compile_context>

<pallas_src>
import math

import jax
import jax.numpy as jnp
from jax import lax
from jax.experimental import pallas as pl
from jax.experimental.pallas import tpu as pltpu

# -------------------- synthetic network / init parameters --------------------
DT = 1.0              # inputs.countParams() dt (time step)
TAU_Y = 5.0           # network_params.tau_y      (cell uses tau_y * dt)
TAU_U = 10.0          # network_params.norm.tau_u
TAU_W = 10.0          # network_params.norm.tau_w
ALPHA = 0.1           # network_params.norm.alpha
SIGMA = 0.5           # network_params.norm.sigma
REC_SCALE = 1.0       # network_params.norm.recScale
Y0, W0, U0 = 0.1, 1.0, 0.5    # network_params.init.{y, w, u}
B0 = 1.0                       # network_params.b.b0   (downSamp = False)
SMOOTH_K = 5                   # odd gaussian kernel length = round(width / dt)

# exactly what the torch cell computes: dt / (tau_param * dt) = 1/tau
DT_OVER_TAU_Y = DT / (TAU_Y * DT)
DT_OVER_TAU_U = DT / (TAU_U * DT)
DT_OVER_TAU_W = DT / (TAU_W * DT)

# gaussian smoothing taps (normalized, odd length) -- compile-time constants
_HALF = SMOOTH_K // 2
_raw = [math.exp(-0.5 * ((k - _HALF) / (SMOOTH_K / 4.0)) ** 2) for k in range(SMOOTH_K)]
G_TAPS = tuple(g / sum(_raw) for g in _raw)

# TODO(synk): noise='additive'/'multiplicative' branches (torch.rand per step) and
# the extras {'u','w'} .item() bookkeeping are host-side / stochastic and are not
# part of the deterministic forward output; noise='none' is implemented.
# TODO(synk): the b downsampling path (expanderMat) is not defined in the reference;
# the downSamp=False branch of initializeB is implemented.
# TODO(synk): the module runs a single sequence (no batch dim); with multiple
# trials the per-step matmul should be batched to (B,N)@(N,2N) and a "parallel"
# grid axis added so v7x's second TensorCore is used.


# ------------------------------- Pallas kernel -------------------------------
def _organics_kernel(a_ref, b_ref, x_ref, wzT_ref, wrec_ref, y_out_ref, pad_scr):
    # a_ref, b_ref : (T,)              f32 SMEM  (per-step scalars)
    # x_ref        : (T, n_inputs)     f32 VMEM  (dir_one_hot)
    # wzT_ref      : (n_inputs, N)     f32 VMEM  (= Wz.T)
    # wrec_ref     : (N, 2N)           f32 VMEM  (= [Wy.T | Wx.T] fused)
    # y_out_ref    : (T, N)            f32 VMEM  output
    # pad_scr      : (T + K - 1, N)    f32 VMEM  scratch (zero-padded activity)
    T, N = y_out_ref.shape
    hp = lax.Precision.HIGHEST

    # Carry-independent input drive for all steps: one MXU matmul, hoisted.
    z_all = jnp.dot(x_ref[...], wzT_ref[...],
                    preferred_element_type=jnp.float32, precision=hp)      # (T, N)
    w_rec = wrec_ref[...]                                                  # hoisted load

    # zero the whole padded scratch once (gives the conv 'same' zero padding)
    pad_scr[...] = jnp.zeros(pad_scr.shape, dtype=jnp.float32)

    y = jnp.full((1, N), Y0, dtype=jnp.float32)
    w = jnp.full((1, 1), W0, dtype=jnp.float32)
    u = jnp.full((1, 1), U0, dtype=jnp.float32)

    # Fully unrolled recurrence (T static & small): all indices static.
    for t in range(T):
        a = a_ref[t]
        b = b_ref[t]

        # carry-independent per-step scalars (off the serial dependence chain)
        b_plus = jnp.maximum(b, 0.0)                      # b.clamp(0)
        inv_1pb = 1.0 / (1.0 + b_plus)
        coef_z = b_plus * inv_1pb
        sig_b = b_plus * SIGMA

        y_plus = jnp.maximum(y, 0.0)                      # y.clamp(0)
        w_plus = jnp.maximum(w, 0.0)                      # w.clamp(0)
        u_plus = jnp.minimum(u, 1.0)                      # u.clamp(max=1)

        # one fused recurrent matmul: (1,N)@(N,2N) -> [Wy@y | Wx@y]
        ryx = jnp.dot(y_plus, w_rec,
                      preferred_element_type=jnp.float32, precision=hp)    # (1, 2N)
        yy = ryx[:, :N]
        xy = ryx[:, N:]

        norm_sq = jnp.sum(y_plus * y_plus, axis=1, keepdims=True)          # (1, 1)
        du = DT_OVER_TAU_U * (-u + u * (norm_sq + (sig_b / (b_plus + u_plus)) ** 2))
        u_new = u + du
        du_plus = jnp.maximum(u_new, 0.0) - u_plus
        dw = DT_OVER_TAU_W * (-w + w_plus * u_plus + 1.0 + ALPHA * du_plus / DT)
        w_new = w + dw
        dy = DT_OVER_TAU_Y * (-y + coef_z * z_all[t:t + 1, :]
                              + (REC_SCALE / w_plus) * inv_1pb * yy) + a * xy
        y = y + dy
        w, u = w_new, u_new

        # output.clamp(0.0) per step -> padded scratch (static-index store)
        pad_scr[pl.ds(_HALF + t, 1), :] = jnp.maximum(y, 0.0)

    # smooth_output: gaussian conv1d(padding='same') over time as a K-tap banded
    # conv over the zero-padded scratch:  out[t] = sum_k g[k] * Y[t + k - K//2].
    acc = G_TAPS[0] * pad_scr[0:T, :]
    for k in range(1, SMOOTH_K):
        acc = acc + G_TAPS[k] * pad_scr[k:k + T, :]
    y_out_ref[...] = acc                                  # single dense store


def organics_net_forward(x, a_shift, b, Wz, Wy, Wx):
    T, _ = x.shape
    N = Wz.shape[0]
    w_rec = jnp.concatenate([Wy.T, Wx.T], axis=1)         # (N, 2N) fused weight
    return pl.pallas_call(
        _organics_kernel,
        out_shape=jax.ShapeDtypeStruct((T, N), jnp.float32),
        in_specs=[
            pl.BlockSpec(memory_space=pltpu.MemorySpace.SMEM),   # a_shift (T,)
            pl.BlockSpec(memory_space=pltpu.MemorySpace.SMEM),   # b       (T,)
            pl.BlockSpec(memory_space=pltpu.MemorySpace.VMEM),   # x       (T, n_in)
            pl.BlockSpec(memory_space=pltpu.MemorySpace.VMEM),   # Wz.T
            pl.BlockSpec(memory_space=pltpu.MemorySpace.VMEM),   # [Wy.T | Wx.T]
        ],
        out_specs=pl.BlockSpec(memory_space=pltpu.MemorySpace.VMEM),
        scratch_shapes=[pltpu.VMEM((T + 2 * _HALF, N), jnp.float32)],
    )(a_shift, b, x, Wz.T, w_rec)


# ------------------------- pure-JAX reference (torch-style) ------------------
def reference_forward(x, a_shift, b, Wz, Wy, Wx):
    T = x.shape[0]
    N = Wz.shape[0]
    hp = lax.Precision.HIGHEST
    y = jnp.full((N, 1), Y0, dtype=jnp.float32)
    w = jnp.float32(W0)
    u = jnp.float32(U0)
    outs = []
    for t in range(T):
        a = a_shift[t]
        bb = b[t]
        y_plus = jnp.maximum(y, 0.0)
        b_plus = jnp.maximum(bb, 0.0)
        w_plus = jnp.maximum(w, 0.0)
        u_plus = jnp.minimum(u, 1.0)
        z = jnp.dot(Wz, x[t][:, None], precision=hp)
        yy = jnp.dot(Wy, y_plus, precision=hp)
        xy = jnp.dot(Wx, y_plus, precision=hp)
        norm_sq = jnp.sum(y_plus ** 2)
        du = DT_OVER_TAU_U * (-u + u * (norm_sq +
                                        (b_plus * SIGMA / (b_plus + u_plus)) ** 2))
        u_new = u + du
        du_plus = jnp.maximum(u_new, 0.0) - u_plus
        dw = DT_OVER_TAU_W * (-w + w_plus * u_plus + 1.0 + ALPHA * du_plus / DT)
        w_new = w + dw
        dy = DT_OVER_TAU_Y * (-y + b_plus / (1.0 + b_plus) * z
                              + REC_SCALE / w_plus * (1.0 / (1.0 + b_plus)) * yy) \
             + a * xy
        y = y + dy
        w, u = w_new, u_new
        outs.append(y)
    Y = jnp.maximum(jnp.stack(outs, axis=0), 0.0)[:, :, 0]       # (T, N)
    # gaussian 'same' conv along time as a Toeplitz matmul (torch conv1d equiv.)
    g = jnp.array(G_TAPS, dtype=jnp.float32)
    diff = jnp.arange(T)[None, :] - jnp.arange(T)[:, None] + _HALF
    smooth_mat = jnp.where((diff >= 0) & (diff < SMOOTH_K),
                           g[jnp.clip(diff, 0, SMOOTH_K - 1)],
                           0.0).astype(jnp.float32)
    return jnp.dot(smooth_mat, Y, precision=hp)


# ----------------------------------- main ------------------------------------
if __name__ == "__main__":
    T, N, NIN = 8, 32, 8     # n_timestamps, n_cells, n_inputs

    key = jax.random.PRNGKey(0)
    k0, k1, k2, k3, k4, k5 = jax.random.split(key, 6)

    # inputs.dir_one_hot : (T, n_inputs) one-hot per time step
    idx = jax.random.randint(k0, (T,), 0, NIN)
    x = jax.nn.one_hot(idx, NIN, dtype=jnp.float32)
    # inputs.a_shift : per-step scalar gain on the Wx pathway
    a_shift = 0.05 * jax.random.uniform(k1, (T,), dtype=jnp.float32)
    # self.b : nn.Parameter, b0/2 * rand + b0/4   (downSamp=False branch)
    b = (B0 / 2.0) * jax.random.uniform(k2, (T,), dtype=jnp.float32) + B0 / 4.0
    # weights W.input / W.rec / W.shift
    Wz = 0.5 * jax.random.normal(k3, (N, NIN), dtype=jnp.float32)
    Wy = (0.5 / jnp.sqrt(N)) * jax.random.normal(k4, (N, N), dtype=jnp.float32)
    Wx = (0.1 / jnp.sqrt(N)) * jax.random.normal(k5, (N, N), dtype=jnp.float32)

    out = organics_net_forward(x, a_shift, b, Wz, Wy, Wx)
    out = jax.block_until_ready(out)

    ref = reference_forward(x, a_shift, b, Wz, Wy, Wx)
    assert out.shape == (T, N)
    assert bool(jnp.all(jnp.isfinite(out)))
    assert bool(jnp.allclose(out, ref, rtol=1e-4, atol=1e-4)), (
        f"max abs err = {float(jnp.max(jnp.abs(out - ref)))}")

    print("KERNEL_OK")
</pallas_src>

<mosaic_0001>
module attributes {stable_mosaic.version = 11 : i64} {
  func.func @_organics_kernel(%arg0: memref<8xf32, #tpu.memory_space<smem>>, %arg1: memref<8xf32, #tpu.memory_space<smem>>, %arg2: memref<8x8xf32, #tpu.memory_space<vmem>>, %arg3: memref<8x32xf32, #tpu.memory_space<vmem>>, %arg4: memref<32x64xf32, #tpu.memory_space<vmem>>, %arg5: memref<8x32xf32, #tpu.memory_space<vmem>>, %arg6: memref<12x32xf32, #tpu.memory_space<vmem>>) attributes {dimension_semantics = [], scalar_prefetch = 0 : i64, scratch_operands = 1 : i64, tpu.core_type = #tpu.core_type<tc>} {
    %c0 = arith.constant 0 : index
    %c0_0 = arith.constant 0 : index
    %0 = vector.load %arg2[%c0, %c0_0] : memref<8x8xf32, #tpu.memory_space<vmem>>, vector<8x8xf32>
    %c0_1 = arith.constant 0 : index
    %c0_2 = arith.constant 0 : index
    %1 = vector.load %arg3[%c0_1, %c0_2] : memref<8x32xf32, #tpu.memory_space<vmem>>, vector<8x32xf32>
    %cst = arith.constant dense<0.000000e+00> : vector<8x32xf32>
    %2 = tpu.matmul %0, %1, %cst {dimension_numbers = #tpu.dot_dimension_numbers<[1], [0], [0], [1], [0, 0, 1, 1], [], []>, precision = #tpu.contract_precision<fp32>} : vector<8x8xf32>, vector<8x32xf32>, vector<8x32xf32> -> vector<8x32xf32>
    %c0_3 = arith.constant 0 : index
    %c0_4 = arith.constant 0 : index
    %3 = vector.load %arg4[%c0_3, %c0_4] : memref<32x64xf32, #tpu.memory_space<vmem>>, vector<32x64xf32>
    %cst_5 = arith.constant 0.000000e+00 : f32
    %4 = vector.broadcast %cst_5 : f32 to vector<12x32xf32>
    %c0_6 = arith.constant 0 : index
    %c0_7 = arith.constant 0 : index
    %5 = vector.load %arg6[%c0_6, %c0_7] : memref<12x32xf32, #tpu.memory_space<vmem>>, vector<12x32xf32>
    tpu.vector_store %arg6[%c0_6, %c0_7], %4 {strides = array<i32>} : memref<12x32xf32, #tpu.memory_space<vmem>>, vector<12x32xf32>,
    %cst_8 = arith.constant 1.000000e-01 : f32
    %6 = vector.broadcast %cst_8 : f32 to vector<1x32xf32>
    %cst_9 = arith.constant 1.000000e+00 : f32
    %7 = vector.broadcast %cst_9 : f32 to vector<1x1xf32>
    %cst_10 = arith.constant 5.000000e-01 : f32
    %8 = vector.broadcast %cst_10 : f32 to vector<1x1xf32>
    %c0_11 = arith.constant 0 : index
    %9 = memref.load %arg0[%c0_11] : memref<8xf32, #tpu.memory_space<smem>>
    %c0_12 = arith.constant 0 : index
    %10 = memref.load %arg1[%c0_12] : memref<8xf32, #tpu.memory_space<smem>>
    %cst_13 = arith.constant 0.000000e+00 : f32
    %11 = arith.maximumf %10, %cst_13 : f32
    %cst_14 = arith.constant 1.000000e+00 : f32
    %12 = arith.addf %cst_14, %11 : f32
    %cst_15 = arith.constant 1.000000e+00 : f32
    %13 = arith.divf %cst_15, %12 : f32
    %14 = arith.mulf %11, %13 : f32
    %cst_16 = arith.constant 5.000000e-01 : f32
    %15 = arith.mulf %11, %cst_16 : f32
    %cst_17 = arith.constant 0.000000e+00 : f32
    %16 = vector.broadcast %cst_17 : f32 to vector<1x32xf32>
    %17 = arith.maximumf %6, %16 : vector<1x32xf32>
    %cst_18 = arith.constant 0.000000e+00 : f32
    %18 = vector.broadcast %cst_18 : f32 to vector<1x1xf32>
    %19 = arith.maximumf %7, %18 : vector<1x1xf32>
    %cst_19 = arith.constant 1.000000e+00 : f32
    %20 = vector.broadcast %cst_19 : f32 to vector<1x1xf32>
    %21 = arith.minimumf %8, %20 : vector<1x1xf32>
    %cst_20 = arith.constant dense<0.000000e+00> : vector<1x64xf32>
    %22 = tpu.matmul %17, %3, %cst_20 {dimension_numbers = #tpu.dot_dimension_numbers<[1], [0], [0], [1], [0, 0, 1, 1], [], []>, precision = #tpu.contract_precision<fp32>} : vector<1x32xf32>, vector<32x64xf32>, vector<1x64xf32> -> vector<1x64xf32>
    %23 = vector.extract_strided_slice %22 {offsets = [0, 0], sizes = [1, 32], strides = [1, 1]} : vector<1x64xf32> to vector<1x32xf32>
    %24 = vector.extract_strided_slice %22 {offsets = [0, 32], sizes = [1, 32], strides = [1, 1]} : vector<1x64xf32> to vector<1x32xf32>
    %25 = arith.mulf %17, %17 : vector<1x32xf32>
    %cst_21 = arith.constant dense<0.000000e+00> : vector<1xf32>
    %26 = vector.multi_reduction <add>, %25, %cst_21 [1] : vector<1x32xf32> to vector<1xf32>
    %27 = vector.shape_cast %26 : vector<1xf32> to vector<1x1xf32>
    %cst_22 = arith.constant 0.000000e+00 : f32
    %28 = vector.broadcast %cst_22 : f32 to vector<1x1xf32>
    %29 = arith.subf %28, %8 : vector<1x1xf32>
    %30 = vector.broadcast %11 : f32 to vector<1x1xf32>
    %31 = arith.addf %30, %21 : vector<1x1xf32>
    %32 = vector.broadcast %15 : f32 to vector<1x1xf32>
    %33 = arith.divf %32, %31 : vector<1x1xf32>
    %34 = arith.mulf %33, %33 : vector<1x1xf32>
    %35 = arith.addf %27, %34 : vector<1x1xf32>
    %36 = arith.mulf %8, %35 : vector<1x1xf32>
    %37 = arith.addf %29, %36 : vector<1x1xf32>
    %cst_23 = arith.constant 1.000000e-01 : f32
    %38 = vector.broadcast %cst_23 : f32 to vector<1x1xf32>
    %39 = arith.mulf %38, %37 : vector<1x1xf32>
    %40 = arith.addf %8, %39 : vector<1x1xf32>
    %cst_24 = arith.constant 0.000000e+00 : f32
    %41 = vector.broadcast %cst_24 : f32 to vector<1x1xf32>
    %42 = arith.maximumf %40, %41 : vector<1x1xf32>
    %43 = arith.subf %42, %21 : vector<1x1xf32>
    %cst_25 = arith.constant 0.000000e+00 : f32
    %44 = vector.broadcast %cst_25 : f32 to vector<1x1xf32>
    %45 = arith.subf %44, %7 : vector<1x1xf32>
    %46 = arith.mulf %19, %21 : vector<1x1xf32>
    %47 = arith.addf %45, %46 : vector<1x1xf32>
    %cst_26 = arith.constant 1.000000e+00 : f32
    %48 = vector.broadcast %cst_26 : f32 to vector<1x1xf32>
    %49 = arith.addf %47, %48 : vector<1x1xf32>
    %cst_27 = arith.constant 1.000000e-01 : f32
    %50 = vector.broadcast %cst_27 : f32 to vector<1x1xf32>
    %51 = arith.mulf %50, %43 : vector<1x1xf32>
    %cst_28 = arith.constant 1.000000e+00 : f32
    %52 = vector.broadcast %cst_28 : f32 to vector<1x1xf32>
    %53 = arith.divf %51, %52 : vector<1x1xf32>
    %54 = arith.addf %49, %53 : vector<1x1xf32>
    %cst_29 = arith.constant 1.000000e-01 : f32
    %55 = vector.broadcast %cst_29 : f32 to vector<1x1xf32>
    %56 = arith.mulf %55, %54 : vector<1x1xf32>
    %57 = arith.addf %7, %56 : vector<1x1xf32>
    %cst_30 = arith.constant 0.000000e+00 : f32
    %58 = vector.broadcast %cst_30 : f32 to vector<1x32xf32>
    %59 = arith.subf %58, %6 : vector<1x32xf32>
    %60 = vector.extract_strided_slice %2 {offsets = [0, 0], sizes = [1, 32], strides = [1, 1]} : vector<8x32xf32> to vector<1x32xf32>
    %61 = vector.broadcast %14 : f32 to vector<1x32xf32>
    %62 = arith.mulf %61, %60 : vector<1x32xf32>
    %63 = arith.addf %59, %62 : vector<1x32xf32>
    %cst_31 = arith.constant 1.000000e+00 : f32
    %64 = vector.broadcast %cst_31 : f32 to vector<1x1xf32>
    %65 = arith.divf %64, %19 : vector<1x1xf32>
    %66 = vector.broadcast %13 : f32 to vector<1x1xf32>
    %67 = arith.mulf %65, %66 : vector<1x1xf32>
    %68 = vector.broadcast %67 : vector<1x1xf32> to vector<1x32xf32>
    %69 = arith.mulf %68, %23 : vector<1x32xf32>
    %70 = arith.addf %63, %69 : vector<1x32xf32>
    %cst_32 = arith.constant 2.000000e-01 : f32
    %71 = vector.broadcast %cst_32 : f32 to vector<1x32xf32>
    %72 = arith.mulf %71, %70 : vector<1x32xf32>
    %73 = vector.broadcast %9 : f32 to vector<1x32xf32>
    %74 = arith.mulf %73, %24 : vector<1x32xf32>
    %75 = arith.addf %72, %74 : vector<1x32xf32>
    %76 = arith.addf %6, %75 : vector<1x32xf32>
    %cst_33 = arith.constant 0.000000e+00 : f32
    %77 = vector.broadcast %cst_33 : f32 to vector<1x32xf32>
    %78 = arith.maximumf %76, %77 : vector<1x32xf32>
    %c2 = arith.constant 2 : index
    %c0_34 = arith.constant 0 : index
    %79 = vector.load %arg6[%c2, %c0_34] : memref<12x32xf32, #tpu.memory_space<vmem>>, vector<1x32xf32>
    tpu.vector_store %arg6[%c2, %c0_34], %78 {strides = array<i32>} : memref<12x32xf32, #tpu.memory_space<vmem>>, vector<1x32xf32>,
    %c1 = arith.constant 1 : index
    %80 = memref.load %arg0[%c1] : memref<8xf32, #tpu.memory_space<smem>>
    %c1_35 = arith.constant 1 : index
    %81 = memref.load %arg1[%c1_35] : memref<8xf32, #tpu.memory_space<smem>>
    %cst_36 = arith.constant 0.000000e+00 : f32
    %82 = arith.maximumf %81, %cst_36 : f32
    %cst_37 = arith.constant 1.000000e+00 : f32
    %83 = arith.addf %cst_37, %82 : f32
    %cst_38 = arith.constant 1.000000e+00 : f32
    %84 = arith.divf %cst_38, %83 : f32
    %85 = arith.mulf %82, %84 : f32
    %cst_39 = arith.constant 5.000000e-01 : f32
    %86 = arith.mulf %82, %cst_39 : f32
    %cst_40 = arith.constant 0.000000e+00 : f32
    %87 = vector.broadcast %cst_40 : f32 to vector<1x32xf32>
    %88 = arith.maximumf %76, %87 : vector<1x32xf32>
    %cst_41 = arith.constant 0.000000e+00 : f32
    %89 = vector.broadcast %cst_41 : f32 to vector<1x1xf32>
    %90 = arith.maximumf %57, %89 : vector<1x1xf32>
    %cst_42 = arith.constant 1.000000e+00 : f32
    %91 = vector.broadcast %cst_42 : f32 to vector<1x1xf32>
    %92 = arith.minimumf %40, %91 : vector<1x1xf32>
    %cst_43 = arith.constant dense<0.000000e+00> : vector<1x64xf32>
    %93 = tpu.matmul %88, %3, %cst_43 {dimension_numbers = #tpu.dot_dimension_numbers<[1], [0], [0], [1], [0, 0, 1, 1], [], []>, precision = #tpu.contract_precision<fp32>} : vector<1x32xf32>, vector<32x64xf32>, vector<1x64xf32> -> vector<1x64xf32>
    %94 = vector.extract_strided_slice %93 {offsets = [0, 0], sizes = [1, 32], strides = [1, 1]} : vector<1x64xf32> to vector<1x32xf32>
    %95 = vector.extract_strided_slice %93 {offsets = [0, 32], sizes = [1, 32], strides = [1, 1]} : vector<1x64xf32> to vector<1x32xf32>
    %96 = arith.mulf %88, %88 : vector<1x32xf32>
    %cst_44 = arith.constant dense<0.000000e+00> : vector<1xf32>
    %97 = vector.multi_reduction <add>, %96, %cst_44 [1] : vector<1x32xf32> to vector<1xf32>
    %98 = vector.shape_cast %97 : vector<1xf32> to vector<1x1xf32>
    %cst_45 = arith.constant 0.000000e+00 : f32
    %99 = vector.broadcast %cst_45 : f32 to vector<1x1xf32>
    %100 = arith.subf %99, %40 : vector<1x1xf32>
    %101 = vector.broadcast %82 : f32 to vector<1x1xf32>
    %102 = arith.addf %101, %92 : vector<1x1xf32>
    %103 = vector.broadcast %86 : f32 to vector<1x1xf32>
    %104 = arith.divf %103, %102 : vector<1x1xf32>
    %105 = arith.mulf %104, %104 : vector<1x1xf32>
    %106 = arith.addf %98, %105 : vector<1x1xf32>
    %107 = arith.mulf %40, %106 : vector<1x1xf32>
    %108 = arith.addf %100, %107 : vector<1x1xf32>
    %cst_46 = arith.constant 1.000000e-01 : f32
    %109 = vector.broadcast %cst_46 : f32 to vector<1x1xf32>
    %110 = arith.mulf %109, %108 : vector<1x1xf32>
    %111 = arith.addf %40, %110 : vector<1x1xf32>
    %cst_47 = arith.constant 0.000000e+00 : f32
    %112 = vector.broadcast %cst_47 : f32 to vector<1x1xf32>
    %113 = arith.maximumf %111, %112 : vector<1x1xf32>
    %114 = arith.subf %113, %92 : vector<1x1xf32>
    %cst_48 = arith.constant 0.000000e+00 : f32
    %115 = vector.broadcast %cst_48 : f32 to vector<1x1xf32>
    %116 = arith.subf %115, %57 : vector<1x1xf32>
    %117 = arith.mulf %90, %92 : vector<1x1xf32>
    %118 = arith.addf %116, %117 : vector<1x1xf32>
    %cst_49 = arith.constant 1.000000e+00 : f32
    %119 = vector.broadcast %cst_49 : f32 to vector<1x1xf32>
    %120 = arith.addf %118, %119 : vector<1x1xf32>
    %cst_50 = arith.constant 1.000000e-01 : f32
    %121 = vector.broadcast %cst_50 : f32 to vector<1x1xf32>
    %122 = arith.mulf %121, %114 : vector<1x1xf32>
    %cst_51 = arith.constant 1.000000e+00 : f32
    %123 = vector.broadcast %cst_51 : f32 to vector<1x1xf32>
    %124 = arith.divf %122, %123 : vector<1x1xf32>
    %125 = arith.addf %120, %124 : vector<1x1xf32>
    %cst_52 = arith.constant 1.000000e-01 : f32
    %126 = vector.broadcast %cst_52 : f32 to vector<1x1xf32>
    %127 = arith.mulf %126, %125 : vector<1x1xf32>
    %128 = arith.addf %57, %127 : vector<1x1xf32>
    %cst_53 = arith.constant 0.000000e+00 : f32
    %129 = vector.broadcast %cst_53 : f32 to vector<1x32xf32>
    %130 = arith.subf %129, %76 : vector<1x32xf32>
    %131 = vector.extract_strided_slice %2 {offsets = [1, 0], sizes = [1, 32], strides = [1, 1]} : vector<8x32xf32> to vector<1x32xf32>
    %132 = vector.broadcast %85 : f32 to vector<1x32xf32>
    %133 = arith.mulf %132, %131 : vector<1x32xf32>
    %134 = arith.addf %130, %133 : vector<1x32xf32>
    %cst_54 = arith.constant 1.000000e+00 : f32
    %135 = vector.broadcast %cst_54 : f32 to vector<1x1xf32>
    %136 = arith.divf %135, %90 : vector<1x1xf32>
    %137 = vector.broadcast %84 : f32 to vector<1x1xf32>
    %138 = arith.mulf %136, %137 : vector<1x1xf32>
    %139 = vector.broadcast %138 : vector<1x1xf32> to vector<1x32xf32>
    %140 = arith.mulf %139, %94 : vector<1x32xf32>
    %141 = arith.addf %134, %140 : vector<1x32xf32>
    %cst_55 = arith.constant 2.000000e-01 : f32
    %142 = vector.broadcast %cst_55 : f32 to vector<1x32xf32>
    %143 = arith.mulf %142, %141 : vector<1x32xf32>
    %144 = vector.broadcast %80 : f32 to vector<1x32xf32>
    %145 = arith.mulf %144, %95 : vector<1x32xf32>
    %146 = arith.addf %143, %145 : vector<1x32xf32>
    %147 = arith.addf %76, %146 : vector<1x32xf32>
    %cst_56 = arith.constant 0.000000e+00 : f32
    %148 = vector.broadcast %cst_56 : f32 to vector<1x32xf32>
    %149 = arith.maximumf %147, %148 : vector<1x32xf32>
    %c3 = arith.constant 3 : index
    %c0_57 = arith.constant 0 : index
    %150 = vector.load %arg6[%c3, %c0_57] : memref<12x32xf32, #tpu.memory_space<vmem>>, vector<1x32xf32>
    tpu.vector_store %arg6[%c3, %c0_57], %149 {strides = array<i32>} : memref<12x32xf32, #tpu.memory_space<vmem>>, vector<1x32xf32>,
    %c2_58 = arith.constant 2 : index
    %151 = memref.load %arg0[%c2_58] : memref<8xf32, #tpu.memory_space<smem>>
    %c2_59 = arith.constant 2 : index
    %152 = memref.load %arg1[%c2_59] : memref<8xf32, #tpu.memory_space<smem>>
    %cst_60 = arith.constant 0.000000e+00 : f32
    %153 = arith.maximumf %152, %cst_60 : f32
    %cst_61 = arith.constant 1.000000e+00 : f32
    %154 = arith.addf %cst_61, %153 : f32
    %cst_62 = arith.constant 1.000000e+00 : f32
    %155 = arith.divf %cst_62, %154 : f32
    %156 = arith.mulf %153, %155 : f32
    %cst_63 = arith.constant 5.000000e-01 : f32
    %157 = arith.mulf %153, %cst_63 : f32
    %cst_64 = arith.constant 0.000000e+00 : f32
    %158 = vector.broadcast %cst_64 : f32 to vector<1x32xf32>
    %159 = arith.maximumf %147, %158 : vector<1x32xf32>
    %cst_65 = arith.constant 0.000000e+00 : f32
    %160 = vector.broadcast %cst_65 : f32 to vector<1x1xf32>
    %161 = arith.maximumf %128, %160 : vector<1x1xf32>
    %cst_66 = arith.constant 1.000000e+00 : f32
    %162 = vector.broadcast %cst_66 : f32 to vector<1x1xf32>
    %163 = arith.minimumf %111, %162 : vector<1x1xf32>
    %cst_67 = arith.constant dense<0.000000e+00> : vector<1x64xf32>
    %164 = tpu.matmul %159, %3, %cst_67 {dimension_numbers = #tpu.dot_dimension_numbers<[1], [0], [0], [1], [0, 0, 1, 1], [], []>, precision = #tpu.contract_precision<fp32>} : vector<1x32xf32>, vector<32x64xf32>, vector<1x64xf32> -> vector<1x64xf32>
    %165 = vector.extract_strided_slice %164 {offsets = [0, 0], sizes = [1, 32], strides = [1, 1]} : vector<1x64xf32> to vector<1x32xf32>
    %166 = vector.extract_strided_slice %164 {offsets = [0, 32], sizes = [1, 32], strides = [1, 1]} : vector<1x64xf32> to vector<1x32xf32>
    %167 = arith.mulf %159, %159 : vector<1x32xf32>
    %cst_68 = arith.constant dense<0.000000e+00> : vector<1xf32>
    %168 = vector.multi_reduction <add>, %167, %cst_68 [1] : vector<1x32xf32> to vector<1xf32>
    %169 = vector.shape_cast %168 : vector<1xf32> to vector<1x1xf32>
    %cst_69 = arith.constant 0.000000e+00 : f32
    %170 = vector.broadcast %cst_69 : f32 to vector<1x1xf32>
    %171 = arith.subf %170, %111 : vector<1x1xf32>
    %172 = vector.broadcast %153 : f32 to vector<1x1xf32>
    %173 = arith.addf %172, %163 : vector<1x1xf32>
    %174 = vector.broadcast %157 : f32 to vector<1x1xf32>
    %175 = arith.divf %174, %173 : vector<1x1xf32>
    %176 = arith.mulf %175, %175 : vector<1x1xf32>
    %177 = arith.addf %169, %176 : vector<1x1xf32>
    %178 = arith.mulf %111, %177 : vector<1x1xf32>
    %179 = arith.addf %171, %178 : vector<1x1xf32>
    %cst_70 = arith.constant 1.000000e-01 : f32
    %180 = vector.broadcast %cst_70 : f32 to vector<1x1xf32>
    %181 = arith.mulf %180, %179 : vector<1x1xf32>
    %182 = arith.addf %111, %181 : vector<1x1xf32>
    %cst_71 = arith.constant 0.000000e+00 : f32
    %183 = vector.broadcast %cst_71 : f32 to vector<1x1xf32>
    %184 = arith.maximumf %182, %183 : vector<1x1xf32>
    %185 = arith.subf %184, %163 : vector<1x1xf32>
    %cst_72 = arith.constant 0.000000e+00 : f32
    %186 = vector.broadcast %cst_72 : f32 to vector<1x1xf32>
    %187 = arith.subf %186, %128 : vector<1x1xf32>
    %188 = arith.mulf %161, %163 : vector<1x1xf32>
    %189 = arith.addf %187, %188 : vector<1x1xf32>
    %cst_73 = arith.constant 1.000000e+00 : f32
    %190 = vector.broadcast %cst_73 : f32 to vector<1x1xf32>
    %191 = arith.addf %189, %190 : vector<1x1xf32>
    %cst_74 = arith.constant 1.000000e-01 : f32
    %192 = vector.broadcast %cst_74 : f32 to vector<1x1xf32>
    %193 = arith.mulf %192, %185 : vector<1x1xf32>
    %cst_75 = arith.constant 1.000000e+00 : f32
    %194 = vector.broadcast %cst_75 : f32 to vector<1x1xf32>
    %195 = arith.divf %193, %194 : vector<1x1xf32>
    %196 = arith.addf %191, %195 : vector<1x1xf32>
    %cst_76 = arith.constant 1.000000e-01 : f32
    %197 = vector.broadcast %cst_76 : f32 to vector<1x1xf32>
    %198 = arith.mulf %197, %196 : vector<1x1xf32>
    %199 = arith.addf %128, %198 : vector<1x1xf32>
    %cst_77 = arith.constant 0.000000e+00 : f32
    %200 = vector.broadcast %cst_77 : f32 to vector<1x32xf32>
    %201 = arith.subf %200, %147 : vector<1x32xf32>
    %202 = vector.extract_strided_slice %2 {offsets = [2, 0], sizes = [1, 32], strides = [1, 1]} : vector<8x32xf32> to vector<1x32xf32>
    %203 = vector.broadcast %156 : f32 to vector<1x32xf32>
    %204 = arith.mulf %203, %202 : vector<1x32xf32>
    %205 = arith.addf %201, %204 : vector<1x32xf32>
    %cst_78 = arith.constant 1.000000e+00 : f32
    %206 = vector.broadcast %cst_78 : f32 to vector<1x1xf32>
    %207 = arith.divf %206, %161 : vector<1x1xf32>
    %208 = vector.broadcast %155 : f32 to vector<1x1xf32>
    %209 = arith.mulf %207, %208 : vector<1x1xf32>
    %210 = vector.broadcast %209 : vector<1x1xf32> to vector<1x32xf32>
    %211 = arith.mulf %210, %165 : vector<1x32xf32>
    %212 = arith.addf %205, %211 : vector<1x32xf32>
    %cst_79 = arith.constant 2.000000e-01 : f32
    %213 = vector.broadcast %cst_79 : f32 to vector<1x32xf32>
    %214 = arith.mulf %213, %212 : vector<1x32xf32>
    %215 = vector.broadcast %151 : f32 to vector<1x32xf32>
    %216 = arith.mulf %215, %166 : vector<1x32xf32>
    %217 = arith.addf %214, %216 : vector<1x32xf32>
    %218 = arith.addf %147, %217 : vector<1x32xf32>
    %cst_80 = arith.constant 0.000000e+00 : f32
    %219 = vector.broadcast %cst_80 : f32 to vector<1x32xf32>
    %220 = arith.maximumf %218, %219 : vector<1x32xf32>
    %c4 = arith.constant 4 : index
    %c0_81 = arith.constant 0 : index
    %221 = vector.load %arg6[%c4, %c0_81] : memref<12x32xf32, #tpu.memory_space<vmem>>, vector<1x32xf32>
    tpu.vector_store %arg6[%c4, %c0_81], %220 {strides = array<i32>} : memref<12x32xf32, #tpu.memory_space<vmem>>, vector<1x32xf32>,
    %c3_82 = arith.constant 3 : index
    %222 = memref.load %arg0[%c3_82] : memref<8xf32, #tpu.memory_space<smem>>
    %c3_83 = arith.constant 3 : index
    %223 = memref.load %arg1[%c3_83] : memref<8xf32, #tpu.memory_space<smem>>
    %cst_84 = arith.constant 0.000000e+00 : f32
    %224 = arith.maximumf %223, %cst_84 : f32
    %cst_85 = arith.constant 1.000000e+00 : f32
    %225 = arith.addf %cst_85, %224 : f32
    %cst_86 = arith.constant 1.000000e+00 : f32
    %226 = arith.divf %cst_86, %225 : f32
    %227 = arith.mulf %224, %226 : f32
    %cst_87 = arith.constant 5.000000e-01 : f32
    %228 = arith.mulf %224, %cst_87 : f32
    %cst_88 = arith.constant 0.000000e+00 : f32
    %229 = vector.broadcast %cst_88 : f32 to vector<1x32xf32>
    %230 = arith.maximumf %218, %229 : vector<1x32xf32>
    %cst_89 = arith.constant 0.000000e+00 : f32
    %231 = vector.broadcast %cst_89 : f32 to vector<1x1xf32>
    %232 = arith.maximumf %199, %231 : vector<1x1xf32>
    %cst_90 = arith.constant 1.000000e+00 : f32
    %233 = vector.broadcast %cst_90 : f32 to vector<1x1xf32>
    %234 = arith.minimumf %182, %233 : vector<1x1xf32>
    %cst_91 = arith.constant dense<0.000000e+00> : vector<1x64xf32>
    %235 = tpu.matmul %230, %3, %cst_91 {dimension_numbers = #tpu.dot_dimension_numbers<[1], [0], [0], [1], [0, 0, 1, 1], [], []>, precision = #tpu.contract_precision<fp32>} : vector<1x32xf32>, vector<32x64xf32>, vector<1x64xf32> -> vector<1x64xf32>
    %236 = vector.extract_strided_slice %235 {offsets = [0, 0], sizes = [1, 32], strides = [1, 1]} : vector<1x64xf32> to vector<1x32xf32>
    %237 = vector.extract_strided_slice %235 {offsets = [0, 32], sizes = [1, 32], strides = [1, 1]} : vector<1x64xf32> to vector<1x32xf32>
    %238 = arith.mulf %230, %230 : vector<1x32xf32>
    %cst_92 = arith.constant dense<0.000000e+00> : vector<1xf32>
    %239 = vector.multi_reduction <add>, %238, %cst_92 [1] : vector<1x32xf32> to vector<1xf32>
    %240 = vector.shape_cast %239 : vector<1xf32> to vector<1x1xf32>
    %cst_93 = arith.constant 0.000000e+00 : f32
    %241 = vector.broadcast %cst_93 : f32 to vector<1x1xf32>
    %242 = arith.subf %241, %182 : vector<1x1xf32>
    %243 = vector.broadcast %224 : f32 to vector<1x1xf32>
    %244 = arith.addf %243, %234 : vector<1x1xf32>
    %245 = vector.broadcast %228 : f32 to vector<1x1xf32>
    %246 = arith.divf %245, %244 : vector<1x1xf32>
    %247 = arith.mulf %246, %246 : vector<1x1xf32>
    %248 = arith.addf %240, %247 : vector<1x1xf32>
    %249 = arith.mulf %182, %248 : vector<1x1xf32>
    %250 = arith.addf %242, %249 : vector<1x1xf32>
    %cst_94 = arith.constant 1.000000e-01 : f32
    %251 = vector.broadcast %cst_94 : f32 to vector<1x1xf32>
    %252 = arith.mulf %251, %250 : vector<1x1xf32>
    %253 = arith.addf %182, %252 : vector<1x1xf32>
    %cst_95 = arith.constant 0.000000e+00 : f32
    %254 = vector.broadcast %cst_95 : f32 to vector<1x1xf32>
    %255 = arith.maximumf %253, %254 : vector<1x1xf32>
    %256 = arith.subf %255, %234 : vector<1x1xf32>
    %cst_96 = arith.constant 0.000000e+00 : f32
    %257 = vector.broadcast %cst_96 : f32 to vector<1x1xf32>
    %258 = arith.subf %257, %199 : vector<1x1xf32>
    %259 = arith.mulf %232, %234 : vector<1x1xf32>
    %260 = arith.addf %258, %259 : vector<1x1xf32>
    %cst_97 = arith.constant 1.000000e+00 : f32
    %261 = vector.broadcast %cst_97 : f32 to vector<1x1xf32>
    %262 = arith.addf %260, %261 : vector<1x1xf32>
    %cst_98 = arith.constant 1.000000e-01 : f32
    %263 = vector.broadcast %cst_98 : f32 to vector<1x1xf32>
    %264 = arith.mulf %263, %256 : vector<1x1xf32>
    %cst_99 = arith.constant 1.000000e+00 : f32
    %265 = vector.broadcast %cst_99 : f32 to vector<1x1xf32>
    %266 = arith.divf %264, %265 : vector<1x1xf32>
    %267 = arith.addf %262, %266 : vector<1x1xf32>
    %cst_100 = arith.constant 1.000000e-01 : f32
    %268 = vector.broadcast %cst_100 : f32 to vector<1x1xf32>
    %269 = arith.mulf %268, %267 : vector<1x1xf32>
    %270 = arith.addf %199, %269 : vector<1x1xf32>
    %cst_101 = arith.constant 0.000000e+00 : f32
    %271 = vector.broadcast %cst_101 : f32 to vector<1x32xf32>
    %272 = arith.subf %271, %218 : vector<1x32xf32>
    %273 = vector.extract_strided_slice %2 {offsets = [3, 0], sizes = [1, 32], strides = [1, 1]} : vector<8x32xf32> to vector<1x32xf32>
    %274 = vector.broadcast %227 : f32 to vector<1x32xf32>
    %275 = arith.mulf %274, %273 : vector<1x32xf32>
    %276 = arith.addf %272, %275 : vector<1x32xf32>
    %cst_102 = arith.constant 1.000000e+00 : f32
    %277 = vector.broadcast %cst_102 : f32 to vector<1x1xf32>
    %278 = arith.divf %277, %232 : vector<1x1xf32>
    %279 = vector.broadcast %226 : f32 to vector<1x1xf32>
    %280 = arith.mulf %278, %279 : vector<1x1xf32>
    %281 = vector.broadcast %280 : vector<1x1xf32> to vector<1x32xf32>
    %282 = arith.mulf %281, %236 : vector<1x32xf32>
    %283 = arith.addf %276, %282 : vector<1x32xf32>
    %cst_103 = arith.constant 2.000000e-01 : f32
    %284 = vector.broadcast %cst_103 : f32 to vector<1x32xf32>
    %285 = arith.mulf %284, %283 : vector<1x32xf32>
    %286 = vector.broadcast %222 : f32 to vector<1x32xf32>
    %287 = arith.mulf %286, %237 : vector<1x32xf32>
    %288 = arith.addf %285, %287 : vector<1x32xf32>
    %289 = arith.addf %218, %288 : vector<1x32xf32>
    %cst_104 = arith.constant 0.000000e+00 : f32
    %290 = vector.broadcast %cst_104 : f32 to vector<1x32xf32>
    %291 = arith.maximumf %289, %290 : vector<1x32xf32>
    %c5 = arith.constant 5 : index
    %c0_105 = arith.constant 0 : index
    %292 = vector.load %arg6[%c5, %c0_105] : memref<12x32xf32, #tpu.memory_space<vmem>>, vector<1x32xf32>
    tpu.vector_store %arg6[%c5, %c0_105], %291 {strides = array<i32>} : memref<12x32xf32, #tpu.memory_space<vmem>>, vector<1x32xf32>,
    %c4_106 = arith.constant 4 : index
    %293 = memref.load %arg0[%c4_106] : memref<8xf32, #tpu.memory_space<smem>>
    %c4_107 = arith.constant 4 : index
    %294 = memref.load %arg1[%c4_107] : memref<8xf32, #tpu.memory_space<smem>>
    %cst_108 = arith.constant 0.000000e+00 : f32
    %295 = arith.maximumf %294, %cst_108 : f32
    %cst_109 = arith.constant 1.000000e+00 : f32
    %296 = arith.addf %cst_109, %295 : f32
    %cst_110 = arith.constant 1.000000e+00 : f32
    %297 = arith.divf %cst_110, %296 : f32
    %298 = arith.mulf %295, %297 : f32
    %cst_111 = arith.constant 5.000000e-01 : f32
    %299 = arith.mulf %295, %cst_111 : f32
    %cst_112 = arith.constant 0.000000e+00 : f32
    %300 = vector.broadcast %cst_112 : f32 to vector<1x32xf32>
    %301 = arith.maximumf %289, %300 : vector<1x32xf32>
    %cst_113 = arith.constant 0.000000e+00 : f32
    %302 = vector.broadcast %cst_113 : f32 to vector<1x1xf32>
    %303 = arith.maximumf %270, %302 : vector<1x1xf32>
    %cst_114 = arith.constant 1.000000e+00 : f32
    %304 = vector.broadcast %cst_114 : f32 to vector<1x1xf32>
    %305 = arith.minimumf %253, %304 : vector<1x1xf32>
    %cst_115 = arith.constant dense<0.000000e+00> : vector<1x64xf32>
    %306 = tpu.matmul %301, %3, %cst_115 {dimension_numbers = #tpu.dot_dimension_numbers<[1], [0], [0], [1], [0, 0, 1, 1], [], []>, precision = #tpu.contract_precision<fp32>} : vector<1x32xf32>, vector<32x64xf32>, vector<1x64xf32> -> vector<1x64xf32>
    %307 = vector.extract_strided_slice %306 {offsets = [0, 0], sizes = [1, 32], strides = [1, 1]} : vector<1x64xf32> to vector<1x32xf32>
    %308 = vector.extract_strided_slice %306 {offsets = [0, 32], sizes = [1, 32], strides = [1, 1]} : vector<1x64xf32> to vector<1x32xf32>
    %309 = arith.mulf %301, %301 : vector<1x32xf32>
    %cst_116 = arith.constant dense<0.000000e+00> : vector<1xf32>
    %310 = vector.multi_reduction <add>, %309, %cst_116 [1] : vector<1x32xf32> to vector<1xf32>
    %311 = vector.shape_cast %310 : vector<1xf32> to vector<1x1xf32>
    %cst_117 = arith.constant 0.000000e+00 : f32
    %312 = vector.broadcast %cst_117 : f32 to vector<1x1xf32>
    %313 = arith.subf %312, %253 : vector<1x1xf32>
    %314 = vector.broadcast %295 : f32 to vector<1x1xf32>
    %315 = arith.addf %314, %305 : vector<1x1xf32>
    %316 = vector.broadcast %299 : f32 to vector<1x1xf32>
    %317 = arith.divf %316, %315 : vector<1x1xf32>
    %318 = arith.mulf %317, %317 : vector<1x1xf32>
    %319 = arith.addf %311, %318 : vector<1x1xf32>
    %320 = arith.mulf %253, %319 : vector<1x1xf32>
    %321 = arith.addf %313, %320 : vector<1x1xf32>
    %cst_118 = arith.constant 1.000000e-01 : f32
    %322 = vector.broadcast %cst_118 : f32 to vector<1x1xf32>
    %323 = arith.mulf %322, %321 : vector<1x1xf32>
    %324 = arith.addf %253, %323 : vector<1x1xf32>
    %cst_119 = arith.constant 0.000000e+00 : f32
    %325 = vector.broadcast %cst_119 : f32 to vector<1x1xf32>
    %326 = arith.maximumf %324, %325 : vector<1x1xf32>
    %327 = arith.subf %326, %305 : vector<1x1xf32>
    %cst_120 = arith.constant 0.000000e+00 : f32
    %328 = vector.broadcast %cst_120 : f32 to vector<1x1xf32>
    %329 = arith.subf %328, %270 : vector<1x1xf32>
    %330 = arith.mulf %303, %305 : vector<1x1xf32>
    %331 = arith.addf %329, %330 : vector<1x1xf32>
    %cst_121 = arith.constant 1.000000e+00 : f32
    %332 = vector.broadcast %cst_121 : f32 to vector<1x1xf32>
    %333 = arith.addf %331, %332 : vector<1x1xf32>
    %cst_122 = arith.constant 1.000000e-01 : f32
    %334 = vector.broadcast %cst_122 : f32 to vector<1x1xf32>
    %335 = arith.mulf %334, %327 : vector<1x1xf32>
    %cst_123 = arith.constant 1.000000e+00 : f32
    %336 = vector.broadcast %cst_123 : f32 to vector<1x1xf32>
    %337 = arith.divf %335, %336 : vector<1x1xf32>
    %338 = arith.addf %333, %337 : vector<1x1xf32>
    %cst_124 = arith.constant 1.000000e-01 : f32
    %339 = vector.broadcast %cst_124 : f32 to vector<1x1xf32>
    %340 = arith.mulf %339, %338 : vector<1x1xf32>
    %341 = arith.addf %270, %340 : vector<1x1xf32>
    %cst_125 = arith.constant 0.000000e+00 : f32
    %342 = vector.broadcast %cst_125 : f32 to vector<1x32xf32>
    %343 = arith.subf %342, %289 : vector<1x32xf32>
    %344 = vector.extract_strided_slice %2 {offsets = [4, 0], sizes = [1, 32], strides = [1, 1]} : vector<8x32xf32> to vector<1x32xf32>
    %345 = vector.broadcast %298 : f32 to vector<1x32xf32>
    %346 = arith.mulf %345, %344 : vector<1x32xf32>
    %347 = arith.addf %343, %346 : vector<1x32xf32>
    %cst_126 = arith.constant 1.000000e+00 : f32
    %348 = vector.broadcast %cst_126 : f32 to vector<1x1xf32>
    %349 = arith.divf %348, %303 : vector<1x1xf32>
    %350 = vector.broadcast %297 : f32 to vector<1x1xf32>
    %351 = arith.mulf %349, %350 : vector<1x1xf32>
    %352 = vector.broadcast %351 : vector<1x1xf32> to vector<1x32xf32>
    %353 = arith.mulf %352, %307 : vector<1x32xf32>
    %354 = arith.addf %347, %353 : vector<1x32xf32>
    %cst_127 = arith.constant 2.000000e-01 : f32
    %355 = vector.broadcast %cst_127 : f32 to vector<1x32xf32>
    %356 = arith.mulf %355, %354 : vector<1x32xf32>
    %357 = vector.broadcast %293 : f32 to vector<1x32xf32>
    %358 = arith.mulf %357, %308 : vector<1x32xf32>
    %359 = arith.addf %356, %358 : vector<1x32xf32>
    %360 = arith.addf %289, %359 : vector<1x32xf32>
    %cst_128 = arith.constant 0.000000e+00 : f32
    %361 = vector.broadcast %cst_128 : f32 to vector<1x32xf32>
    %362 = arith.maximumf %360, %361 : vector<1x32xf32>
    %c6 = arith.constant 6 : index
    %c0_129 = arith.constant 0 : index
    %363 = vector.load %arg6[%c6, %c0_129] : memref<12x32xf32, #tpu.memory_space<vmem>>, vector<1x32xf32>
    tpu.vector_store %arg6[%c6, %c0_129], %362 {strides = array<i32>} : memref<12x32xf32, #tpu.memory_space<vmem>>, vector<1x32xf32>,
    %c5_130 = arith.constant 5 : index
    %364 = memref.load %arg0[%c5_130] : memref<8xf32, #tpu.memory_space<smem>>
    %c5_131 = arith.constant 5 : index
    %365 = memref.load %arg1[%c5_131] : memref<8xf32, #tpu.memory_space<smem>>
    %cst_132 = arith.constant 0.000000e+00 : f32
    %366 = arith.maximumf %365, %cst_132 : f32
    %cst_133 = arith.constant 1.000000e+00 : f32
    %367 = arith.addf %cst_133, %366 : f32
    %cst_134 = arith.constant 1.000000e+00 : f32
    %368 = arith.divf %cst_134, %367 : f32
    %369 = arith.mulf %366, %368 : f32
    %cst_135 = arith.constant 5.000000e-01 : f32
    %370 = arith.mulf %366, %cst_135 : f32
    %cst_136 = arith.constant 0.000000e+00 : f32
    %371 = vector.broadcast %cst_136 : f32 to vector<1x32xf32>
    %372 = arith.maximumf %360, %371 : vector<1x32xf32>
    %cst_137 = arith.constant 0.000000e+00 : f32
    %373 = vector.broadcast %cst_137 : f32 to vector<1x1xf32>
    %374 = arith.maximumf %341, %373 : vector<1x1xf32>
    %cst_138 = arith.constant 1.000000e+00 : f32
    %375 = vector.broadcast %cst_138 : f32 to vector<1x1xf32>
    %376 = arith.minimumf %324, %375 : vector<1x1xf32>
    %cst_139 = arith.constant dense<0.000000e+00> : vector<1x64xf32>
    %377 = tpu.matmul %372, %3, %cst_139 {dimension_numbers = #tpu.dot_dimension_numbers<[1], [0], [0], [1], [0, 0, 1, 1], [], []>, precision = #tpu.contract_precision<fp32>} : vector<1x32xf32>, vector<32x64xf32>, vector<1x64xf32> -> vector<1x64xf32>
    %378 = vector.extract_strided_slice %377 {offsets = [0, 0], sizes = [1, 32], strides = [1, 1]} : vector<1x64xf32> to vector<1x32xf32>
    %379 = vector.extract_strided_slice %377 {offsets = [0, 32], sizes = [1, 32], strides = [1, 1]} : vector<1x64xf32> to vector<1x32xf32>
    %380 = arith.mulf %372, %372 : vector<1x32xf32>
    %cst_140 = arith.constant dense<0.000000e+00> : vector<1xf32>
    %381 = vector.multi_reduction <add>, %380, %cst_140 [1] : vector<1x32xf32> to vector<1xf32>
    %382 = vector.shape_cast %381 : vector<1xf32> to vector<1x1xf32>
    %cst_141 = arith.constant 0.000000e+00 : f32
    %383 = vector.broadcast %cst_141 : f32 to vector<1x1xf32>
    %384 = arith.subf %383, %324 : vector<1x1xf32>
    %385 = vector.broadcast %366 : f32 to vector<1x1xf32>
    %386 = arith.addf %385, %376 : vector<1x1xf32>
    %387 = vector.broadcast %370 : f32 to vector<1x1xf32>
    %388 = arith.divf %387, %386 : vector<1x1xf32>
    %389 = arith.mulf %388, %388 : vector<1x1xf32>
    %390 = arith.addf %382, %389 : vector<1x1xf32>
    %391 = arith.mulf %324, %390 : vector<1x1xf32>
    %392 = arith.addf %384, %391 : vector<1x1xf32>
    %cst_142 = arith.constant 1.000000e-01 : f32
    %393 = vector.broadcast %cst_142 : f32 to vector<1x1xf32>
    %394 = arith.mulf %393, %392 : vector<1x1xf32>
    %395 = arith.addf %324, %394 : vector<1x1xf32>
    %cst_143 = arith.constant 0.000000e+00 : f32
    %396 = vector.broadcast %cst_143 : f32 to vector<1x1xf32>
    %397 = arith.maximumf %395, %396 : vector<1x1xf32>
    %398 = arith.subf %397, %376 : vector<1x1xf32>
    %cst_144 = arith.constant 0.000000e+00 : f32
    %399 = vector.broadcast %cst_144 : f32 to vector<1x1xf32>
    %400 = arith.subf %399, %341 : vector<1x1xf32>
    %401 = arith.mulf %374, %376 : vector<1x1xf32>
    %402 = arith.addf %400, %401 : vector<1x1xf32>
    %cst_145 = arith.constant 1.000000e+00 : f32
    %403 = vector.broadcast %cst_145 : f32 to vector<1x1xf32>
    %404 = arith.addf %402, %403 : vector<1x1xf32>
    %cst_146 = arith.constant 1.000000e-01 : f32
    %405 = vector.broadcast %cst_146 : f32 to vector<1x1xf32>
    %406 = arith.mulf %405, %398 : vector<1x1xf32>
    %cst_147 = arith.constant 1.000000e+00 : f32
    %407 = vector.broadcast %cst_147 : f32 to vector<1x1xf32>
    %408 = arith.divf %406, %407 : vector<1x1xf32>
    %409 = arith.addf %404, %408 : vector<1x1xf32>
    %cst_148 = arith.constant 1.000000e-01 : f32
    %410 = vector.broadcast %cst_148 : f32 to vector<1x1xf32>
    %411 = arith.mulf %410, %409 : vector<1x1xf32>
    %412 = arith.addf %341, %411 : vector<1x1xf32>
    %cst_149 = arith.constant 0.000000e+00 : f32
    %413 = vector.broadcast %cst_149 : f32 to vector<1x32xf32>
    %414 = arith.subf %413, %360 : vector<1x32xf32>
    %415 = vector.extract_strided_slice %2 {offsets = [5, 0], sizes = [1, 32], strides = [1, 1]} : vector<8x32xf32> to vector<1x32xf32>
    %416 = vector.broadcast %369 : f32 to vector<1x32xf32>
    %417 = arith.mulf %416, %415 : vector<1x32xf32>
    %418 = arith.addf %414, %417 : vector<1x32xf32>
    %cst_150 = arith.constant 1.000000e+00 : f32
    %419 = vector.broadcast %cst_150 : f32 to vector<1x1xf32>
    %420 = arith.divf %419, %374 : vector<1x1xf32>
    %421 = vector.broadcast %368 : f32 to vector<1x1xf32>
    %422 = arith.mulf %420, %421 : vector<1x1xf32>
    %423 = vector.broadcast %422 : vector<1x1xf32> to vector<1x32xf32>
    %424 = arith.mulf %423, %378 : vector<1x32xf32>
    %425 = arith.addf %418, %424 : vector<1x32xf32>
    %cst_151 = arith.constant 2.000000e-01 : f32
    %426 = vector.broadcast %cst_151 : f32 to vector<1x32xf32>
    %427 = arith.mulf %426, %425 : vector<1x32xf32>
    %428 = vector.broadcast %364 : f32 to vector<1x32xf32>
    %429 = arith.mulf %428, %379 : vector<1x32xf32>
    %430 = arith.addf %427, %429 : vector<1x32xf32>
    %431 = arith.addf %360, %430 : vector<1x32xf32>
    %cst_152 = arith.constant 0.000000e+00 : f32
    %432 = vector.broadcast %cst_152 : f32 to vector<1x32xf32>
    %433 = arith.maximumf %431, %432 : vector<1x32xf32>
    %c7 = arith.constant 7 : index
    %c0_153 = arith.constant 0 : index
    %434 = vector.load %arg6[%c7, %c0_153] : memref<12x32xf32, #tpu.memory_space<vmem>>, vector<1x32xf32>
    tpu.vector_store %arg6[%c7, %c0_153], %433 {strides = array<i32>} : memref<12x32xf32, #tpu.memory_space<vmem>>, vector<1x32xf32>,
    %c6_154 = arith.constant 6 : index
    %435 = memref.load %arg0[%c6_154] : memref<8xf32, #tpu.memory_space<smem>>
    %c6_155 = arith.constant 6 : index
    %436 = memref.load %arg1[%c6_155] : memref<8xf32, #tpu.memory_space<smem>>
    %cst_156 = arith.constant 0.000000e+00 : f32
    %437 = arith.maximumf %436, %cst_156 : f32
    %cst_157 = arith.constant 1.000000e+00 : f32
    %438 = arith.addf %cst_157, %437 : f32
    %cst_158 = arith.constant 1.000000e+00 : f32
    %439 = arith.divf %cst_158, %438 : f32
    %440 = arith.mulf %437, %439 : f32
    %cst_159 = arith.constant 5.000000e-01 : f32
    %441 = arith.mulf %437, %cst_159 : f32
    %cst_160 = arith.constant 0.000000e+00 : f32
    %442 = vector.broadcast %cst_160 : f32 to vector<1x32xf32>
    %443 = arith.maximumf %431, %442 : vector<1x32xf32>
    %cst_161 = arith.constant 0.000000e+00 : f32
    %444 = vector.broadcast %cst_161 : f32 to vector<1x1xf32>
    %445 = arith.maximumf %412, %444 : vector<1x1xf32>
    %cst_162 = arith.constant 1.000000e+00 : f32
    %446 = vector.broadcast %cst_162 : f32 to vector<1x1xf32>
    %447 = arith.minimumf %395, %446 : vector<1x1xf32>
    %cst_163 = arith.constant dense<0.000000e+00> : vector<1x64xf32>
    %448 = tpu.matmul %443, %3, %cst_163 {dimension_numbers = #tpu.dot_dimension_numbers<[1], [0], [0], [1], [0, 0, 1, 1], [], []>, precision = #tpu.contract_precision<fp32>} : vector<1x32xf32>, vector<32x64xf32>, vector<1x64xf32> -> vector<1x64xf32>
    %449 = vector.extract_strided_slice %448 {offsets = [0, 0], sizes = [1, 32], strides = [1, 1]} : vector<1x64xf32> to vector<1x32xf32>
    %450 = vector.extract_strided_slice %448 {offsets = [0, 32], sizes = [1, 32], strides = [1, 1]} : vector<1x64xf32> to vector<1x32xf32>
    %451 = arith.mulf %443, %443 : vector<1x32xf32>
    %cst_164 = arith.constant dense<0.000000e+00> : vector<1xf32>
    %452 = vector.multi_reduction <add>, %451, %cst_164 [1] : vector<1x32xf32> to vector<1xf32>
    %453 = vector.shape_cast %452 : vector<1xf32> to vector<1x1xf32>
    %cst_165 = arith.constant 0.000000e+00 : f32
    %454 = vector.broadcast %cst_165 : f32 to vector<1x1xf32>
    %455 = arith.subf %454, %395 : vector<1x1xf32>
    %456 = vector.broadcast %437 : f32 to vector<1x1xf32>
    %457 = arith.addf %456, %447 : vector<1x1xf32>
    %458 = vector.broadcast %441 : f32 to vector<1x1xf32>
    %459 = arith.divf %458, %457 : vector<1x1xf32>
    %460 = arith.mulf %459, %459 : vector<1x1xf32>
    %461 = arith.addf %453, %460 : vector<1x1xf32>
    %462 = arith.mulf %395, %461 : vector<1x1xf32>
    %463 = arith.addf %455, %462 : vector<1x1xf32>
    %cst_166 = arith.constant 1.000000e-01 : f32
    %464 = vector.broadcast %cst_166 : f32 to vector<1x1xf32>
    %465 = arith.mulf %464, %463 : vector<1x1xf32>
    %466 = arith.addf %395, %465 : vector<1x1xf32>
    %cst_167 = arith.constant 0.000000e+00 : f32
    %467 = vector.broadcast %cst_167 : f32 to vector<1x1xf32>
    %468 = arith.maximumf %466, %467 : vector<1x1xf32>
    %469 = arith.subf %468, %447 : vector<1x1xf32>
    %cst_168 = arith.constant 0.000000e+00 : f32
    %470 = vector.broadcast %cst_168 : f32 to vector<1x1xf32>
    %471 = arith.subf %470, %412 : vector<1x1xf32>
    %472 = arith.mulf %445, %447 : vector<1x1xf32>
    %473 = arith.addf %471, %472 : vector<1x1xf32>
    %cst_169 = arith.constant 1.000000e+00 : f32
    %474 = vector.broadcast %cst_169 : f32 to vector<1x1xf32>
    %475 = arith.addf %473, %474 : vector<1x1xf32>
    %cst_170 = arith.constant 1.000000e-01 : f32
    %476 = vector.broadcast %cst_170 : f32 to vector<1x1xf32>
    %477 = arith.mulf %476, %469 : vector<1x1xf32>
    %cst_171 = arith.constant 1.000000e+00 : f32
    %478 = vector.broadcast %cst_171 : f32 to vector<1x1xf32>
    %479 = arith.divf %477, %478 : vector<1x1xf32>
    %480 = arith.addf %475, %479 : vector<1x1xf32>
    %cst_172 = arith.constant 1.000000e-01 : f32
    %481 = vector.broadcast %cst_172 : f32 to vector<1x1xf32>
    %482 = arith.mulf %481, %480 : vector<1x1xf32>
    %483 = arith.addf %412, %482 : vector<1x1xf32>
    %cst_173 = arith.constant 0.000000e+00 : f32
    %484 = vector.broadcast %cst_173 : f32 to vector<1x32xf32>
    %485 = arith.subf %484, %431 : vector<1x32xf32>
    %486 = vector.extract_strided_slice %2 {offsets = [6, 0], sizes = [1, 32], strides = [1, 1]} : vector<8x32xf32> to vector<1x32xf32>
    %487 = vector.broadcast %440 : f32 to vector<1x32xf32>
    %488 = arith.mulf %487, %486 : vector<1x32xf32>
    %489 = arith.addf %485, %488 : vector<1x32xf32>
    %cst_174 = arith.constant 1.000000e+00 : f32
    %490 = vector.broadcast %cst_174 : f32 to vector<1x1xf32>
    %491 = arith.divf %490, %445 : vector<1x1xf32>
    %492 = vector.broadcast %439 : f32 to vector<1x1xf32>
    %493 = arith.mulf %491, %492 : vector<1x1xf32>
    %494 = vector.broadcast %493 : vector<1x1xf32> to vector<1x32xf32>
    %495 = arith.mulf %494, %449 : vector<1x32xf32>
    %496 = arith.addf %489, %495 : vector<1x32xf32>
    %cst_175 = arith.constant 2.000000e-01 : f32
    %497 = vector.broadcast %cst_175 : f32 to vector<1x32xf32>
    %498 = arith.mulf %497, %496 : vector<1x32xf32>
    %499 = vector.broadcast %435 : f32 to vector<1x32xf32>
    %500 = arith.mulf %499, %450 : vector<1x32xf32>
    %501 = arith.addf %498, %500 : vector<1x32xf32>
    %502 = arith.addf %431, %501 : vector<1x32xf32>
    %cst_176 = arith.constant 0.000000e+00 : f32
    %503 = vector.broadcast %cst_176 : f32 to vector<1x32xf32>
    %504 = arith.maximumf %502, %503 : vector<1x32xf32>
    %c8 = arith.constant 8 : index
    %c0_177 = arith.constant 0 : index
    %505 = vector.load %arg6[%c8, %c0_177] : memref<12x32xf32, #tpu.memory_space<vmem>>, vector<1x32xf32>
    tpu.vector_store %arg6[%c8, %c0_177], %504 {strides = array<i32>} : memref<12x32xf32, #tpu.memory_space<vmem>>, vector<1x32xf32>,
    %c7_178 = arith.constant 7 : index
    %506 = memref.load %arg0[%c7_178] : memref<8xf32, #tpu.memory_space<smem>>
    %c7_179 = arith.constant 7 : index
    %507 = memref.load %arg1[%c7_179] : memref<8xf32, #tpu.memory_space<smem>>
    %cst_180 = arith.constant 0.000000e+00 : f32
    %508 = arith.maximumf %507, %cst_180 : f32
    %cst_181 = arith.constant 1.000000e+00 : f32
    %509 = arith.addf %cst_181, %508 : f32
    %cst_182 = arith.constant 1.000000e+00 : f32
    %510 = arith.divf %cst_182, %509 : f32
    %511 = arith.mulf %508, %510 : f32
    %cst_183 = arith.constant 0.000000e+00 : f32
    %512 = vector.broadcast %cst_183 : f32 to vector<1x32xf32>
    %513 = arith.maximumf %502, %512 : vector<1x32xf32>
    %cst_184 = arith.constant 0.000000e+00 : f32
    %514 = vector.broadcast %cst_184 : f32 to vector<1x1xf32>
    %515 = arith.maximumf %483, %514 : vector<1x1xf32>
    %cst_185 = arith.constant dense<0.000000e+00> : vector<1x64xf32>
    %516 = tpu.matmul %513, %3, %cst_185 {dimension_numbers = #tpu.dot_dimension_numbers<[1], [0], [0], [1], [0, 0, 1, 1], [], []>, precision = #tpu.contract_precision<fp32>} : vector<1x32xf32>, vector<32x64xf32>, vector<1x64xf32> -> vector<1x64xf32>
    %517 = vector.extract_strided_slice %516 {offsets = [0, 0], sizes = [1, 32], strides = [1, 1]} : vector<1x64xf32> to vector<1x32xf32>
    %518 = vector.extract_strided_slice %516 {offsets = [0, 32], sizes = [1, 32], strides = [1, 1]} : vector<1x64xf32> to vector<1x32xf32>
    %cst_186 = arith.constant 0.000000e+00 : f32
    %519 = vector.broadcast %cst_186 : f32 to vector<1x32xf32>
    %520 = arith.subf %519, %502 : vector<1x32xf32>
    %521 = vector.extract_strided_slice %2 {offsets = [7, 0], sizes = [1, 32], strides = [1, 1]} : vector<8x32xf32> to vector<1x32xf32>
    %522 = vector.broadcast %511 : f32 to vector<1x32xf32>
    %523 = arith.mulf %522, %521 : vector<1x32xf32>
    %524 = arith.addf %520, %523 : vector<1x32xf32>
    %cst_187 = arith.constant 1.000000e+00 : f32
    %525 = vector.broadcast %cst_187 : f32 to vector<1x1xf32>
    %526 = arith.divf %525, %515 : vector<1x1xf32>
    %527 = vector.broadcast %510 : f32 to vector<1x1xf32>
    %528 = arith.mulf %526, %527 : vector<1x1xf32>
    %529 = vector.broadcast %528 : vector<1x1xf32> to vector<1x32xf32>
    %530 = arith.mulf %529, %517 : vector<1x32xf32>
    %531 = arith.addf %524, %530 : vector<1x32xf32>
    %cst_188 = arith.constant 2.000000e-01 : f32
    %532 = vector.broadcast %cst_188 : f32 to vector<1x32xf32>
    %533 = arith.mulf %532, %531 : vector<1x32xf32>
    %534 = vector.broadcast %506 : f32 to vector<1x32xf32>
    %535 = arith.mulf %534, %518 : vector<1x32xf32>
    %536 = arith.addf %533, %535 : vector<1x32xf32>
    %537 = arith.addf %502, %536 : vector<1x32xf32>
    %cst_189 = arith.constant 0.000000e+00 : f32
    %538 = vector.broadcast %cst_189 : f32 to vector<1x32xf32>
    %539 = arith.maximumf %537, %538 : vector<1x32xf32>
    %c9 = arith.constant 9 : index
    %c0_190 = arith.constant 0 : index
    %540 = vector.load %arg6[%c9, %c0_190] : memref<12x32xf32, #tpu.memory_space<vmem>>, vector<1x32xf32>
    tpu.vector_store %arg6[%c9, %c0_190], %539 {strides = array<i32>} : memref<12x32xf32, #tpu.memory_space<vmem>>, vector<1x32xf32>,
    %c0_191 = arith.constant 0 : index
    %c0_192 = arith.constant 0 : index
    %541 = vector.load %arg6[%c0_191, %c0_192] : memref<12x32xf32, #tpu.memory_space<vmem>>, vector<8x32xf32>
    %cst_193 = arith.constant 0.0924211591 : f32
    %542 = vector.broadcast %cst_193 : f32 to vector<8x32xf32>
    %543 = arith.mulf %542, %541 : vector<8x32xf32>
    %c1_194 = arith.constant 1 : index
    %c0_195 = arith.constant 0 : index
    %544 = vector.load %arg6[%c1_194, %c0_195] : memref<12x32xf32, #tpu.memory_space<vmem>>, vector<8x32xf32>
    %cst_196 = arith.constant 0.241376027 : f32
    %545 = vector.broadcast %cst_196 : f32 to vector<8x32xf32>
    %546 = arith.mulf %545, %544 : vector<8x32xf32>
    %547 = arith.addf %543, %546 : vector<8x32xf32>
    %c2_197 = arith.constant 2 : index
    %c0_198 = arith.constant 0 : index
    %548 = vector.load %arg6[%c2_197, %c0_198] : memref<12x32xf32, #tpu.memory_space<vmem>>, vector<8x32xf32>
    %cst_199 = arith.constant 0.332405627 : f32
    %549 = vector.broadcast %cst_199 : f32 to vector<8x32xf32>
    %550 = arith.mulf %549, %548 : vector<8x32xf32>
    %551 = arith.addf %547, %550 : vector<8x32xf32>
    %c3_200 = arith.constant 3 : index
    %c0_201 = arith.constant 0 : index
    %552 = vector.load %arg6[%c3_200, %c0_201] : memref<12x32xf32, #tpu.memory_space<vmem>>, vector<8x32xf32>
    %cst_202 = arith.constant 0.241376027 : f32
    %553 = vector.broadcast %cst_202 : f32 to vector<8x32xf32>
    %554 = arith.mulf %553, %552 : vector<8x32xf32>
    %555 = arith.addf %551, %554 : vector<8x32xf32>
    %c4_203 = arith.constant 4 : index
    %c0_204 = arith.constant 0 : index
    %556 = vector.load %arg6[%c4_203, %c0_204] : memref<12x32xf32, #tpu.memory_space<vmem>>, vector<8x32xf32>
    %cst_205 = arith.constant 0.0924211591 : f32
    %557 = vector.broadcast %cst_205 : f32 to vector<8x32xf32>
    %558 = arith.mulf %557, %556 : vector<8x32xf32>
    %559 = arith.addf %555, %558 : vector<8x32xf32>
    %c0_206 = arith.constant 0 : index
    %c0_207 = arith.constant 0 : index
    %560 = vector.load %arg5[%c0_206, %c0_207] : memref<8x32xf32, #tpu.memory_space<vmem>>, vector<8x32xf32>
    tpu.vector_store %arg5[%c0_206, %c0_207], %559 {strides = array<i32>} : memref<8x32xf32, #tpu.memory_space<vmem>>, vector<8x32xf32>,
    return
  }
}

</mosaic_0001>

<llo_original>
// kernel: tpu_custom_call.1
$region0: #{tpu_custom_call.1}
  #allocation0 [shape = 'u32[]', space=smem, size = 0x4, offset = 0x4, fixed_abs, tag = 'smem constant byte address 0x4 - core index']
  #allocation1 [shape = 'u32[144,128]{1,0:T(1,128)}', space=vmem, size = 0x12000, scoped, tag = 'internal scratch']
  #allocation2 [shape = 'f32[12,32]{1,0:T(8,128)}', space=vmem, size = 0x2000, scoped, tag = 'scratch operand']
  %s0 = inlined_call_operand.hbm [shape: f32[8], index: 0, kind: input, shape index: {}]
  %s1 = inlined_call_operand.vmem [shape: f32[8], index: 1, kind: input, shape index: {}]
  %s2 = inlined_call_operand.hbm [shape: f32[8,8], index: 2, kind: input, shape index: {}]
  %s3 = inlined_call_operand.hbm [shape: f32[8,32], index: 3, kind: input, shape index: {}]
  %s4 = inlined_call_operand.hbm [shape: f32[32,64], index: 4, kind: input, shape index: {}]
  %s5 = inlined_call_operand.hbm [shape: f32[8,32], index: 5, kind: output, shape index: {}]
  %s6 = sld [smem:[#allocation0]]
  $region50: #{tpu_custom_call.1} parent=0
    _
  %s8 = ssub.s32 1, %s6
  %s9 = scalar_select 0, %s8, %s6
  $region1: #{tpu_custom_call.1} parent=0
    #allocation3 [shape = 'u8[512]{0}', space=smem, size = 0x200, scoped, tag = 'input window, operand 0, single buffered']
    #allocation4 [shape = 's32[1]{0}', space=sflag, size = 0x4, scoped, tag = 'scoped memory for tpu_custom_call.1']
    #allocation5 [shape = 's32[1]{0}', space=sflag, size = 0x4, scoped, tag = 'scoped memory for tpu_custom_call.1']
    #allocation6 [shape = 's32[1]{0}', space=sflag, size = 0x4, scoped, tag = 'scoped memory for tpu_custom_call.1']
    #allocation7 [shape = 's32[1]{0}', space=sflag, size = 0x4, scoped, tag = 'scoped memory for tpu_custom_call.1']
    #allocation8 [shape = 'u8[512]{0}', space=smem, size = 0x200, scoped, tag = 'input window, operand 1, single buffered']
    #allocation9 [shape = 'u8[4096]{0}', space=vmem, size = 0x1000, scoped, tag = 'input window, operand 2, single buffered']
    #allocation10 [shape = 'u8[4096]{0}', space=vmem, size = 0x1000, scoped, tag = 'input window, operand 3, single buffered']
    #allocation11 [shape = 's32[1]{0}', space=sflag, size = 0x4, scoped, tag = 'scoped memory for tpu_custom_call.1']
    #allocation12 [shape = 'u8[16384]{0}', space=vmem, size = 0x4000, scoped, tag = 'input window, operand 4, single buffered']
    #allocation13 [shape = 'u8[4096]{0}', space=vmem, size = 0x1000, scoped, tag = 'output window, operand 0, single buffered']
    %10 = vsyncpa [#allocation6], 0
    %11 = vsyncpa [#allocation7], 0
    %12 = vsyncpa [#allocation4], 0
    %13 = vsyncpa [#allocation11], 0
    %14 = vsyncpa [#allocation5], 0
    // Predicated region
    $region2: #{tpu_custom_call.1} parent=1 // pred_check
      _
    $region3: #{tpu_custom_call.1} parent=1 // pred_check_branch
      %16 = sbr.rel (0) target = $region5
    $region4: #{tpu_custom_call.1} parent=1 // pred_region
      %s18 = ssub.s32 16, 16
      %19 = vsyncadd [#allocation6], %s18
      %22 = dma.hbm_to_smem %s0, 16, [#allocation3], [#allocation6]
    $region5: #{tpu_custom_call.1} parent=1 // pred_fallthru
      _
    // Predicated region
    $region6: #{tpu_custom_call.1} parent=1 // pred_check
      _
    $region7: #{tpu_custom_call.1} parent=1 // pred_check_branch
      %24 = sbr.rel (0) target = $region9
    $region8: #{tpu_custom_call.1} parent=1 // pred_region
      %s26 = ssub.s32 16, 16
      %27 = vsyncadd [#allocation7], %s26
      %s29 = sshll.u32 %s1, 4
      %s30 = int_to_ptr.vmem [resolvable:$true] %s29
      %32 = dma.vmem_to_smem %s30, 16, [#allocation8], [#allocation7]
    $region9: #{tpu_custom_call.1} parent=1 // pred_fallthru
      _
    // Predicated region
    $region10: #{tpu_custom_call.1} parent=1 // pred_check
      _
    $region11: #{tpu_custom_call.1} parent=1 // pred_check_branch
      %34 = sbr.rel (0) target = $region13
    $region12: #{tpu_custom_call.1} parent=1 // pred_region
      %s36 = ssub.s32 128, 128
      %37 = vsyncadd [#allocation4], %s36
      %s39 = sshll.u32 [#allocation9], 4
      %s40 = int_to_ptr.vmem [resolvable:$true] %s39
      %42 = dma.hbm_to_vmem [thread:$0]  %s2, 128, %s40, [#allocation4]
    $region13: #{tpu_custom_call.1} parent=1 // pred_fallthru
      _
    // Predicated region
    $region14: #{tpu_custom_call.1} parent=1 // pred_check
      _
    $region15: #{tpu_custom_call.1} parent=1 // pred_check_branch
      %44 = sbr.rel (0) target = $region17
    $region16: #{tpu_custom_call.1} parent=1 // pred_region
      %s46 = ssub.s32 128, 128
      %47 = vsyncadd [#allocation11], %s46
      %s49 = sshll.u32 [#allocation10], 4
      %s50 = int_to_ptr.vmem [resolvable:$true] %s49
      %52 = dma.hbm_to_vmem [thread:$0]  %s3, 128, %s50, [#allocation11]
    $region17: #{tpu_custom_call.1} parent=1 // pred_fallthru
      _
    // Predicated region
    $region18: #{tpu_custom_call.1} parent=1 // pred_check
      _
    $region19: #{tpu_custom_call.1} parent=1 // pred_check_branch
      %54 = sbr.rel (0) target = $region21
    $region20: #{tpu_custom_call.1} parent=1 // pred_region
      %s56 = ssub.s32 512, 512
      %57 = vsyncadd [#allocation11], %s56
      %s58 = sshll.u32 [#allocation12], 4
      %s59 = int_to_ptr.vmem [resolvable:$true] %s58
      %64 = dma.hbm_to_vmem [thread:$0]  %s4, 512, %s59, [#allocation11], 128, 128, 8
    $region21: #{tpu_custom_call.1} parent=1 // pred_fallthru
      _
    // Predicated region
    $region22: #{tpu_custom_call.1} parent=1 // pred_check
      _
    $region23: #{tpu_custom_call.1} parent=1 // pred_check_branch
      %66 = sbr.rel (0) target = $region25
    $region24: #{tpu_custom_call.1} parent=1 // pred_region
      %67 = dma.done [#allocation6], 16
    $region25: #{tpu_custom_call.1} parent=1 // pred_fallthru
      _
    // Predicated region
    $region26: #{tpu_custom_call.1} parent=1 // pred_check
      _
    $region27: #{tpu_custom_call.1} parent=1 // pred_check_branch
      %69 = sbr.rel (0) target = $region29
    $region28: #{tpu_custom_call.1} parent=1 // pred_region
      %70 = dma.done [#allocation7], 16
    $region29: #{tpu_custom_call.1} parent=1 // pred_fallthru
      _
    // Predicated region
    $region30: #{tpu_custom_call.1} parent=1 // pred_check
      _
    $region31: #{tpu_custom_call.1} parent=1 // pred_check_branch
      %72 = sbr.rel (0) target = $region33
    $region32: #{tpu_custom_call.1} parent=1 // pred_region
      %73 = dma.done [#allocation4], 128
    $region33: #{tpu_custom_call.1} parent=1 // pred_fallthru
      _
    // Predicated region
    $region34: #{tpu_custom_call.1} parent=1 // pred_check
      _
    $region35: #{tpu_custom_call.1} parent=1 // pred_check_branch
      %75 = sbr.rel (0) target = $region37
    $region36: #{tpu_custom_call.1} parent=1 // pred_region
      %76 = dma.done [#allocation11], 128
    $region37: #{tpu_custom_call.1} parent=1 // pred_fallthru
      _
    // Predicated region
    $region38: #{tpu_custom_call.1} parent=1 // pred_check
      _
    $region39: #{tpu_custom_call.1} parent=1 // pred_check_branch
      %78 = sbr.rel (0) target = $region41
    $region40: #{tpu_custom_call.1} parent=1 // pred_region
      %79 = dma.done [#allocation11], 512
    $region41: #{tpu_custom_call.1} parent=1 // pred_fallthru
      _
    %80 = sfence
    %v81 = vld [vmem:[#allocation9] sm:$0xff]
    %v82 = vld [vmem:[#allocation10] sm:$0xff]
    %vm83 = vcmask 64512
    %v85 = vsel %vm83, %v81, 0
    %87 = vmatprep.subr.mxu0 0.0
    %88 = vmatpush1.msra.mxu0 0.0
    %89 = vmatprep.subr.mxu0 0.0
    %90 = vmatpush1.msra.mxu0 0.0
    %91 = vmatprep.subr.mxu0 0.0
    %92 = vmatpush1.msra.mxu0 0.0
    %93 = vmatprep.subr.mxu0 0.0
    %94 = vmatpush1.msra.mxu0 0.0
    %95 = vmatprep.subr.mxu0 0.0
    %96 = vmatpush1.msra.mxu0 0.0
    %97 = vmatprep.subr.mxu0 0.0
    %98 = vmatpush1.msra.mxu0 0.0
    %99 = vmatprep.subr.mxu0 0.0
    %100 = vmatpush1.msra.mxu0 0.0
    %101 = vmatprep.subr.mxu0 0.0
    %102 = vmatpush1.msra.mxu0 0.0
    %103 = vmatprep.subr.mxu0 0.0
    %104 = vmatpush1.msra.mxu0 0.0
    %105 = vmatprep.subr.mxu0 0.0
    %106 = vmatpush1.msra.mxu0 0.0
    %107 = vmatprep.subr.mxu0 0.0
    %108 = vmatpush1.msra.mxu0 0.0
    %109 = vmatprep.subr.mxu0 0.0
    %110 = vmatpush1.msra.mxu0 0.0
    %111 = vmatprep.subr.mxu0 0.0
    %112 = vmatpush1.msra.mxu0 0.0
    %113 = vmatprep.subr.mxu0 0.0
    %114 = vmatpush1.msra.mxu0 0.0
    %115 = vmatprep.subr.mxu0 0.0
    %116 = vmatpush1.msra.mxu0 0.0
    %117 = vmatprep.subr.mxu0 0.0
    %v118 = vand.u32 %v82, 4294901760
    %119 = vmatpush1.msra.mxu0 %v118
    %120 = vmatprep.subr.mxu0 0.0
    %121 = vmatpush2.msra.mxu0 0.0
    %122 = vmatprep.subr.mxu0 0.0
    %123 = vmatpush2.msra.mxu0 0.0
    %124 = vmatprep.subr.mxu0 0.0
    %125 = vmatpush2.msra.mxu0 0.0
    %126 = vmatprep.subr.mxu0 0.0
    %127 = vmatpush2.msra.mxu0 0.0
    %128 = vmatprep.subr.mxu0 0.0
    %129 = vmatpush2.msra.mxu0 0.0
    %130 = vmatprep.subr.mxu0 0.0
    %131 = vmatpush2.msra.mxu0 0.0
    %132 = vmatprep.subr.mxu0 0.0
    %133 = vmatpush2.msra.mxu0 0.0
    %134 = vmatprep.subr.mxu0 0.0
    %135 = vmatpush2.msra.mxu0 0.0
    %136 = vmatprep.subr.mxu0 0.0
    %137 = vmatpush2.msra.mxu0 0.0
    %138 = vmatprep.subr.mxu0 0.0
    %139 = vmatpush2.msra.mxu0 0.0
    %140 = vmatprep.subr.mxu0 0.0
    %141 = vmatpush2.msra.mxu0 0.0
    %142 = vmatprep.subr.mxu0 0.0
    %143 = vmatpush2.msra.mxu0 0.0
    %144 = vmatprep.subr.mxu0 0.0
    %145 = vmatpush2.msra.mxu0 0.0
    %146 = vmatprep.subr.mxu0 0.0
    %147 = vmatpush2.msra.mxu0 0.0
    %148 = vmatprep.subr.mxu0 0.0
    %149 = vmatpush2.msra.mxu0 0.0
    %150 = vmatprep.subr.mxu0 0.0
    %151 = vmatpush2.msra.mxu0 0.0
    %152 = vmatprep.mubr.f32.mxu0 0.0
    %v153 = vand.u32 %v85, 4294901760
    %v154 = vsub.f32 %v85, %v153
    %v155 = vand.u32 %v154, 4294901760
    %v156 = vsub.f32 %v154, %v155
    %v157 = vand.u32 %v156, 4294901760
    %158 = vmatmul.mubr.f32.gmra.mxu0 %v157
    %v159 = vpop.f32.mrf.mxu0
    %v160 = vadd.f32 0.0, %v159
    %v161 = vpop.f32.mrf.mxu0
    %162 = vdwg.mxu0
    %163 = vmatprep.subr.mxu0 0.0
    %164 = vmatpush1.msra.mxu0 0.0
    %165 = vmatprep.subr.mxu0 0.0
    %166 = vmatpush1.msra.mxu0 0.0
    %167 = vmatprep.subr.mxu0 0.0
    %168 = vmatpush1.msra.mxu0 0.0
    %169 = vmatprep.subr.mxu0 0.0
    %170 = vmatpush1.msra.mxu0 0.0
    %171 = vmatprep.subr.mxu0 0.0
    %172 = vmatpush1.msra.mxu0 0.0
    %173 = vmatprep.subr.mxu0 0.0
    %174 = vmatpush1.msra.mxu0 0.0
    %175 = vmatprep.subr.mxu0 0.0
    %176 = vmatpush1.msra.mxu0 0.0
    %177 = vmatprep.subr.mxu0 0.0
    %178 = vmatpush1.msra.mxu0 0.0
    %179 = vmatprep.subr.mxu0 0.0
    %180 = vmatpush1.msra.mxu0 0.0
    %181 = vmatprep.subr.mxu0 0.0
    %182 = vmatpush1.msra.mxu0 0.0
    %183 = vmatprep.subr.mxu0 0.0
    %184 = vmatpush1.msra.mxu0 0.0
    %185 = vmatprep.subr.mxu0 0.0
    %186 = vmatpush1.msra.mxu0 0.0
    %187 = vmatprep.subr.mxu0 0.0
    %188 = vmatpush1.msra.mxu0 0.0
    %189 = vmatprep.subr.mxu0 0.0
    %190 = vmatpush1.msra.mxu0 0.0
    %191 = vmatprep.subr.mxu0 0.0
    %192 = vmatpush1.msra.mxu0 0.0
    %193 = vmatprep.subr.mxu0 0.0
    %v194 = vand.u32 %v82, 4294901760
    %v195 = vsub.f32 %v82, %v194
    %v196 = vand.u32 %v195, 4294901760
    %v197 = vsub.f32 %v195, %v196
    %v198 = vand.u32 %v197, 4294901760
    %199 = vmatpush1.msra.mxu0 %v198
    %200 = vmatprep.subr.mxu0 0.0
    %201 = vmatpush2.msra.mxu0 0.0
    %202 = vmatprep.subr.mxu0 0.0
    %203 = vmatpush2.msra.mxu0 0.0
    %204 = vmatprep.subr.mxu0 0.0
    %205 = vmatpush2.msra.mxu0 0.0
    %206 = vmatprep.subr.mxu0 0.0
    %207 = vmatpush2.msra.mxu0 0.0
    %208 = vmatprep.subr.mxu0 0.0
    %209 = vmatpush2.msra.mxu0 0.0
    %210 = vmatprep.subr.mxu0 0.0
    %211 = vmatpush2.msra.mxu0 0.0
    %212 = vmatprep.subr.mxu0 0.0
    %213 = vmatpush2.msra.mxu0 0.0
    %214 = vmatprep.subr.mxu0 0.0
    %215 = vmatpush2.msra.mxu0 0.0
    %216 = vmatprep.subr.mxu0 0.0
    %217 = vmatpush2.msra.mxu0 0.0
    %218 = vmatprep.subr.mxu0 0.0
    %219 = vmatpush2.msra.mxu0 0.0
    %220 = vmatprep.subr.mxu0 0.0
    %221 = vmatpush2.msra.mxu0 0.0
    %222 = vmatprep.subr.mxu0 0.0
    %223 = vmatpush2.msra.mxu0 0.0
    %224 = vmatprep.subr.mxu0 0.0
    %225 = vmatpush2.msra.mxu0 0.0
    %226 = vmatprep.subr.mxu0 0.0
    %227 = vmatpush2.msra.mxu0 0.0
    %228 = vmatprep.subr.mxu0 0.0
    %229 = vmatpush2.msra.mxu0 0.0
    %230 = vmatprep.subr.mxu0 0.0
    %231 = vmatpush2.msra.mxu0 0.0
    %232 = vmatprep.mubr.f32.mxu0 0.0
    %v233 = vand.u32 %v85, 4294901760
    %234 = vmatmul.mubr.f32.gmra.mxu0 %v233
    %v235 = vpop.f32.mrf.mxu0
    %v236 = vadd.f32 %v160, %v235
    %v237 = vpop.f32.mrf.mxu0
    %238 = vdwg.mxu0
    %239 = vmatprep.subr.mxu0 0.0
    %240 = vmatpush1.msra.mxu0 0.0
    %241 = vmatprep.subr.mxu0 0.0
    %242 = vmatpush1.msra.mxu0 0.0
    %243 = vmatprep.subr.mxu0 0.0
    %244 = vmatpush1.msra.mxu0 0.0
    %245 = vmatprep.subr.mxu0 0.0
    %246 = vmatpush1.msra.mxu0 0.0
    %247 = vmatprep.subr.mxu0 0.0
    %248 = vmatpush1.msra.mxu0 0.0
    %249 = vmatprep.subr.mxu0 0.0
    %250 = vmatpush1.msra.mxu0 0.0
    %251 = vmatprep.subr.mxu0 0.0
    %252 = vmatpush1.msra.mxu0 0.0
    %253 = vmatprep.subr.mxu0 0.0
    %254 = vmatpush1.msra.mxu0 0.0
    %255 = vmatprep.subr.mxu0 0.0
    %256 = vmatpush1.msra.mxu0 0.0
    %257 = vmatprep.subr.mxu0 0.0
    %258 = vmatpush1.msra.mxu0 0.0
    %259 = vmatprep.subr.mxu0 0.0
    %260 = vmatpush1.msra.mxu0 0.0
    %261 = vmatprep.subr.mxu0 0.0
    %262 = vmatpush1.msra.mxu0 0.0
    %263 = vmatprep.subr.mxu0 0.0
    %264 = vmatpush1.msra.mxu0 0.0
    %265 = vmatprep.subr.mxu0 0.0
    %266 = vmatpush1.msra.mxu0 0.0
    %267 = vmatprep.subr.mxu0 0.0
    %268 = vmatpush1.msra.mxu0 0.0
    %269 = vmatprep.subr.mxu0 0.0
    %v270 = vand.u32 %v82, 4294901760
    %v271 = vsub.f32 %v82, %v270
    %272 = vmatpush1.msra.mxu0 %v271
    %273 = vmatprep.subr.mxu0 0.0
    %274 = vmatpush2.msra.mxu0 0.0
    %275 = vmatprep.subr.mxu0 0.0
    %276 = vmatpush2.msra.mxu0 0.0
    %277 = vmatprep.subr.mxu0 0.0
    %278 = vmatpush2.msra.mxu0 0.0
    %279 = vmatprep.subr.mxu0 0.0
    %280 = vmatpush2.msra.mxu0 0.0
    %281 = vmatprep.subr.mxu0 0.0
    %282 = vmatpush2.msra.mxu0 0.0
    %283 = vmatprep.subr.mxu0 0.0
    %284 = vmatpush2.msra.mxu0 0.0
    %285 = vmatprep.subr.mxu0 0.0
    %286 = vmatpush2.msra.mxu0 0.0
    %287 = vmatprep.subr.mxu0 0.0
    %288 = vmatpush2.msra.mxu0 0.0
    %289 = vmatprep.subr.mxu0 0.0
    %290 = vmatpush2.msra.mxu0 0.0
    %291 = vmatprep.subr.mxu0 0.0
    %292 = vmatpush2.msra.mxu0 0.0
    %293 = vmatprep.subr.mxu0 0.0
    %294 = vmatpush2.msra.mxu0 0.0
    %295 = vmatprep.subr.mxu0 0.0
    %296 = vmatpush2.msra.mxu0 0.0
    %297 = vmatprep.subr.mxu0 0.0
    %298 = vmatpush2.msra.mxu0 0.0
    %299 = vmatprep.subr.mxu0 0.0
    %300 = vmatpush2.msra.mxu0 0.0
    %301 = vmatprep.subr.mxu0 0.0
    %302 = vmatpush2.msra.mxu0 0.0
    %303 = vmatprep.subr.mxu0 0.0
    %304 = vmatpush2.msra.mxu0 0.0
    %305 = vmatprep.mubr.f32.mxu0 0.0
    %v306 = vand.u32 %v85, 4294901760
    %v307 = vsub.f32 %v85, %v306
    %308 = vmatmul.mubr.f32.gmra.mxu0 %v307
    %v309 = vpop.f32.mrf.mxu0
    %v310 = vadd.f32 %v236, %v309
    %v311 = vpop.f32.mrf.mxu0
    %312 = vdwg.mxu0
    %313 = vmatprep.subr.mxu0 0.0
    %314 = vmatpush1.msra.mxu0 0.0
    %315 = vmatprep.subr.mxu0 0.0
    %316 = vmatpush1.msra.mxu0 0.0
    %317 = vmatprep.subr.mxu0 0.0
    %318 = vmatpush1.msra.mxu0 0.0
    %319 = vmatprep.subr.mxu0 0.0
    %320 = vmatpush1.msra.mxu0 0.0
    %321 = vmatprep.subr.mxu0 0.0
    %322 = vmatpush1.msra.mxu0 0.0
    %323 = vmatprep.subr.mxu0 0.0
    %324 = vmatpush1.msra.mxu0 0.0
    %325 = vmatprep.subr.mxu0 0.0
    %326 = vmatpush1.msra.mxu0 0.0
    %327 = vmatprep.subr.mxu0 0.0
    %328 = vmatpush1.msra.mxu0 0.0
    %329 = vmatprep.subr.mxu0 0.0
    %330 = vmatpush1.msra.mxu0 0.0
    %331 = vmatprep.subr.mxu0 0.0
    %332 = vmatpush1.msra.mxu0 0.0
    %333 = vmatprep.subr.mxu0 0.0
    %334 = vmatpush1.msra.mxu0 0.0
    %335 = vmatprep.subr.mxu0 0.0
    %336 = vmatpush1.msra.mxu0 0.0
    %337 = vmatprep.subr.mxu0 0.0
    %338 = vmatpush1.msra.mxu0 0.0
    %339 = vmatprep.subr.mxu0 0.0
    %340 = vmatpush1.msra.mxu0 0.0
    %341 = vmatprep.subr.mxu0 0.0
    %342 = vmatpush1.msra.mxu0 0.0
    %343 = vmatprep.subr.mxu0 0.0
    %v344 = vand.u32 %v82, 4294901760
    %345 = vmatpush1.msra.mxu0 %v344
    %346 = vmatprep.subr.mxu0 0.0
    %347 = vmatpush2.msra.mxu0 0.0
    %348 = vmatprep.subr.mxu0 0.0
    %349 = vmatpush2.msra.mxu0 0.0
    %350 = vmatprep.subr.mxu0 0.0
    %351 = vmatpush2.msra.mxu0 0.0
    %352 = vmatprep.subr.mxu0 0.0
    %353 = vmatpush2.msra.mxu0 0.0
    %354 = vmatprep.subr.mxu0 0.0
    %355 = vmatpush2.msra.mxu0 0.0
    %356 = vmatprep.subr.mxu0 0.0
    %357 = vmatpush2.msra.mxu0 0.0
    %358 = vmatprep.subr.mxu0 0.0
    %359 = vmatpush2.msra.mxu0 0.0
    %360 = vmatprep.subr.mxu0 0.0
    %361 = vmatpush2.msra.mxu0 0.0
    %362 = vmatprep.subr.mxu0 0.0
    %363 = vmatpush2.msra.mxu0 0.0
    %364 = vmatprep.subr.mxu0 0.0
    %365 = vmatpush2.msra.mxu0 0.0
    %366 = vmatprep.subr.mxu0 0.0
    %367 = vmatpush2.msra.mxu0 0.0
    %368 = vmatprep.subr.mxu0 0.0
    %369 = vmatpush2.msra.mxu0 0.0
    %370 = vmatprep.subr.mxu0 0.0
    %371 = vmatpush2.msra.mxu0 0.0
    %372 = vmatprep.subr.mxu0 0.0
    %373 = vmatpush2.msra.mxu0 0.0
    %374 = vmatprep.subr.mxu0 0.0
    %375 = vmatpush2.msra.mxu0 0.0
    %376 = vmatprep.subr.mxu0 0.0
    %377 = vmatpush2.msra.mxu0 0.0
    %378 = vmatprep.mubr.f32.mxu0 0.0
    %v379 = vand.u32 %v85, 4294901760
    %v380 = vsub.f32 %v85, %v379
    %v381 = vand.u32 %v380, 4294901760
    %382 = vmatmul.mubr.f32.gmra.mxu0 %v381
    %v383 = vpop.f32.mrf.mxu0
    %v384 = vadd.f32 %v310, %v383
    %v385 = vpop.f32.mrf.mxu0
    %386 = vdwg.mxu0
    %387 = vmatprep.subr.mxu0 0.0
    %388 = vmatpush1.msra.mxu0 0.0
    %389 = vmatprep.subr.mxu0 0.0
    %390 = vmatpush1.msra.mxu0 0.0
    %391 = vmatprep.subr.mxu0 0.0
    %392 = vmatpush1.msra.mxu0 0.0
    %393 = vmatprep.subr.mxu0 0.0
    %394 = vmatpush1.msra.mxu0 0.0
    %395 = vmatprep.subr.mxu0 0.0
    %396 = vmatpush1.msra.mxu0 0.0
    %397 = vmatprep.subr.mxu0 0.0
    %398 = vmatpush1.msra.mxu0 0.0
    %399 = vmatprep.subr.mxu0 0.0
    %400 = vmatpush1.msra.mxu0 0.0
    %401 = vmatprep.subr.mxu0 0.0
    %402 = vmatpush1.msra.mxu0 0.0
    %403 = vmatprep.subr.mxu0 0.0
    %404 = vmatpush1.msra.mxu0 0.0
    %405 = vmatprep.subr.mxu0 0.0
    %406 = vmatpush1.msra.mxu0 0.0
    %407 = vmatprep.subr.mxu0 0.0
    %408 = vmatpush1.msra.mxu0 0.0
    %409 = vmatprep.subr.mxu0 0.0
    %410 = vmatpush1.msra.mxu0 0.0
    %411 = vmatprep.subr.mxu0 0.0
    %412 = vmatpush1.msra.mxu0 0.0
    %413 = vmatprep.subr.mxu0 0.0
    %414 = vmatpush1.msra.mxu0 0.0
    %415 = vmatprep.subr.mxu0 0.0
    %416 = vmatpush1.msra.mxu0 0.0
    %417 = vmatprep.subr.mxu0 0.0
    %v418 = vand.u32 %v82, 4294901760
    %v419 = vsub.f32 %v82, %v418
    %v420 = vand.u32 %v419, 4294901760
    %421 = vmatpush1.msra.mxu0 %v420
    %422 = vmatprep.subr.mxu0 0.0
    %423 = vmatpush2.msra.mxu0 0.0
    %424 = vmatprep.subr.mxu0 0.0
    %425 = vmatpush2.msra.mxu0 0.0
    %426 = vmatprep.subr.mxu0 0.0
    %427 = vmatpush2.msra.mxu0 0.0
    %428 = vmatprep.subr.mxu0 0.0
    %429 = vmatpush2.msra.mxu0 0.0
    %430 = vmatprep.subr.mxu0 0.0
    %431 = vmatpush2.msra.mxu0 0.0
    %432 = vmatprep.subr.mxu0 0.0
    %433 = vmatpush2.msra.mxu0 0.0
    %434 = vmatprep.subr.mxu0 0.0
    %435 = vmatpush2.msra.mxu0 0.0
    %436 = vmatprep.subr.mxu0 0.0
    %437 = vmatpush2.msra.mxu0 0.0
    %438 = vmatprep.subr.mxu0 0.0
    %439 = vmatpush2.msra.mxu0 0.0
    %440 = vmatprep.subr.mxu0 0.0
    %441 = vmatpush2.msra.mxu0 0.0
    %442 = vmatprep.subr.mxu0 0.0
    %443 = vmatpush2.msra.mxu0 0.0
    %444 = vmatprep.subr.mxu0 0.0
    %445 = vmatpush2.msra.mxu0 0.0
    %446 = vmatprep.subr.mxu0 0.0
    %447 = vmatpush2.msra.mxu0 0.0
    %448 = vmatprep.subr.mxu0 0.0
    %449 = vmatpush2.msra.mxu0 0.0
    %450 = vmatprep.subr.mxu0 0.0
    %451 = vmatpush2.msra.mxu0 0.0
    %452 = vmatprep.subr.mxu0 0.0
    %453 = vmatpush2.msra.mxu0 0.0
    %454 = vmatprep.mubr.f32.mxu0 0.0
    %v455 = vand.u32 %v85, 4294901760
    %456 = vmatmul.mubr.f32.gmra.mxu0 %v455
    %v457 = vpop.f32.mrf.mxu0
    %v458 = vadd.f32 %v384, %v457
    %v459 = vpop.f32.mrf.mxu0
    %460 = vdwg.mxu0
    %461 = vmatprep.subr.mxu0 0.0
    %462 = vmatpush1.msra.mxu0 0.0
    %463 = vmatprep.subr.mxu0 0.0
    %464 = vmatpush1.msra.mxu0 0.0
    %465 = vmatprep.subr.mxu0 0.0
    %466 = vmatpush1.msra.mxu0 0.0
    %467 = vmatprep.subr.mxu0 0.0
    %468 = vmatpush1.msra.mxu0 0.0
    %469 = vmatprep.subr.mxu0 0.0
    %470 = vmatpush1.msra.mxu0 0.0
    %471 = vmatprep.subr.mxu0 0.0
    %472 = vmatpush1.msra.mxu0 0.0
    %473 = vmatprep.subr.mxu0 0.0
    %474 = vmatpush1.msra.mxu0 0.0
    %475 = vmatprep.subr.mxu0 0.0
    %476 = vmatpush1.msra.mxu0 0.0
    %477 = vmatprep.subr.mxu0 0.0
    %478 = vmatpush1.msra.mxu0 0.0
    %479 = vmatprep.subr.mxu0 0.0
    %480 = vmatpush1.msra.mxu0 0.0
    %481 = vmatprep.subr.mxu0 0.0
    %482 = vmatpush1.msra.mxu0 0.0
    %483 = vmatprep.subr.mxu0 0.0
    %484 = vmatpush1.msra.mxu0 0.0
    %485 = vmatprep.subr.mxu0 0.0
    %486 = vmatpush1.msra.mxu0 0.0
    %487 = vmatprep.subr.mxu0 0.0
    %488 = vmatpush1.msra.mxu0 0.0
    %489 = vmatprep.subr.mxu0 0.0
    %490 = vmatpush1.msra.mxu0 0.0
    %491 = vmatprep.subr.mxu0 0.0
    %v492 = vand.u32 %v82, 4294901760
    %493 = vmatpush1.msra.mxu0 %v492
    %494 = vmatprep.subr.mxu0 0.0
    %495 = vmatpush2.msra.mxu0 0.0
    %496 = vmatprep.subr.mxu0 0.0
    %497 = vmatpush2.msra.mxu0 0.0
    %498 = vmatprep.subr.mxu0 0.0
    %499 = vmatpush2.msra.mxu0 0.0
    %500 = vmatprep.subr.mxu0 0.0
    %501 = vmatpush2.msra.mxu0 0.0
    %502 = vmatprep.subr.mxu0 0.0
    %503 = vmatpush2.msra.mxu0 0.0
    %504 = vmatprep.subr.mxu0 0.0
    %505 = vmatpush2.msra.mxu0 0.0
    %506 = vmatprep.subr.mxu0 0.0
    %507 = vmatpush2.msra.mxu0 0.0
    %508 = vmatprep.subr.mxu0 0.0
    %509 = vmatpush2.msra.mxu0 0.0
    %510 = vmatprep.subr.mxu0 0.0
    %511 = vmatpush2.msra.mxu0 0.0
    %512 = vmatprep.subr.mxu0 0.0
    %513 = vmatpush2.msra.mxu0 0.0
    %514 = vmatprep.subr.mxu0 0.0
    %515 = vmatpush2.msra.mxu0 0.0
    %516 = vmatprep.subr.mxu0 0.0
    %517 = vmatpush2.msra.mxu0 0.0
    %518 = vmatprep.subr.mxu0 0.0
    %519 = vmatpush2.msra.mxu0 0.0
    %520 = vmatprep.subr.mxu0 0.0
    %521 = vmatpush2.msra.mxu0 0.0
    %522 = vmatprep.subr.mxu0 0.0
    %523 = vmatpush2.msra.mxu0 0.0
    %524 = vmatprep.subr.mxu0 0.0
    %525 = vmatpush2.msra.mxu0 0.0
    %526 = vmatprep.mubr.f32.mxu0 0.0
    %v527 = vand.u32 %v85, 4294901760
    %528 = vmatmul.mubr.f32.gmra.mxu0 %v527
    %v529 = vpop.f32.mrf.mxu0
    %v530 = vadd.f32 %v458, %v529
    %v531 = vpop.f32.mrf.mxu0
    %532 = vdwg.mxu0
    %v533 = vld [vmem:[#allocation12] sm:$0xff]
    %v534 = vld [vmem:[#allocation12 + $0x8] sm:$0xff]
    %v535 = vld [vmem:[#allocation12 + $0x10] sm:$0xff]
    %v536 = vld [vmem:[#allocation12 + $0x18] sm:$0xff]
    %vm537 = vcmask 261120
    %538 = vst.msk [vmem:[#allocation2] sm:$0xff] %vm537, 0.0
    %vm539 = vcmask 257024
    %540 = vst.msk [vmem:[#allocation2 + $0x8] sm:$0xf] %vm539, 0.0
    %s541 = sld [smem:[#allocation3]]
    %s542 = sld [smem:[#allocation8]]
    %s543 = smax.f32 %s542, 0.0
    %s544 = sadd.f32 %s543, 1.0
    %v545 = vstv %s544
    %v546 = vrcp.pop %v545
    %s547 = vtos %v546
    %s548 = smul.f32 %s543, %s547
    %s549 = smul.f32 %s543, 0.5
    %v551 = vsel %vm537, 0.1, 0
    %553 = vmatprep.subr.mxu0 0.0
    %554 = vmatpush1.msra.mxu0 0.0
    %555 = vmatprep.subr.mxu0 0.0
    %556 = vmatpush1.msra.mxu0 0.0
    %557 = vmatprep.subr.mxu0 0.0
    %558 = vmatpush1.msra.mxu0 0.0
    %559 = vmatprep.subr.mxu0 0.0
    %560 = vmatpush1.msra.mxu0 0.0
    %561 = vmatprep.subr.mxu0 0.0
    %562 = vmatpush1.msra.mxu0 0.0
    %563 = vmatprep.subr.mxu0 0.0
    %564 = vmatpush1.msra.mxu0 0.0
    %565 = vmatprep.subr.mxu0 0.0
    %566 = vmatpush1.msra.mxu0 0.0
    %567 = vmatprep.subr.mxu0 0.0
    %568 = vmatpush1.msra.mxu0 0.0
    %569 = vmatprep.subr.mxu0 0.0
    %570 = vmatpush1.msra.mxu0 0.0
    %571 = vmatprep.subr.mxu0 0.0
    %572 = vmatpush1.msra.mxu0 0.0
    %573 = vmatprep.subr.mxu0 0.0
    %574 = vmatpush1.msra.mxu0 0.0
    %575 = vmatprep.subr.mxu0 0.0
    %576 = vmatpush1.msra.mxu0 0.0
    %577 = vmatprep.subr.mxu0 0.0
    %v578 = vand.u32 %v536, 4294901760
    %579 = vmatpush1.msra.mxu0 %v578
    %580 = vmatprep.subr.mxu0 0.0
    %v581 = vand.u32 %v535, 4294901760
    %582 = vmatpush1.msra.mxu0 %v581
    %583 = vmatprep.subr.mxu0 0.0
    %v584 = vand.u32 %v534, 4294901760
    %585 = vmatpush1.msra.mxu0 %v584
    %586 = vmatprep.subr.mxu0 0.0
    %v587 = vand.u32 %v533, 4294901760
    %588 = vmatpush1.msra.mxu0 %v587
    %589 = vmatprep.subr.mxu0 0.0
    %590 = vmatpush2.msra.mxu0 0.0
    %591 = vmatprep.subr.mxu0 0.0
    %592 = vmatpush2.msra.mxu0 0.0
    %593 = vmatprep.subr.mxu0 0.0
    %594 = vmatpush2.msra.mxu0 0.0
    %595 = vmatprep.subr.mxu0 0.0
    %596 = vmatpush2.msra.mxu0 0.0
    %597 = vmatprep.subr.mxu0 0.0
    %598 = vmatpush2.msra.mxu0 0.0
    %599 = vmatprep.subr.mxu0 0.0
    %600 = vmatpush2.msra.mxu0 0.0
    %601 = vmatprep.subr.mxu0 0.0
    %602 = vmatpush2.msra.mxu0 0.0
    %603 = vmatprep.subr.mxu0 0.0
    %604 = vmatpush2.msra.mxu0 0.0
    %605 = vmatprep.subr.mxu0 0.0
    %606 = vmatpush2.msra.mxu0 0.0
    %607 = vmatprep.subr.mxu0 0.0
    %608 = vmatpush2.msra.mxu0 0.0
    %609 = vmatprep.subr.mxu0 0.0
    %610 = vmatpush2.msra.mxu0 0.0
    %611 = vmatprep.subr.mxu0 0.0
    %612 = vmatpush2.msra.mxu0 0.0
    %613 = vmatprep.subr.mxu0 0.0
    %614 = vmatpush2.msra.mxu0 0.0
    %615 = vmatprep.subr.mxu0 0.0
    %616 = vmatpush2.msra.mxu0 0.0
    %617 = vmatprep.subr.mxu0 0.0
    %618 = vmatpush2.msra.mxu0 0.0
    %619 = vmatprep.subr.mxu0 0.0
    %620 = vmatpush2.msra.mxu0 0.0
    %621 = vmatprep.mubr.f32.mxu0 0.0
    %v622 = vand.u32 %v551, 4294901760
    %v623 = vsub.f32 %v551, %v622
    %v624 = vand.u32 %v623, 4294901760
    %v625 = vsub.f32 %v623, %v624
    %v626 = vand.u32 %v625, 4294901760
    %627 = vmatmul.mubr.f32.gmra.mxu0 %v626
    %v628 = vpop.f32.mrf.mxu0
    %v629 = vadd.f32 0.0, %v628
    %v630 = vpop.f32.mrf.mxu0
    %631 = vdwg.mxu0
    %632 = vmatprep.subr.mxu0 0.0
    %633 = vmatpush1.msra.mxu0 0.0
    %634 = vmatprep.subr.mxu0 0.0
    %635 = vmatpush1.msra.mxu0 0.0
    %636 = vmatprep.subr.mxu0 0.0
    %637 = vmatpush1.msra.mxu0 0.0
    %638 = vmatprep.subr.mxu0 0.0
    %639 = vmatpush1.msra.mxu0 0.0
    %640 = vmatprep.subr.mxu0 0.0
    %641 = vmatpush1.msra.mxu0 0.0
    %642 = vmatprep.subr.mxu0 0.0
    %643 = vmatpush1.msra.mxu0 0.0
    %644 = vmatprep.subr.mxu0 0.0
    %645 = vmatpush1.msra.mxu0 0.0
    %646 = vmatprep.subr.mxu0 0.0
    %647 = vmatpush1.msra.mxu0 0.0
    %648 = vmatprep.subr.mxu0 0.0
    %649 = vmatpush1.msra.mxu0 0.0
    %650 = vmatprep.subr.mxu0 0.0
    %651 = vmatpush1.msra.mxu0 0.0
    %652 = vmatprep.subr.mxu0 0.0
    %653 = vmatpush1.msra.mxu0 0.0
    %654 = vmatprep.subr.mxu0 0.0
    %655 = vmatpush1.msra.mxu0 0.0
    %656 = vmatprep.subr.mxu0 0.0
    %v657 = vand.u32 %v536, 4294901760
    %v658 = vsub.f32 %v536, %v657
    %v659 = vand.u32 %v658, 4294901760
    %v660 = vsub.f32 %v658, %v659
    %v661 = vand.u32 %v660, 4294901760
    %662 = vmatpush1.msra.mxu0 %v661
    %663 = vmatprep.subr.mxu0 0.0
    %v664 = vand.u32 %v535, 4294901760
    %v665 = vsub.f32 %v535, %v664
    %v666 = vand.u32 %v665, 4294901760
    %v667 = vsub.f32 %v665, %v666
    %v668 = vand.u32 %v667, 4294901760
    %669 = vmatpush1.msra.mxu0 %v668
    %670 = vmatprep.subr.mxu0 0.0
    %v671 = vand.u32 %v534, 4294901760
    %v672 = vsub.f32 %v534, %v671
    %v673 = vand.u32 %v672, 4294901760
    %v674 = vsub.f32 %v672, %v673
    %v675 = vand.u32 %v674, 4294901760
    %676 = vmatpush1.msra.mxu0 %v675
    %677 = vmatprep.subr.mxu0 0.0
    %v678 = vand.u32 %v533, 4294901760
    %v679 = vsub.f32 %v533, %v678
    %v680 = vand.u32 %v679, 4294901760
    %v681 = vsub.f32 %v679, %v680
    %v682 = vand.u32 %v681, 4294901760
    %683 = vmatpush1.msra.mxu0 %v682
    %684 = vmatprep.subr.mxu0 0.0
    %685 = vmatpush2.msra.mxu0 0.0
    %686 = vmatprep.subr.mxu0 0.0
    %687 = vmatpush2.msra.mxu0 0.0
    %688 = vmatprep.subr.mxu0 0.0
    %689 = vmatpush2.msra.mxu0 0.0
    %690 = vmatprep.subr.mxu0 0.0
    %691 = vmatpush2.msra.mxu0 0.0
    %692 = vmatprep.subr.mxu0 0.0
    %693 = vmatpush2.msra.mxu0 0.0
    %694 = vmatprep.subr.mxu0 0.0
    %695 = vmatpush2.msra.mxu0 0.0
    %696 = vmatprep.subr.mxu0 0.0
    %697 = vmatpush2.msra.mxu0 0.0
    %698 = vmatprep.subr.mxu0 0.0
    %699 = vmatpush2.msra.mxu0 0.0
    %700 = vmatprep.subr.mxu0 0.0
    %701 = vmatpush2.msra.mxu0 0.0
    %702 = vmatprep.subr.mxu0 0.0
    %703 = vmatpush2.msra.mxu0 0.0
    %704 = vmatprep.subr.mxu0 0.0
    %705 = vmatpush2.msra.mxu0 0.0
    %706 = vmatprep.subr.mxu0 0.0
    %707 = vmatpush2.msra.mxu0 0.0
    %708 = vmatprep.subr.mxu0 0.0
    %709 = vmatpush2.msra.mxu0 0.0
    %710 = vmatprep.subr.mxu0 0.0
    %711 = vmatpush2.msra.mxu0 0.0
    %712 = vmatprep.subr.mxu0 0.0
    %713 = vmatpush2.msra.mxu0 0.0
    %714 = vmatprep.subr.mxu0 0.0
    %715 = vmatpush2.msra.mxu0 0.0
    %716 = vmatprep.mubr.f32.mxu0 0.0
    %v717 = vand.u32 %v551, 4294901760
    %718 = vmatmul.mubr.f32.gmra.mxu0 %v717
    %v719 = vpop.f32.mrf.mxu0
    %v720 = vadd.f32 %v629, %v719
    %v721 = vpop.f32.mrf.mxu0
    %722 = vdwg.mxu0
    %723 = vmatprep.subr.mxu0 0.0
    %724 = vmatpush1.msra.mxu0 0.0
    %725 = vmatprep.subr.mxu0 0.0
    %726 = vmatpush1.msra.mxu0 0.0
    %727 = vmatprep.subr.mxu0 0.0
    %728 = vmatpush1.msra.mxu0 0.0
    %729 = vmatprep.subr.mxu0 0.0
    %730 = vmatpush1.msra.mxu0 0.0
    %731 = vmatprep.subr.mxu0 0.0
    %732 = vmatpush1.msra.mxu0 0.0
    %733 = vmatprep.subr.mxu0 0.0
    %734 = vmatpush1.msra.mxu0 0.0
    %735 = vmatprep.subr.mxu0 0.0
    %736 = vmatpush1.msra.mxu0 0.0
    %737 = vmatprep.subr.mxu0 0.0
    %738 = vmatpush1.msra.mxu0 0.0
    %739 = vmatprep.subr.mxu0 0.0
    %740 = vmatpush1.msra.mxu0 0.0
    %741 = vmatprep.subr.mxu0 0.0
    %742 = vmatpush1.msra.mxu0 0.0
    %743 = vmatprep.subr.mxu0 0.0
    %744 = vmatpush1.msra.mxu0 0.0
    %745 = vmatprep.subr.mxu0 0.0
    %746 = vmatpush1.msra.mxu0 0.0
    %747 = vmatprep.subr.mxu0 0.0
    %v748 = vand.u32 %v536, 4294901760
    %v749 = vsub.f32 %v536, %v748
    %750 = vmatpush1.msra.mxu0 %v749
    %751 = vmatprep.subr.mxu0 0.0
    %v752 = vand.u32 %v535, 4294901760
    %v753 = vsub.f32 %v535, %v752
    %754 = vmatpush1.msra.mxu0 %v753
    %755 = vmatprep.subr.mxu0 0.0
    %v756 = vand.u32 %v534, 4294901760
    %v757 = vsub.f32 %v534, %v756
    %758 = vmatpush1.msra.mxu0 %v757
    %759 = vmatprep.subr.mxu0 0.0
    %v760 = vand.u32 %v533, 4294901760
    %v761 = vsub.f32 %v533, %v760
    %762 = vmatpush1.msra.mxu0 %v761
    %763 = vmatprep.subr.mxu0 0.0
    %764 = vmatpush2.msra.mxu0 0.0
    %765 = vmatprep.subr.mxu0 0.0
    %766 = vmatpush2.msra.mxu0 0.0
    %767 = vmatprep.subr.mxu0 0.0
    %768 = vmatpush2.msra.mxu0 0.0
    %769 = vmatprep.subr.mxu0 0.0
    %770 = vmatpush2.msra.mxu0 0.0
    %771 = vmatprep.subr.mxu0 0.0
    %772 = vmatpush2.msra.mxu0 0.0
    %773 = vmatprep.subr.mxu0 0.0
    %774 = vmatpush2.msra.mxu0 0.0
    %775 = vmatprep.subr.mxu0 0.0
    %776 = vmatpush2.msra.mxu0 0.0
    %777 = vmatprep.subr.mxu0 0.0
    %778 = vmatpush2.msra.mxu0 0.0
    %779 = vmatprep.subr.mxu0 0.0
    %780 = vmatpush2.msra.mxu0 0.0
    %781 = vmatprep.subr.mxu0 0.0
    %782 = vmatpush2.msra.mxu0 0.0
    %783 = vmatprep.subr.mxu0 0.0
    %784 = vmatpush2.msra.mxu0 0.0
    %785 = vmatprep.subr.mxu0 0.0
    %786 = vmatpush2.msra.mxu0 0.0
    %787 = vmatprep.subr.mxu0 0.0
    %788 = vmatpush2.msra.mxu0 0.0
    %789 = vmatprep.subr.mxu0 0.0
    %790 = vmatpush2.msra.mxu0 0.0
    %791 = vmatprep.subr.mxu0 0.0
    %792 = vmatpush2.msra.mxu0 0.0
    %793 = vmatprep.subr.mxu0 0.0
    %794 = vmatpush2.msra.mxu0 0.0
    %795 = vmatprep.mubr.f32.mxu0 0.0
    %v796 = vand.u32 %v551, 4294901760
    %v797 = vsub.f32 %v551, %v796
    %798 = vmatmul.mubr.f32.gmra.mxu0 %v797
    %v799 = vpop.f32.mrf.mxu0
    %v800 = vadd.f32 %v720, %v799
    %v801 = vpop.f32.mrf.mxu0
    %802 = vdwg.mxu0
    %803 = vmatprep.subr.mxu0 0.0
    %804 = vmatpush1.msra.mxu0 0.0
    %805 = vmatprep.subr.mxu0 0.0
    %806 = vmatpush1.msra.mxu0 0.0
    %807 = vmatprep.subr.mxu0 0.0
    %808 = vmatpush1.msra.mxu0 0.0
    %809 = vmatprep.subr.mxu0 0.0
    %810 = vmatpush1.msra.mxu0 0.0
    %811 = vmatprep.subr.mxu0 0.0
    %812 = vmatpush1.msra.mxu0 0.0
    %813 = vmatprep.subr.mxu0 0.0
    %814 = vmatpush1.msra.mxu0 0.0
    %815 = vmatprep.subr.mxu0 0.0
    %816 = vmatpush1.msra.mxu0 0.0
    %817 = vmatprep.subr.mxu0 0.0
    %818 = vmatpush1.msra.mxu0 0.0
    %819 = vmatprep.subr.mxu0 0.0
    %820 = vmatpush1.msra.mxu0 0.0
    %821 = vmatprep.subr.mxu0 0.0
    %822 = vmatpush1.msra.mxu0 0.0
    %823 = vmatprep.subr.mxu0 0.0
    %824 = vmatpush1.msra.mxu0 0.0
    %825 = vmatprep.subr.mxu0 0.0
    %826 = vmatpush1.msra.mxu0 0.0
    %827 = vmatprep.subr.mxu0 0.0
    %v828 = vand.u32 %v536, 4294901760
    %829 = vmatpush1.msra.mxu0 %v828
    %830 = vmatprep.subr.mxu0 0.0
    %v831 = vand.u32 %v535, 4294901760
    %832 = vmatpush1.msra.mxu0 %v831
    %833 = vmatprep.subr.mxu0 0.0
    %v834 = vand.u32 %v534, 4294901760
    %835 = vmatpush1.msra.mxu0 %v834
    %836 = vmatprep.subr.mxu0 0.0
    %v837 = vand.u32 %v533, 4294901760
    %838 = vmatpush1.msra.mxu0 %v837
    %839 = vmatprep.subr.mxu0 0.0
    %840 = vmatpush2.msra.mxu0 0.0
    %841 = vmatprep.subr.mxu0 0.0
    %842 = vmatpush2.msra.mxu0 0.0
    %843 = vmatprep.subr.mxu0 0.0
    %844 = vmatpush2.msra.mxu0 0.0
    %845 = vmatprep.subr.mxu0 0.0
    %846 = vmatpush2.msra.mxu0 0.0
    %847 = vmatprep.subr.mxu0 0.0
    %848 = vmatpush2.msra.mxu0 0.0
    %849 = vmatprep.subr.mxu0 0.0
    %850 = vmatpush2.msra.mxu0 0.0
    %851 = vmatprep.subr.mxu0 0.0
    %852 = vmatpush2.msra.mxu0 0.0
    %853 = vmatprep.subr.mxu0 0.0
    %854 = vmatpush2.msra.mxu0 0.0
    %855 = vmatprep.subr.mxu0 0.0
    %856 = vmatpush2.msra.mxu0 0.0
    %857 = vmatprep.subr.mxu0 0.0
    %858 = vmatpush2.msra.mxu0 0.0
    %859 = vmatprep.subr.mxu0 0.0
    %860 = vmatpush2.msra.mxu0 0.0
    %861 = vmatprep.subr.mxu0 0.0
    %862 = vmatpush2.msra.mxu0 0.0
    %863 = vmatprep.subr.mxu0 0.0
    %864 = vmatpush2.msra.mxu0 0.0
    %865 = vmatprep.subr.mxu0 0.0
    %866 = vmatpush2.msra.mxu0 0.0
    %867 = vmatprep.subr.mxu0 0.0
    %868 = vmatpush2.msra.mxu0 0.0
    %869 = vmatprep.subr.mxu0 0.0
    %870 = vmatpush2.msra.mxu0 0.0
    %871 = vmatprep.mubr.f32.mxu0 0.0
    %v872 = vand.u32 %v551, 4294901760
    %v873 = vsub.f32 %v551, %v872
    %v874 = vand.u32 %v873, 4294901760
    %875 = vmatmul.mubr.f32.gmra.mxu0 %v874
    %v876 = vpop.f32.mrf.mxu0
    %v877 = vadd.f32 %v800, %v876
    %v878 = vpop.f32.mrf.mxu0
    %879 = vdwg.mxu0
    %880 = vmatprep.subr.mxu0 0.0
    %881 = vmatpush1.msra.mxu0 0.0
    %882 = vmatprep.subr.mxu0 0.0
    %883 = vmatpush1.msra.mxu0 0.0
    %884 = vmatprep.subr.mxu0 0.0
    %885 = vmatpush1.msra.mxu0 0.0
    %886 = vmatprep.subr.mxu0 0.0
    %887 = vmatpush1.msra.mxu0 0.0
    %888 = vmatprep.subr.mxu0 0.0
    %889 = vmatpush1.msra.mxu0 0.0
    %890 = vmatprep.subr.mxu0 0.0
    %891 = vmatpush1.msra.mxu0 0.0
    %892 = vmatprep.subr.mxu0 0.0
    %893 = vmatpush1.msra.mxu0 0.0
    %894 = vmatprep.subr.mxu0 0.0
    %895 = vmatpush1.msra.mxu0 0.0
    %896 = vmatprep.subr.mxu0 0.0
    %897 = vmatpush1.msra.mxu0 0.0
    %898 = vmatprep.subr.mxu0 0.0
    %899 = vmatpush1.msra.mxu0 0.0
    %900 = vmatprep.subr.mxu0 0.0
    %901 = vmatpush1.msra.mxu0 0.0
    %902 = vmatprep.subr.mxu0 0.0
    %903 = vmatpush1.msra.mxu0 0.0
    %904 = vmatprep.subr.mxu0 0.0
    %v905 = vand.u32 %v536, 4294901760
    %v906 = vsub.f32 %v536, %v905
    %v907 = vand.u32 %v906, 4294901760
    %908 = vmatpush1.msra.mxu0 %v907
    %909 = vmatprep.subr.mxu0 0.0
    %v910 = vand.u32 %v535, 4294901760
    %v911 = vsub.f32 %v535, %v910
    %v912 = vand.u32 %v911, 4294901760
    %913 = vmatpush1.msra.mxu0 %v912
    %914 = vmatprep.subr.mxu0 0.0
    %v915 = vand.u32 %v534, 4294901760
    %v916 = vsub.f32 %v534, %v915
    %v917 = vand.u32 %v916, 4294901760
    %918 = vmatpush1.msra.mxu0 %v917
    %919 = vmatprep.subr.mxu0 0.0
    %v920 = vand.u32 %v533, 4294901760
    %v921 = vsub.f32 %v533, %v920
    %v922 = vand.u32 %v921, 4294901760
    %923 = vmatpush1.msra.mxu0 %v922
    %924 = vmatprep.subr.mxu0 0.0
    %925 = vmatpush2.msra.mxu0 0.0
    %926 = vmatprep.subr.mxu0 0.0
    %927 = vmatpush2.msra.mxu0 0.0
    %928 = vmatprep.subr.mxu0 0.0
    %929 = vmatpush2.msra.mxu0 0.0
    %930 = vmatprep.subr.mxu0 0.0
    %931 = vmatpush2.msra.mxu0 0.0
    %932 = vmatprep.subr.mxu0 0.0
    %933 = vmatpush2.msra.mxu0 0.0
    %934 = vmatprep.subr.mxu0 0.0
    %935 = vmatpush2.msra.mxu0 0.0
    %936 = vmatprep.subr.mxu0 0.0
    %937 = vmatpush2.msra.mxu0 0.0
    %938 = vmatprep.subr.mxu0 0.0
    %939 = vmatpush2.msra.mxu0 0.0
    %940 = vmatprep.subr.mxu0 0.0
    %941 = vmatpush2.msra.mxu0 0.0
    %942 = vmatprep.subr.mxu0 0.0
    %943 = vmatpush2.msra.mxu0 0.0
    %944 = vmatprep.subr.mxu0 0.0
    %945 = vmatpush2.msra.mxu0 0.0
    %946 = vmatprep.subr.mxu0 0.0
    %947 = vmatpush2.msra.mxu0 0.0
    %948 = vmatprep.subr.mxu0 0.0
    %949 = vmatpush2.msra.mxu0 0.0
    %950 = vmatprep.subr.mxu0 0.0
    %951 = vmatpush2.msra.mxu0 0.0
    %952 = vmatprep.subr.mxu0 0.0
    %953 = vmatpush2.msra.mxu0 0.0
    %954 = vmatprep.subr.mxu0 0.0
    %955 = vmatpush2.msra.mxu0 0.0
    %956 = vmatprep.mubr.f32.mxu0 0.0
    %v957 = vand.u32 %v551, 4294901760
    %958 = vmatmul.mubr.f32.gmra.mxu0 %v957
    %v959 = vpop.f32.mrf.mxu0
    %v960 = vadd.f32 %v877, %v959
    %v961 = vpop.f32.mrf.mxu0
    %962 = vdwg.mxu0
    %963 = vmatprep.subr.mxu0 0.0
    %964 = vmatpush1.msra.mxu0 0.0
    %965 = vmatprep.subr.mxu0 0.0
    %966 = vmatpush1.msra.mxu0 0.0
    %967 = vmatprep.subr.mxu0 0.0
    %968 = vmatpush1.msra.mxu0 0.0
    %969 = vmatprep.subr.mxu0 0.0
    %970 = vmatpush1.msra.mxu0 0.0
    %971 = vmatprep.subr.mxu0 0.0
    %972 = vmatpush1.msra.mxu0 0.0
    %973 = vmatprep.subr.mxu0 0.0
    %974 = vmatpush1.msra.mxu0 0.0
    %975 = vmatprep.subr.mxu0 0.0
    %976 = vmatpush1.msra.mxu0 0.0
    %977 = vmatprep.subr.mxu0 0.0
    %978 = vmatpush1.msra.mxu0 0.0
    %979 = vmatprep.subr.mxu0 0.0
    %980 = vmatpush1.msra.mxu0 0.0
    %981 = vmatprep.subr.mxu0 0.0
    %982 = vmatpush1.msra.mxu0 0.0
    %983 = vmatprep.subr.mxu0 0.0
    %984 = vmatpush1.msra.mxu0 0.0
    %985 = vmatprep.subr.mxu0 0.0
    %986 = vmatpush1.msra.mxu0 0.0
    %987 = vmatprep.subr.mxu0 0.0
    %v988 = vand.u32 %v536, 4294901760
    %989 = vmatpush1.msra.mxu0 %v988
    %990 = vmatprep.subr.mxu0 0.0
    %v991 = vand.u32 %v535, 4294901760
    %992 = vmatpush1.msra.mxu0 %v991
    %993 = vmatprep.subr.mxu0 0.0
    %v994 = vand.u32 %v534, 4294901760
    %995 = vmatpush1.msra.mxu0 %v994
    %996 = vmatprep.subr.mxu0 0.0
    %v997 = vand.u32 %v533, 4294901760
    %998 = vmatpush1.msra.mxu0 %v997
    %999 = vmatprep.subr.mxu0 0.0
    %1000 = vmatpush2.msra.mxu0 0.0
    %1001 = vmatprep.subr.mxu0 0.0
    %1002 = vmatpush2.msra.mxu0 0.0
    %1003 = vmatprep.subr.mxu0 0.0
    %1004 = vmatpush2.msra.mxu0 0.0
    %1005 = vmatprep.subr.mxu0 0.0
    %1006 = vmatpush2.msra.mxu0 0.0
    %1007 = vmatprep.subr.mxu0 0.0
    %1008 = vmatpush2.msra.mxu0 0.0
    %1009 = vmatprep.subr.mxu0 0.0
    %1010 = vmatpush2.msra.mxu0 0.0
    %1011 = vmatprep.subr.mxu0 0.0
    %1012 = vmatpush2.msra.mxu0 0.0
    %1013 = vmatprep.subr.mxu0 0.0
    %1014 = vmatpush2.msra.mxu0 0.0
    %1015 = vmatprep.subr.mxu0 0.0
    %1016 = vmatpush2.msra.mxu0 0.0
    %1017 = vmatprep.subr.mxu0 0.0
    %1018 = vmatpush2.msra.mxu0 0.0
    %1019 = vmatprep.subr.mxu0 0.0
    %1020 = vmatpush2.msra.mxu0 0.0
    %1021 = vmatprep.subr.mxu0 0.0
    %1022 = vmatpush2.msra.mxu0 0.0
    %1023 = vmatprep.subr.mxu0 0.0
    %1024 = vmatpush2.msra.mxu0 0.0
    %1025 = vmatprep.subr.mxu0 0.0
    %1026 = vmatpush2.msra.mxu0 0.0
    %1027 = vmatprep.subr.mxu0 0.0
    %1028 = vmatpush2.msra.mxu0 0.0
    %1029 = vmatprep.subr.mxu0 0.0
    %1030 = vmatpush2.msra.mxu0 0.0
    %1031 = vmatprep.mubr.f32.mxu0 0.0
    %v1032 = vand.u32 %v551, 4294901760
    %1033 = vmatmul.mubr.f32.gmra.mxu0 %v1032
    %v1034 = vpop.f32.mrf.mxu0
    %v1035 = vadd.f32 %v960, %v1034
    %v1036 = vpop.f32.mrf.mxu0
    %1037 = vdwg.mxu0
    %v1038 = vsel %vm537, 0.010000001, 0.0
    %1039 = vadd.xlane.f32.xlu0 %v1038
    %v1040 = vpop.xlane.xlu0 %1039
    %v1041 = vstv %s543
    %v1042 = vadd.f32 %v1041, 0.5
    %v1043 = vstv %s549
    %v1044 = vrcp.pop %v1042
    %v1045 = vmul.f32 %v1043, %v1044
    %v1046 = vmul.f32 %v1045, %v1045
    %v1047 = vadd.f32 %v1040, %v1046
    %v1048 = vmul.f32 %v1047, 0.5
    %v1049 = vadd.f32 %v1048, -0.5
    %v1050 = vmul.f32 %v1049, 0.1
    %v1051 = vadd.f32 %v1050, 0.5
    %v1052 = vmax.f32 %v1051, 0.0
    %v1053 = vsub.f32 %v1052, 0.5
    %v1054 = vmul.f32 %v1053, 0.1
    %v1055 = vadd.f32 %v1054, 0.5
    %v1056 = vmul.f32 %v1055, 0.1
    %v1057 = vadd.f32 %v1056, 1.0
    %v1058 = vstv %s548
    %v1059 = vmul.f32 %v1058, %v530
    %v1060 = vadd.f32 %v1059, -0.1
    %v1061 = vstv %s547
    %v1062 = vmul.f32 %v1061, %v1035
    %v1063 = vadd.f32 %v1060, %v1062
    %v1064 = vmul.f32 %v1063, 0.2
    %v1065 = vstv %s541
    %v1066 = vmul.f32 %v1065, %v1035
    %1068 = vrot.lane.b32.xlu0 %v1066, 96
    %v1069 = vpop.permute.xlu0 %1068
    %v1071 = vadd.f32 %v1064, %v1069
    %v1072 = vadd.f32 %v1071, 0.1
    %v1073 = vmax.f32 %v1072, 0.0
    %vm1074 = vcmask 253952
    %1075 = vst.msk [vmem:[#allocation2 + $0x2] sm:$0x1] %vm1074, %v1073
    %s1076 = sld [smem:[#allocation3 + $0x1]]
    %s1077 = sld [smem:[#allocation8 + $0x1]]
    %s1078 = smax.f32 %s1077, 0.0
    %s1079 = sadd.f32 %s1078, 1.0
    %v1080 = vstv %s1079
    %v1081 = vrcp.pop %v1080
    %s1082 = vtos %v1081
    %s1083 = smul.f32 %s1078, %s1082
    %s1084 = smul.f32 %s1078, 0.5
    %v1085 = vmax.f32 %v1057, 0.0
    %v1086 = vmin.f32 %v1051, 1.0
    %v1088 = vsel %vm537, %v1073, 0
    %1090 = vmatprep.subr.mxu0 0.0
    %1091 = vmatpush1.msra.mxu0 0.0
    %1092 = vmatprep.subr.mxu0 0.0
    %1093 = vmatpush1.msra.mxu0 0.0
    %1094 = vmatprep.subr.mxu0 0.0
    %1095 = vmatpush1.msra.mxu0 0.0
    %1096 = vmatprep.subr.mxu0 0.0
    %1097 = vmatpush1.msra.mxu0 0.0
    %1098 = vmatprep.subr.mxu0 0.0
    %1099 = vmatpush1.msra.mxu0 0.0
    %1100 = vmatprep.subr.mxu0 0.0
    %1101 = vmatpush1.msra.mxu0 0.0
    %1102 = vmatprep.subr.mxu0 0.0
    %1103 = vmatpush1.msra.mxu0 0.0
    %1104 = vmatprep.subr.mxu0 0.0
    %1105 = vmatpush1.msra.mxu0 0.0
    %1106 = vmatprep.subr.mxu0 0.0
    %1107 = vmatpush1.msra.mxu0 0.0
    %1108 = vmatprep.subr.mxu0 0.0
    %1109 = vmatpush1.msra.mxu0 0.0
    %1110 = vmatprep.subr.mxu0 0.0
    %1111 = vmatpush1.msra.mxu0 0.0
    %1112 = vmatprep.subr.mxu0 0.0
    %1113 = vmatpush1.msra.mxu0 0.0
    %1114 = vmatprep.subr.mxu0 0.0
    %v1115 = vand.u32 %v536, 4294901760
    %1116 = vmatpush1.msra.mxu0 %v1115
    %1117 = vmatprep.subr.mxu0 0.0
    %v1118 = vand.u32 %v535, 4294901760
    %1119 = vmatpush1.msra.mxu0 %v1118
    %1120 = vmatprep.subr.mxu0 0.0
    %v1121 = vand.u32 %v534, 4294901760
    %1122 = vmatpush1.msra.mxu0 %v1121
    %1123 = vmatprep.subr.mxu0 0.0
    %v1124 = vand.u32 %v533, 4294901760
    %1125 = vmatpush1.msra.mxu0 %v1124
    %1126 = vmatprep.subr.mxu0 0.0
    %1127 = vmatpush2.msra.mxu0 0.0
    %1128 = vmatprep.subr.mxu0 0.0
    %1129 = vmatpush2.msra.mxu0 0.0
    %1130 = vmatprep.subr.mxu0 0.0
    %1131 = vmatpush2.msra.mxu0 0.0
    %1132 = vmatprep.subr.mxu0 0.0
    %1133 = vmatpush2.msra.mxu0 0.0
    %1134 = vmatprep.subr.mxu0 0.0
    %1135 = vmatpush2.msra.mxu0 0.0
    %1136 = vmatprep.subr.mxu0 0.0
    %1137 = vmatpush2.msra.mxu0 0.0
    %1138 = vmatprep.subr.mxu0 0.0
    %1139 = vmatpush2.msra.mxu0 0.0
    %1140 = vmatprep.subr.mxu0 0.0
    %1141 = vmatpush2.msra.mxu0 0.0
    %1142 = vmatprep.subr.mxu0 0.0
    %1143 = vmatpush2.msra.mxu0 0.0
    %1144 = vmatprep.subr.mxu0 0.0
    %1145 = vmatpush2.msra.mxu0 0.0
    %1146 = vmatprep.subr.mxu0 0.0
    %1147 = vmatpush2.msra.mxu0 0.0
    %1148 = vmatprep.subr.mxu0 0.0
    %1149 = vmatpush2.msra.mxu0 0.0
    %1150 = vmatprep.subr.mxu0 0.0
    %1151 = vmatpush2.msra.mxu0 0.0
    %1152 = vmatprep.subr.mxu0 0.0
    %1153 = vmatpush2.msra.mxu0 0.0
    %1154 = vmatprep.subr.mxu0 0.0
    %1155 = vmatpush2.msra.mxu0 0.0
    %1156 = vmatprep.subr.mxu0 0.0
    %1157 = vmatpush2.msra.mxu0 0.0
    %1158 = vmatprep.mubr.f32.mxu0 0.0
    %v1159 = vand.u32 %v1088, 4294901760
    %v1160 = vsub.f32 %v1088, %v1159
    %v1161 = vand.u32 %v1160, 4294901760
    %v1162 = vsub.f32 %v1160, %v1161
    %v1163 = vand.u32 %v1162, 4294901760
    %1164 = vmatmul.mubr.f32.gmra.mxu0 %v1163
    %v1165 = vpop.f32.mrf.mxu0
    %v1166 = vadd.f32 0.0, %v1165
    %v1167 = vpop.f32.mrf.mxu0
    %1168 = vdwg.mxu0
    %1169 = vmatprep.subr.mxu0 0.0
    %1170 = vmatpush1.msra.mxu0 0.0
    %1171 = vmatprep.subr.mxu0 0.0
    %1172 = vmatpush1.msra.mxu0 0.0
    %1173 = vmatprep.subr.mxu0 0.0
    %1174 = vmatpush1.msra.mxu0 0.0
    %1175 = vmatprep.subr.mxu0 0.0
    %1176 = vmatpush1.msra.mxu0 0.0
    %1177 = vmatprep.subr.mxu0 0.0
    %1178 = vmatpush1.msra.mxu0 0.0
    %1179 = vmatprep.subr.mxu0 0.0
    %1180 = vmatpush1.msra.mxu0 0.0
    %1181 = vmatprep.subr.mxu0 0.0
    %1182 = vmatpush1.msra.mxu0 0.0
    %1183 = vmatprep.subr.mxu0 0.0
    %1184 = vmatpush1.msra.mxu0 0.0
    %1185 = vmatprep.subr.mxu0 0.0
    %1186 = vmatpush1.msra.mxu0 0.0
    %1187 = vmatprep.subr.mxu0 0.0
    %1188 = vmatpush1.msra.mxu0 0.0
    %1189 = vmatprep.subr.mxu0 0.0
    %1190 = vmatpush1.msra.mxu0 0.0
    %1191 = vmatprep.subr.mxu0 0.0
    %1192 = vmatpush1.msra.mxu0 0.0
    %1193 = vmatprep.subr.mxu0 0.0
    %v1194 = vand.u32 %v536, 4294901760
    %v1195 = vsub.f32 %v536, %v1194
    %v1196 = vand.u32 %v1195, 4294901760
    %v1197 = vsub.f32 %v1195, %v1196
    %v1198 = vand.u32 %v1197, 4294901760
    %1199 = vmatpush1.msra.mxu0 %v1198
    %1200 = vmatprep.subr.mxu0 0.0
    %v1201 = vand.u32 %v535, 4294901760
    %v1202 = vsub.f32 %v535, %v1201
    %v1203 = vand.u32 %v1202, 4294901760
    %v1204 = vsub.f32 %v1202, %v1203
    %v1205 = vand.u32 %v1204, 4294901760
    %1206 = vmatpush1.msra.mxu0 %v1205
    %1207 = vmatprep.subr.mxu0 0.0
    %v1208 = vand.u32 %v534, 4294901760
    %v1209 = vsub.f32 %v534, %v1208
    %v1210 = vand.u32 %v1209, 4294901760
    %v1211 = vsub.f32 %v1209, %v1210
    %v1212 = vand.u32 %v1211, 4294901760
    %1213 = vmatpush1.msra.mxu0 %v1212
    %1214 = vmatprep.subr.mxu0 0.0
    %v1215 = vand.u32 %v533, 4294901760
    %v1216 = vsub.f32 %v533, %v1215
    %v1217 = vand.u32 %v1216, 4294901760
    %v1218 = vsub.f32 %v1216, %v1217
    %v1219 = vand.u32 %v1218, 4294901760
    %1220 = vmatpush1.msra.mxu0 %v1219
    %1221 = vmatprep.subr.mxu0 0.0
    %1222 = vmatpush2.msra.mxu0 0.0
    %1223 = vmatprep.subr.mxu0 0.0
    %1224 = vmatpush2.msra.mxu0 0.0
    %1225 = vmatprep.subr.mxu0 0.0
    %1226 = vmatpush2.msra.mxu0 0.0
    %1227 = vmatprep.subr.mxu0 0.0
    %1228 = vmatpush2.msra.mxu0 0.0
    %1229 = vmatprep.subr.mxu0 0.0
    %1230 = vmatpush2.msra.mxu0 0.0
    %1231 = vmatprep.subr.mxu0 0.0
    %1232 = vmatpush2.msra.mxu0 0.0
    %1233 = vmatprep.subr.mxu0 0.0
    %1234 = vmatpush2.msra.mxu0 0.0
    %1235 = vmatprep.subr.mxu0 0.0
    %1236 = vmatpush2.msra.mxu0 0.0
    %1237 = vmatprep.subr.mxu0 0.0
    %1238 = vmatpush2.msra.mxu0 0.0
    %1239 = vmatprep.subr.mxu0 0.0
    %1240 = vmatpush2.msra.mxu0 0.0
    %1241 = vmatprep.subr.mxu0 0.0
    %1242 = vmatpush2.msra.mxu0 0.0
    %1243 = vmatprep.subr.mxu0 0.0
    %1244 = vmatpush2.msra.mxu0 0.0
    %1245 = vmatprep.subr.mxu0 0.0
    %1246 = vmatpush2.msra.mxu0 0.0
    %1247 = vmatprep.subr.mxu0 0.0
    %1248 = vmatpush2.msra.mxu0 0.0
    %1249 = vmatprep.subr.mxu0 0.0
    %1250 = vmatpush2.msra.mxu0 0.0
    %1251 = vmatprep.subr.mxu0 0.0
    %1252 = vmatpush2.msra.mxu0 0.0
    %1253 = vmatprep.mubr.f32.mxu0 0.0
    %v1254 = vand.u32 %v1088, 4294901760
    %1255 = vmatmul.mubr.f32.gmra.mxu0 %v1254
    %v1256 = vpop.f32.mrf.mxu0
    %v1257 = vadd.f32 %v1166, %v1256
    %v1258 = vpop.f32.mrf.mxu0
    %1259 = vdwg.mxu0
    %1260 = vmatprep.subr.mxu0 0.0
    %1261 = vmatpush1.msra.mxu0 0.0
    %1262 = vmatprep.subr.mxu0 0.0
    %1263 = vmatpush1.msra.mxu0 0.0
    %1264 = vmatprep.subr.mxu0 0.0
    %1265 = vmatpush1.msra.mxu0 0.0
    %1266 = vmatprep.subr.mxu0 0.0
    %1267 = vmatpush1.msra.mxu0 0.0
    %1268 = vmatprep.subr.mxu0 0.0
    %1269 = vmatpush1.msra.mxu0 0.0
    %1270 = vmatprep.subr.mxu0 0.0
    %1271 = vmatpush1.msra.mxu0 0.0
    %1272 = vmatprep.subr.mxu0 0.0
    %1273 = vmatpush1.msra.mxu0 0.0
    %1274 = vmatprep.subr.mxu0 0.0
    %1275 = vmatpush1.msra.mxu0 0.0
    %1276 = vmatprep.subr.mxu0 0.0
    %1277 = vmatpush1.msra.mxu0 0.0
    %1278 = vmatprep.subr.mxu0 0.0
    %1279 = vmatpush1.msra.mxu0 0.0
    %1280 = vmatprep.subr.mxu0 0.0
    %1281 = vmatpush1.msra.mxu0 0.0
    %1282 = vmatprep.subr.mxu0 0.0
    %1283 = vmatpush1.msra.mxu0 0.0
    %1284 = vmatprep.subr.mxu0 0.0
    %v1285 = vand.u32 %v536, 4294901760
    %v1286 = vsub.f32 %v536, %v1285
    %1287 = vmatpush1.msra.mxu0 %v1286
    %1288 = vmatprep.subr.mxu0 0.0
    %v1289 = vand.u32 %v535, 4294901760
    %v1290 = vsub.f32 %v535, %v1289
    %1291 = vmatpush1.msra.mxu0 %v1290
    %1292 = vmatprep.subr.mxu0 0.0
    %v1293 = vand.u32 %v534, 4294901760
    %v1294 = vsub.f32 %v534, %v1293
    %1295 = vmatpush1.msra.mxu0 %v1294
    %1296 = vmatprep.subr.mxu0 0.0
    %v1297 = vand.u32 %v533, 4294901760
    %v1298 = vsub.f32 %v533, %v1297
    %1299 = vmatpush1.msra.mxu0 %v1298
    %1300 = vmatprep.subr.mxu0 0.0
    %1301 = vmatpush2.msra.mxu0 0.0
    %1302 = vmatprep.subr.mxu0 0.0
    %1303 = vmatpush2.msra.mxu0 0.0
    %1304 = vmatprep.subr.mxu0 0.0
    %1305 = vmatpush2.msra.mxu0 0.0
    %1306 = vmatprep.subr.mxu0 0.0
    %1307 = vmatpush2.msra.mxu0 0.0
    %1308 = vmatprep.subr.mxu0 0.0
    %1309 = vmatpush2.msra.mxu0 0.0
    %1310 = vmatprep.subr.mxu0 0.0
    %1311 = vmatpush2.msra.mxu0 0.0
    %1312 = vmatprep.subr.mxu0 0.0
    %1313 = vmatpush2.msra.mxu0 0.0
    %1314 = vmatprep.subr.mxu0 0.0
    %1315 = vmatpush2.msra.mxu0 0.0
    %1316 = vmatprep.subr.mxu0 0.0
    %1317 = vmatpush2.msra.mxu0 0.0
    %1318 = vmatprep.subr.mxu0 0.0
    %1319 = vmatpush2.msra.mxu0 0.0
    %1320 = vmatprep.subr.mxu0 0.0
    %1321 = vmatpush2.msra.mxu0 0.0
    %1322 = vmatprep.subr.mxu0 0.0
    %1323 = vmatpush2.msra.mxu0 0.0
    %1324 = vmatprep.subr.mxu0 0.0
    %1325 = vmatpush2.msra.mxu0 0.0
    %1326 = vmatprep.subr.mxu0 0.0
    %1327 = vmatpush2.msra.mxu0 0.0
    %1328 = vmatprep.subr.mxu0 0.0
    %1329 = vmatpush2.msra.mxu0 0.0
    %1330 = vmatprep.subr.mxu0 0.0
    %1331 = vmatpush2.msra.mxu0 0.0
    %1332 = vmatprep.mubr.f32.mxu0 0.0
    %v1333 = vand.u32 %v1088, 4294901760
    %v1334 = vsub.f32 %v1088, %v1333
    %1335 = vmatmul.mubr.f32.gmra.mxu0 %v1334
    %v1336 = vpop.f32.mrf.mxu0
    %v1337 = vadd.f32 %v1257, %v1336
    %v1338 = vpop.f32.mrf.mxu0
    %1339 = vdwg.mxu0
    %1340 = vmatprep.subr.mxu0 0.0
    %1341 = vmatpush1.msra.mxu0 0.0
    %1342 = vmatprep.subr.mxu0 0.0
    %1343 = vmatpush1.msra.mxu0 0.0
    %1344 = vmatprep.subr.mxu0 0.0
    %1345 = vmatpush1.msra.mxu0 0.0
    %1346 = vmatprep.subr.mxu0 0.0
    %1347 = vmatpush1.msra.mxu0 0.0
    %1348 = vmatprep.subr.mxu0 0.0
    %1349 = vmatpush1.msra.mxu0 0.0
    %1350 = vmatprep.subr.mxu0 0.0
    %1351 = vmatpush1.msra.mxu0 0.0
    %1352 = vmatprep.subr.mxu0 0.0
    %1353 = vmatpush1.msra.mxu0 0.0
    %1354 = vmatprep.subr.mxu0 0.0
    %1355 = vmatpush1.msra.mxu0 0.0
    %1356 = vmatprep.subr.mxu0 0.0
    %1357 = vmatpush1.msra.mxu0 0.0
    %1358 = vmatprep.subr.mxu0 0.0
    %1359 = vmatpush1.msra.mxu0 0.0
    %1360 = vmatprep.subr.mxu0 0.0
    %1361 = vmatpush1.msra.mxu0 0.0
    %1362 = vmatprep.subr.mxu0 0.0
    %1363 = vmatpush1.msra.mxu0 0.0
    %1364 = vmatprep.subr.mxu0 0.0
    %v1365 = vand.u32 %v536, 4294901760
    %1366 = vmatpush1.msra.mxu0 %v1365
    %1367 = vmatprep.subr.mxu0 0.0
    %v1368 = vand.u32 %v535, 4294901760
    %1369 = vmatpush1.msra.mxu0 %v1368
    %1370 = vmatprep.subr.mxu0 0.0
    %v1371 = vand.u32 %v534, 4294901760
    %1372 = vmatpush1.msra.mxu0 %v1371
    %1373 = vmatprep.subr.mxu0 0.0
    %v1374 = vand.u32 %v533, 4294901760
    %1375 = vmatpush1.msra.mxu0 %v1374
    %1376 = vmatprep.subr.mxu0 0.0
    %1377 = vmatpush2.msra.mxu0 0.0
    %1378 = vmatprep.subr.mxu0 0.0
    %1379 = vmatpush2.msra.mxu0 0.0
    %1380 = vmatprep.subr.mxu0 0.0
    %1381 = vmatpush2.msra.mxu0 0.0
    %1382 = vmatprep.subr.mxu0 0.0
    %1383 = vmatpush2.msra.mxu0 0.0
    %1384 = vmatprep.subr.mxu0 0.0
    %1385 = vmatpush2.msra.mxu0 0.0
    %1386 = vmatprep.subr.mxu0 0.0
    %1387 = vmatpush2.msra.mxu0 0.0
    %1388 = vmatprep.subr.mxu0 0.0
    %1389 = vmatpush2.msra.mxu0 0.0
    %1390 = vmatprep.subr.mxu0 0.0
    %1391 = vmatpush2.msra.mxu0 0.0
    %1392 = vmatprep.subr.mxu0 0.0
    %1393 = vmatpush2.msra.mxu0 0.0
    %1394 = vmatprep.subr.mxu0 0.0
    %1395 = vmatpush2.msra.mxu0 0.0
    %1396 = vmatprep.subr.mxu0 0.0
    %1397 = vmatpush2.msra.mxu0 0.0
    %1398 = vmatprep.subr.mxu0 0.0
    %1399 = vmatpush2.msra.mxu0 0.0
    %1400 = vmatprep.subr.mxu0 0.0
    %1401 = vmatpush2.msra.mxu0 0.0
    %1402 = vmatprep.subr.mxu0 0.0
    %1403 = vmatpush2.msra.mxu0 0.0
    %1404 = vmatprep.subr.mxu0 0.0
    %1405 = vmatpush2.msra.mxu0 0.0
    %1406 = vmatprep.subr.mxu0 0.0
    %1407 = vmatpush2.msra.mxu0 0.0
    %1408 = vmatprep.mubr.f32.mxu0 0.0
    %v1409 = vand.u32 %v1088, 4294901760
    %v1410 = vsub.f32 %v1088, %v1409
    %v1411 = vand.u32 %v1410, 4294901760
    %1412 = vmatmul.mubr.f32.gmra.mxu0 %v1411
    %v1413 = vpop.f32.mrf.mxu0
    %v1414 = vadd.f32 %v1337, %v1413
    %v1415 = vpop.f32.mrf.mxu0
    %1416 = vdwg.mxu0
    %1417 = vmatprep.subr.mxu0 0.0
    %1418 = vmatpush1.msra.mxu0 0.0
    %1419 = vmatprep.subr.mxu0 0.0
    %1420 = vmatpush1.msra.mxu0 0.0
    %1421 = vmatprep.subr.mxu0 0.0
    %1422 = vmatpush1.msra.mxu0 0.0
    %1423 = vmatprep.subr.mxu0 0.0
    %1424 = vmatpush1.msra.mxu0 0.0
    %1425 = vmatprep.subr.mxu0 0.0
    %1426 = vmatpush1.msra.mxu0 0.0
    %1427 = vmatprep.subr.mxu0 0.0
    %1428 = vmatpush1.msra.mxu0 0.0
    %1429 = vmatprep.subr.mxu0 0.0
    %1430 = vmatpush1.msra.mxu0 0.0
    %1431 = vmatprep.subr.mxu0 0.0
    %1432 = vmatpush1.msra.mxu0 0.0
    %1433 = vmatprep.subr.mxu0 0.0
    %1434 = vmatpush1.msra.mxu0 0.0
    %1435 = vmatprep.subr.mxu0 0.0
    %1436 = vmatpush1.msra.mxu0 0.0
    %1437 = vmatprep.subr.mxu0 0.0
    %1438 = vmatpush1.msra.mxu0 0.0
    %1439 = vmatprep.subr.mxu0 0.0
    %1440 = vmatpush1.msra.mxu0 0.0
    %1441 = vmatprep.subr.mxu0 0.0
    %v1442 = vand.u32 %v536, 4294901760
    %v1443 = vsub.f32 %v536, %v1442
    %v1444 = vand.u32 %v1443, 4294901760
    %1445 = vmatpush1.msra.mxu0 %v1444
    %1446 = vmatprep.subr.mxu0 0.0
    %v1447 = vand.u32 %v535, 4294901760
    %v1448 = vsub.f32 %v535, %v1447
    %v1449 = vand.u32 %v1448, 4294901760
    %1450 = vmatpush1.msra.mxu0 %v1449
    %1451 = vmatprep.subr.mxu0 0.0
    %v1452 = vand.u32 %v534, 4294901760
    %v1453 = vsub.f32 %v534, %v1452
    %v1454 = vand.u32 %v1453, 4294901760
    %1455 = vmatpush1.msra.mxu0 %v1454
    %1456 = vmatprep.subr.mxu0 0.0
    %v1457 = vand.u32 %v533, 4294901760
    %v1458 = vsub.f32 %v533, %v1457
    %v1459 = vand.u32 %v1458, 4294901760
    %1460 = vmatpush1.msra.mxu0 %v1459
    %1461 = vmatprep.subr.mxu0 0.0
    %1462 = vmatpush2.msra.mxu0 0.0
    %1463 = vmatprep.subr.mxu0 0.0
    %1464 = vmatpush2.msra.mxu0 0.0
    %1465 = vmatprep.subr.mxu0 0.0
    %1466 = vmatpush2.msra.mxu0 0.0
    %1467 = vmatprep.subr.mxu0 0.0
    %1468 = vmatpush2.msra.mxu0 0.0
    %1469 = vmatprep.subr.mxu0 0.0
    %1470 = vmatpush2.msra.mxu0 0.0
    %1471 = vmatprep.subr.mxu0 0.0
    %1472 = vmatpush2.msra.mxu0 0.0
    %1473 = vmatprep.subr.mxu0 0.0
    %1474 = vmatpush2.msra.mxu0 0.0
    %1475 = vmatprep.subr.mxu0 0.0
    %1476 = vmatpush2.msra.mxu0 0.0
    %1477 = vmatprep.subr.mxu0 0.0
    %1478 = vmatpush2.msra.mxu0 0.0
    %1479 = vmatprep.subr.mxu0 0.0
    %1480 = vmatpush2.msra.mxu0 0.0
    %1481 = vmatprep.subr.mxu0 0.0
    %1482 = vmatpush2.msra.mxu0 0.0
    %1483 = vmatprep.subr.mxu0 0.0
    %1484 = vmatpush2.msra.mxu0 0.0
    %1485 = vmatprep.subr.mxu0 0.0
    %1486 = vmatpush2.msra.mxu0 0.0
    %1487 = vmatprep.subr.mxu0 0.0
    %1488 = vmatpush2.msra.mxu0 0.0
    %1489 = vmatprep.subr.mxu0 0.0
    %1490 = vmatpush2.msra.mxu0 0.0
    %1491 = vmatprep.subr.mxu0 0.0
    %1492 = vmatpush2.msra.mxu0 0.0
    %1493 = vmatprep.mubr.f32.mxu0 0.0
    %v1494 = vand.u32 %v1088, 4294901760
    %1495 = vmatmul.mubr.f32.gmra.mxu0 %v1494
    %v1496 = vpop.f32.mrf.mxu0
    %v1497 = vadd.f32 %v1414, %v1496
    %v1498 = vpop.f32.mrf.mxu0
    %1499 = vdwg.mxu0
    %1500 = vmatprep.subr.mxu0 0.0
    %1501 = vmatpush1.msra.mxu0 0.0
    %1502 = vmatprep.subr.mxu0 0.0
    %1503 = vmatpush1.msra.mxu0 0.0
    %1504 = vmatprep.subr.mxu0 0.0
    %1505 = vmatpush1.msra.mxu0 0.0
    %1506 = vmatprep.subr.mxu0 0.0
    %1507 = vmatpush1.msra.mxu0 0.0
    %1508 = vmatprep.subr.mxu0 0.0
    %1509 = vmatpush1.msra.mxu0 0.0
    %1510 = vmatprep.subr.mxu0 0.0
    %1511 = vmatpush1.msra.mxu0 0.0
    %1512 = vmatprep.subr.mxu0 0.0
    %1513 = vmatpush1.msra.mxu0 0.0
    %1514 = vmatprep.subr.mxu0 0.0
    %1515 = vmatpush1.msra.mxu0 0.0
    %1516 = vmatprep.subr.mxu0 0.0
    %1517 = vmatpush1.msra.mxu0 0.0
    %1518 = vmatprep.subr.mxu0 0.0
    %1519 = vmatpush1.msra.mxu0 0.0
    %1520 = vmatprep.subr.mxu0 0.0
    %1521 = vmatpush1.msra.mxu0 0.0
    %1522 = vmatprep.subr.mxu0 0.0
    %1523 = vmatpush1.msra.mxu0 0.0
    %1524 = vmatprep.subr.mxu0 0.0
    %v1525 = vand.u32 %v536, 4294901760
    %1526 = vmatpush1.msra.mxu0 %v1525
    %1527 = vmatprep.subr.mxu0 0.0
    %v1528 = vand.u32 %v535, 4294901760
    %1529 = vmatpush1.msra.mxu0 %v1528
    %1530 = vmatprep.subr.mxu0 0.0
    %v1531 = vand.u32 %v534, 4294901760
    %1532 = vmatpush1.msra.mxu0 %v1531
    %1533 = vmatprep.subr.mxu0 0.0
    %v1534 = vand.u32 %v533, 4294901760
    %1535 = vmatpush1.msra.mxu0 %v1534
    %1536 = vmatprep.subr.mxu0 0.0
    %1537 = vmatpush2.msra.mxu0 0.0
    %1538 = vmatprep.subr.mxu0 0.0
    %1539 = vmatpush2.msra.mxu0 0.0
    %1540 = vmatprep.subr.mxu0 0.0
    %1541 = vmatpush2.msra.mxu0 0.0
    %1542 = vmatprep.subr.mxu0 0.0
    %1543 = vmatpush2.msra.mxu0 0.0
    %1544 = vmatprep.subr.mxu0 0.0
    %1545 = vmatpush2.msra.mxu0 0.0
    %1546 = vmatprep.subr.mxu0 0.0
    %1547 = vmatpush2.msra.mxu0 0.0
    %1548 = vmatprep.subr.mxu0 0.0
    %1549 = vmatpush2.msra.mxu0 0.0
    %1550 = vmatprep.subr.mxu0 0.0
    %1551 = vmatpush2.msra.mxu0 0.0
    %1552 = vmatprep.subr.mxu0 0.0
    %1553 = vmatpush2.msra.mxu0 0.0
    %1554 = vmatprep.subr.mxu0 0.0
    %1555 = vmatpush2.msra.mxu0 0.0
    %1556 = vmatprep.subr.mxu0 0.0
    %1557 = vmatpush2.msra.mxu0 0.0
    %1558 = vmatprep.subr.mxu0 0.0
    %1559 = vmatpush2.msra.mxu0 0.0
    %1560 = vmatprep.subr.mxu0 0.0
    %1561 = vmatpush2.msra.mxu0 0.0
    %1562 = vmatprep.subr.mxu0 0.0
    %1563 = vmatpush2.msra.mxu0 0.0
    %1564 = vmatprep.subr.mxu0 0.0
    %1565 = vmatpush2.msra.mxu0 0.0
    %1566 = vmatprep.subr.mxu0 0.0
    %1567 = vmatpush2.msra.mxu0 0.0
    %1568 = vmatprep.mubr.f32.mxu0 0.0
    %v1569 = vand.u32 %v1088, 4294901760
    %1570 = vmatmul.mubr.f32.gmra.mxu0 %v1569
    %v1571 = vpop.f32.mrf.mxu0
    %v1572 = vadd.f32 %v1497, %v1571
    %v1573 = vpop.f32.mrf.mxu0
    %1574 = vdwg.mxu0
    %v1575 = vmul.f32 %v1073, %v1073
    %v1576 = vsel %vm1074, %v1575, 0.0
    %1577 = vadd.xlane.f32.xlu0 %v1576
    %v1578 = vpop.xlane.xlu0 %1577
    %v1579 = vsub.f32 0.0, %v1051
    %v1580 = vstv %s1078
    %v1581 = vadd.f32 %v1580, %v1086
    %v1582 = vstv %s1084
    %v1583 = vrcp.pop %v1581
    %v1584 = vmul.f32 %v1582, %v1583
    %v1585 = vmul.f32 %v1584, %v1584
    %v1586 = vadd.f32 %v1578, %v1585
    %v1587 = vmul.f32 %v1051, %v1586
    %v1588 = vadd.f32 %v1579, %v1587
    %v1589 = vmul.f32 %v1588, 0.1
    %v1590 = vadd.f32 %v1051, %v1589
    %v1591 = vmax.f32 %v1590, 0.0
    %v1592 = vsub.f32 %v1591, %v1086
    %v1593 = vsub.f32 0.0, %v1057
    %v1594 = vmul.f32 %v1085, %v1086
    %v1595 = vadd.f32 %v1593, %v1594
    %v1596 = vadd.f32 %v1595, 1.0
    %v1597 = vmul.f32 %v1592, 0.1
    %v1598 = vadd.f32 %v1596, %v1597
    %v1599 = vmul.f32 %v1598, 0.1
    %v1600 = vadd.f32 %v1057, %v1599
    %v1601 = vsub.f32 0.0, %v1072
    %v1602 = vstv %s1083
    %v1603 = vmul.f32 %v1602, %v530
    %v1605 = vrot.slane %v1603, 1
    %v1607 = vadd.f32 %v1601, %v1605
    %v1608 = vrcp.pop %v1085
    %v1609 = vmul.f32 1.0, %v1608
    %v1610 = vstv %s1082
    %v1611 = vmul.f32 %v1609, %v1610
    %v1612 = vmul.f32 %v1611, %v1572
    %v1613 = vadd.f32 %v1607, %v1612
    %v1614 = vmul.f32 %v1613, 0.2
    %v1615 = vstv %s1076
    %v1616 = vmul.f32 %v1615, %v1572
    %1618 = vrot.lane.b32.xlu0 %v1616, 96
    %v1619 = vpop.permute.xlu0 %1618
    %v1621 = vadd.f32 %v1614, %v1619
    %v1622 = vadd.f32 %v1072, %v1621
    %v1623 = vmax.f32 %v1622, 0.0
    %1624 = vst.msk [vmem:[#allocation2 + $0x3] sm:$0x1] %vm1074, %v1623
    %s1625 = sld [smem:[#allocation3 + $0x2]]
    %s1626 = sld [smem:[#allocation8 + $0x2]]
    %s1627 = smax.f32 %s1626, 0.0
    %s1628 = sadd.f32 %s1627, 1.0
    %v1629 = vstv %s1628
    %v1630 = vrcp.pop %v1629
    %s1631 = vtos %v1630
    %s1632 = smul.f32 %s1627, %s1631
    %s1633 = smul.f32 %s1627, 0.5
    %v1634 = vmax.f32 %v1600, 0.0
    %v1635 = vmin.f32 %v1590, 1.0
    %v1637 = vsel %vm537, %v1623, 0
    %1639 = vmatprep.subr.mxu0 0.0
    %1640 = vmatpush1.msra.mxu0 0.0
    %1641 = vmatprep.subr.mxu0 0.0
    %1642 = vmatpush1.msra.mxu0 0.0
    %1643 = vmatprep.subr.mxu0 0.0
    %1644 = vmatpush1.msra.mxu0 0.0
    %1645 = vmatprep.subr.mxu0 0.0
    %1646 = vmatpush1.msra.mxu0 0.0
    %1647 = vmatprep.subr.mxu0 0.0
    %1648 = vmatpush1.msra.mxu0 0.0
    %1649 = vmatprep.subr.mxu0 0.0
    %1650 = vmatpush1.msra.mxu0 0.0
    %1651 = vmatprep.subr.mxu0 0.0
    %1652 = vmatpush1.msra.mxu0 0.0
    %1653 = vmatprep.subr.mxu0 0.0
    %1654 = vmatpush1.msra.mxu0 0.0
    %1655 = vmatprep.subr.mxu0 0.0
    %1656 = vmatpush1.msra.mxu0 0.0
    %1657 = vmatprep.subr.mxu0 0.0
    %1658 = vmatpush1.msra.mxu0 0.0
    %1659 = vmatprep.subr.mxu0 0.0
    %1660 = vmatpush1.msra.mxu0 0.0
    %1661 = vmatprep.subr.mxu0 0.0
    %1662 = vmatpush1.msra.mxu0 0.0
    %1663 = vmatprep.subr.mxu0 0.0
    %v1664 = vand.u32 %v536, 4294901760
    %1665 = vmatpush1.msra.mxu0 %v1664
    %1666 = vmatprep.subr.mxu0 0.0
    %v1667 = vand.u32 %v535, 4294901760
    %1668 = vmatpush1.msra.mxu0 %v1667
    %1669 = vmatprep.subr.mxu0 0.0
    %v1670 = vand.u32 %v534, 4294901760
    %1671 = vmatpush1.msra.mxu0 %v1670
    %1672 = vmatprep.subr.mxu0 0.0
    %v1673 = vand.u32 %v533, 4294901760
    %1674 = vmatpush1.msra.mxu0 %v1673
    %1675 = vmatprep.subr.mxu0 0.0
    %1676 = vmatpush2.msra.mxu0 0.0
    %1677 = vmatprep.subr.mxu0 0.0
    %1678 = vmatpush2.msra.mxu0 0.0
    %1679 = vmatprep.subr.mxu0 0.0
    %1680 = vmatpush2.msra.mxu0 0.0
    %1681 = vmatprep.subr.mxu0 0.0
    %1682 = vmatpush2.msra.mxu0 0.0
    %1683 = vmatprep.subr.mxu0 0.0
    %1684 = vmatpush2.msra.mxu0 0.0
    %1685 = vmatprep.subr.mxu0 0.0
    %1686 = vmatpush2.msra.mxu0 0.0
    %1687 = vmatprep.subr.mxu0 0.0
    %1688 = vmatpush2.msra.mxu0 0.0
    %1689 = vmatprep.subr.mxu0 0.0
    %1690 = vmatpush2.msra.mxu0 0.0
    %1691 = vmatprep.subr.mxu0 0.0
    %1692 = vmatpush2.msra.mxu0 0.0
    %1693 = vmatprep.subr.mxu0 0.0
    %1694 = vmatpush2.msra.mxu0 0.0
    %1695 = vmatprep.subr.mxu0 0.0
    %1696 = vmatpush2.msra.mxu0 0.0
    %1697 = vmatprep.subr.mxu0 0.0
    %1698 = vmatpush2.msra.mxu0 0.0
    %1699 = vmatprep.subr.mxu0 0.0
    %1700 = vmatpush2.msra.mxu0 0.0
    %1701 = vmatprep.subr.mxu0 0.0
    %1702 = vmatpush2.msra.mxu0 0.0
    %1703 = vmatprep.subr.mxu0 0.0
    %1704 = vmatpush2.msra.mxu0 0.0
    %1705 = vmatprep.subr.mxu0 0.0
    %1706 = vmatpush2.msra.mxu0 0.0
    %1707 = vmatprep.mubr.f32.mxu0 0.0
    %v1708 = vand.u32 %v1637, 4294901760
    %v1709 = vsub.f32 %v1637, %v1708
    %v1710 = vand.u32 %v1709, 4294901760
    %v1711 = vsub.f32 %v1709, %v1710
    %v1712 = vand.u32 %v1711, 4294901760
    %1713 = vmatmul.mubr.f32.gmra.mxu0 %v1712
    %v1714 = vpop.f32.mrf.mxu0
    %v1715 = vadd.f32 0.0, %v1714
    %v1716 = vpop.f32.mrf.mxu0
    %1717 = vdwg.mxu0
    %1718 = vmatprep.subr.mxu0 0.0
    %1719 = vmatpush1.msra.mxu0 0.0
    %1720 = vmatprep.subr.mxu0 0.0
    %1721 = vmatpush1.msra.mxu0 0.0
    %1722 = vmatprep.subr.mxu0 0.0
    %1723 = vmatpush1.msra.mxu0 0.0
    %1724 = vmatprep.subr.mxu0 0.0
    %1725 = vmatpush1.msra.mxu0 0.0
    %1726 = vmatprep.subr.mxu0 0.0
    %1727 = vmatpush1.msra.mxu0 0.0
    %1728 = vmatprep.subr.mxu0 0.0
    %1729 = vmatpush1.msra.mxu0 0.0
    %1730 = vmatprep.subr.mxu0 0.0
    %1731 = vmatpush1.msra.mxu0 0.0
    %1732 = vmatprep.subr.mxu0 0.0
    %1733 = vmatpush1.msra.mxu0 0.0
    %1734 = vmatprep.subr.mxu0 0.0
    %1735 = vmatpush1.msra.mxu0 0.0
    %1736 = vmatprep.subr.mxu0 0.0
    %1737 = vmatpush1.msra.mxu0 0.0
    %1738 = vmatprep.subr.mxu0 0.0
    %1739 = vmatpush1.msra.mxu0 0.0
    %1740 = vmatprep.subr.mxu0 0.0
    %1741 = vmatpush1.msra.mxu0 0.0
    %1742 = vmatprep.subr.mxu0 0.0
    %v1743 = vand.u32 %v536, 4294901760
    %v1744 = vsub.f32 %v536, %v1743
    %v1745 = vand.u32 %v1744, 4294901760
    %v1746 = vsub.f32 %v1744, %v1745
    %v1747 = vand.u32 %v1746, 4294901760
    %1748 = vmatpush1.msra.mxu0 %v1747
    %1749 = vmatprep.subr.mxu0 0.0
    %v1750 = vand.u32 %v535, 4294901760
    %v1751 = vsub.f32 %v535, %v1750
    %v1752 = vand.u32 %v1751, 4294901760
    %v1753 = vsub.f32 %v1751, %v1752
    %v1754 = vand.u32 %v1753, 4294901760
    %1755 = vmatpush1.msra.mxu0 %v1754
    %1756 = vmatprep.subr.mxu0 0.0
    %v1757 = vand.u32 %v534, 4294901760
    %v1758 = vsub.f32 %v534, %v1757
    %v1759 = vand.u32 %v1758, 4294901760
    %v1760 = vsub.f32 %v1758, %v1759
    %v1761 = vand.u32 %v1760, 4294901760
    %1762 = vmatpush1.msra.mxu0 %v1761
    %1763 = vmatprep.subr.mxu0 0.0
    %v1764 = vand.u32 %v533, 4294901760
    %v1765 = vsub.f32 %v533, %v1764
    %v1766 = vand.u32 %v1765, 4294901760
    %v1767 = vsub.f32 %v1765, %v1766
    %v1768 = vand.u32 %v1767, 4294901760
    %1769 = vmatpush1.msra.mxu0 %v1768
    %1770 = vmatprep.subr.mxu0 0.0
    %1771 = vmatpush2.msra.mxu0 0.0
    %1772 = vmatprep.subr.mxu0 0.0
    %1773 = vmatpush2.msra.mxu0 0.0
    %1774 = vmatprep.subr.mxu0 0.0
    %1775 = vmatpush2.msra.mxu0 0.0
    %1776 = vmatprep.subr.mxu0 0.0
    %1777 = vmatpush2.msra.mxu0 0.0
    %1778 = vmatprep.subr.mxu0 0.0
    %1779 = vmatpush2.msra.mxu0 0.0
    %1780 = vmatprep.subr.mxu0 0.0
    %1781 = vmatpush2.msra.mxu0 0.0
    %1782 = vmatprep.subr.mxu0 0.0
    %1783 = vmatpush2.msra.mxu0 0.0
    %1784 = vmatprep.subr.mxu0 0.0
    %1785 = vmatpush2.msra.mxu0 0.0
    %1786 = vmatprep.subr.mxu0 0.0
    %1787 = vmatpush2.msra.mxu0 0.0
    %1788 = vmatprep.subr.mxu0 0.0
    %1789 = vmatpush2.msra.mxu0 0.0
    %1790 = vmatprep.subr.mxu0 0.0
    %1791 = vmatpush2.msra.mxu0 0.0
    %1792 = vmatprep.subr.mxu0 0.0
    %1793 = vmatpush2.msra.mxu0 0.0
    %1794 = vmatprep.subr.mxu0 0.0
    %1795 = vmatpush2.msra.mxu0 0.0
    %1796 = vmatprep.subr.mxu0 0.0
    %1797 = vmatpush2.msra.mxu0 0.0
    %1798 = vmatprep.subr.mxu0 0.0
    %1799 = vmatpush2.msra.mxu0 0.0
    %1800 = vmatprep.subr.mxu0 0.0
    %1801 = vmatpush2.msra.mxu0 0.0
    %1802 = vmatprep.mubr.f32.mxu0 0.0
    %v1803 = vand.u32 %v1637, 4294901760
    %1804 = vmatmul.mubr.f32.gmra.mxu0 %v1803
    %v1805 = vpop.f32.mrf.mxu0
    %v1806 = vadd.f32 %v1715, %v1805
    %v1807 = vpop.f32.mrf.mxu0
    %1808 = vdwg.mxu0
    %1809 = vmatprep.subr.mxu0 0.0
    %1810 = vmatpush1.msra.mxu0 0.0
    %1811 = vmatprep.subr.mxu0 0.0
    %1812 = vmatpush1.msra.mxu0 0.0
    %1813 = vmatprep.subr.mxu0 0.0
    %1814 = vmatpush1.msra.mxu0 0.0
    %1815 = vmatprep.subr.mxu0 0.0
    %1816 = vmatpush1.msra.mxu0 0.0
    %1817 = vmatprep.subr.mxu0 0.0
    %1818 = vmatpush1.msra.mxu0 0.0
    %1819 = vmatprep.subr.mxu0 0.0
    %1820 = vmatpush1.msra.mxu0 0.0
    %1821 = vmatprep.subr.mxu0 0.0
    %1822 = vmatpush1.msra.mxu0 0.0
    %1823 = vmatprep.subr.mxu0 0.0
    %1824 = vmatpush1.msra.mxu0 0.0
    %1825 = vmatprep.subr.mxu0 0.0
    %1826 = vmatpush1.msra.mxu0 0.0
    %1827 = vmatprep.subr.mxu0 0.0
    %1828 = vmatpush1.msra.mxu0 0.0
    %1829 = vmatprep.subr.mxu0 0.0
    %1830 = vmatpush1.msra.mxu0 0.0
    %1831 = vmatprep.subr.mxu0 0.0
    %1832 = vmatpush1.msra.mxu0 0.0
    %1833 = vmatprep.subr.mxu0 0.0
    %v1834 = vand.u32 %v536, 4294901760
    %v1835 = vsub.f32 %v536, %v1834
    %1836 = vmatpush1.msra.mxu0 %v1835
    %1837 = vmatprep.subr.mxu0 0.0
    %v1838 = vand.u32 %v535, 4294901760
    %v1839 = vsub.f32 %v535, %v1838
    %1840 = vmatpush1.msra.mxu0 %v1839
    %1841 = vmatprep.subr.mxu0 0.0
    %v1842 = vand.u32 %v534, 4294901760
    %v1843 = vsub.f32 %v534, %v1842
    %1844 = vmatpush1.msra.mxu0 %v1843
    %1845 = vmatprep.subr.mxu0 0.0
    %v1846 = vand.u32 %v533, 4294901760
    %v1847 = vsub.f32 %v533, %v1846
    %1848 = vmatpush1.msra.mxu0 %v1847
    %1849 = vmatprep.subr.mxu0 0.0
    %1850 = vmatpush2.msra.mxu0 0.0
    %1851 = vmatprep.subr.mxu0 0.0
    %1852 = vmatpush2.msra.mxu0 0.0
    %1853 = vmatprep.subr.mxu0 0.0
    %1854 = vmatpush2.msra.mxu0 0.0
    %1855 = vmatprep.subr.mxu0 0.0
    %1856 = vmatpush2.msra.mxu0 0.0
    %1857 = vmatprep.subr.mxu0 0.0
    %1858 = vmatpush2.msra.mxu0 0.0
    %1859 = vmatprep.subr.mxu0 0.0
    %1860 = vmatpush2.msra.mxu0 0.0
    %1861 = vmatprep.subr.mxu0 0.0
    %1862 = vmatpush2.msra.mxu0 0.0
    %1863 = vmatprep.subr.mxu0 0.0
    %1864 = vmatpush2.msra.mxu0 0.0
    %1865 = vmatprep.subr.mxu0 0.0
    %1866 = vmatpush2.msra.mxu0 0.0
    %1867 = vmatprep.subr.mxu0 0.0
    %1868 = vmatpush2.msra.mxu0 0.0
    %1869 = vmatprep.subr.mxu0 0.0
    %1870 = vmatpush2.msra.mxu0 0.0
    %1871 = vmatprep.subr.mxu0 0.0
    %1872 = vmatpush2.msra.mxu0 0.0
    %1873 = vmatprep.subr.mxu0 0.0
    %1874 = vmatpush2.msra.mxu0 0.0
    %1875 = vmatprep.subr.mxu0 0.0
    %1876 = vmatpush2.msra.mxu0 0.0
    %1877 = vmatprep.subr.mxu0 0.0
    %1878 = vmatpush2.msra.mxu0 0.0
    %1879 = vmatprep.subr.mxu0 0.0
    %1880 = vmatpush2.msra.mxu0 0.0
    %1881 = vmatprep.mubr.f32.mxu0 0.0
    %v1882 = vand.u32 %v1637, 4294901760
    %v1883 = vsub.f32 %v1637, %v1882
    %1884 = vmatmul.mubr.f32.gmra.mxu0 %v1883
    %v1885 = vpop.f32.mrf.mxu0
    %v1886 = vadd.f32 %v1806, %v1885
    %v1887 = vpop.f32.mrf.mxu0
    %1888 = vdwg.mxu0
    %1889 = vmatprep.subr.mxu0 0.0
    %1890 = vmatpush1.msra.mxu0 0.0
    %1891 = vmatprep.subr.mxu0 0.0
    %1892 = vmatpush1.msra.mxu0 0.0
    %1893 = vmatprep.subr.mxu0 0.0
    %1894 = vmatpush1.msra.mxu0 0.0
    %1895 = vmatprep.subr.mxu0 0.0
    %1896 = vmatpush1.msra.mxu0 0.0
    %1897 = vmatprep.subr.mxu0 0.0
    %1898 = vmatpush1.msra.mxu0 0.0
    %1899 = vmatprep.subr.mxu0 0.0
    %1900 = vmatpush1.msra.mxu0 0.0
    %1901 = vmatprep.subr.mxu0 0.0
    %1902 = vmatpush1.msra.mxu0 0.0
    %1903 = vmatprep.subr.mxu0 0.0
    %1904 = vmatpush1.msra.mxu0 0.0
    %1905 = vmatprep.subr.mxu0 0.0
    %1906 = vmatpush1.msra.mxu0 0.0
    %1907 = vmatprep.subr.mxu0 0.0
    %1908 = vmatpush1.msra.mxu0 0.0
    %1909 = vmatprep.subr.mxu0 0.0
    %1910 = vmatpush1.msra.mxu0 0.0
    %1911 = vmatprep.subr.mxu0 0.0
    %1912 = vmatpush1.msra.mxu0 0.0
    %1913 = vmatprep.subr.mxu0 0.0
    %v1914 = vand.u32 %v536, 4294901760
    %1915 = vmatpush1.msra.mxu0 %v1914
    %1916 = vmatprep.subr.mxu0 0.0
    %v1917 = vand.u32 %v535, 4294901760
    %1918 = vmatpush1.msra.mxu0 %v1917
    %1919 = vmatprep.subr.mxu0 0.0
    %v1920 = vand.u32 %v534, 4294901760
    %1921 = vmatpush1.msra.mxu0 %v1920
    %1922 = vmatprep.subr.mxu0 0.0
    %v1923 = vand.u32 %v533, 4294901760
    %1924 = vmatpush1.msra.mxu0 %v1923
    %1925 = vmatprep.subr.mxu0 0.0
    %1926 = vmatpush2.msra.mxu0 0.0
    %1927 = vmatprep.subr.mxu0 0.0
    %1928 = vmatpush2.msra.mxu0 0.0
    %1929 = vmatprep.subr.mxu0 0.0
    %1930 = vmatpush2.msra.mxu0 0.0
    %1931 = vmatprep.subr.mxu0 0.0
    %1932 = vmatpush2.msra.mxu0 0.0
    %1933 = vmatprep.subr.mxu0 0.0
    %1934 = vmatpush2.msra.mxu0 0.0
    %1935 = vmatprep.subr.mxu0 0.0
    %1936 = vmatpush2.msra.mxu0 0.0
    %1937 = vmatprep.subr.mxu0 0.0
    %1938 = vmatpush2.msra.mxu0 0.0
    %1939 = vmatprep.subr.mxu0 0.0
    %1940 = vmatpush2.msra.mxu0 0.0
    %1941 = vmatprep.subr.mxu0 0.0
    %1942 = vmatpush2.msra.mxu0 0.0
    %1943 = vmatprep.subr.mxu0 0.0
    %1944 = vmatpush2.msra.mxu0 0.0
    %1945 = vmatprep.subr.mxu0 0.0
    %1946 = vmatpush2.msra.mxu0 0.0
    %1947 = vmatprep.subr.mxu0 0.0
    %1948 = vmatpush2.msra.mxu0 0.0
    %1949 = vmatprep.subr.mxu0 0.0
    %1950 = vmatpush2.msra.mxu0 0.0
    %1951 = vmatprep.subr.mxu0 0.0
    %1952 = vmatpush2.msra.mxu0 0.0
    %1953 = vmatprep.subr.mxu0 0.0
    %1954 = vmatpush2.msra.mxu0 0.0
    %1955 = vmatprep.subr.mxu0 0.0
    %1956 = vmatpush2.msra.mxu0 0.0
    %1957 = vmatprep.mubr.f32.mxu0 0.0
    %v1958 = vand.u32 %v1637, 4294901760
    %v1959 = vsub.f32 %v1637, %v1958
    %v1960 = vand.u32 %v1959, 4294901760
    %1961 = vmatmul.mubr.f32.gmra.mxu0 %v1960
    %v1962 = vpop.f32.mrf.mxu0
    %v1963 = vadd.f32 %v1886, %v1962
    %v1964 = vpop.f32.mrf.mxu0
    %1965 = vdwg.mxu0
    %1966 = vmatprep.subr.mxu0 0.0
    %1967 = vmatpush1.msra.mxu0 0.0
    %1968 = vmatprep.subr.mxu0 0.0
    %1969 = vmatpush1.msra.mxu0 0.0
    %1970 = vmatprep.subr.mxu0 0.0
    %1971 = vmatpush1.msra.mxu0 0.0
    %1972 = vmatprep.subr.mxu0 0.0
    %1973 = vmatpush1.msra.mxu0 0.0
    %1974 = vmatprep.subr.mxu0 0.0
    %1975 = vmatpush1.msra.mxu0 0.0
    %1976 = vmatprep.subr.mxu0 0.0
    %1977 = vmatpush1.msra.mxu0 0.0
    %1978 = vmatprep.subr.mxu0 0.0
    %1979 = vmatpush1.msra.mxu0 0.0
    %1980 = vmatprep.subr.mxu0 0.0
    %1981 = vmatpush1.msra.mxu0 0.0
    %1982 = vmatprep.subr.mxu0 0.0
    %1983 = vmatpush1.msra.mxu0 0.0
    %1984 = vmatprep.subr.mxu0 0.0
    %1985 = vmatpush1.msra.mxu0 0.0
    %1986 = vmatprep.subr.mxu0 0.0
    %1987 = vmatpush1.msra.mxu0 0.0
    %1988 = vmatprep.subr.mxu0 0.0
    %1989 = vmatpush1.msra.mxu0 0.0
    %1990 = vmatprep.subr.mxu0 0.0
    %v1991 = vand.u32 %v536, 4294901760
    %v1992 = vsub.f32 %v536, %v1991
    %v1993 = vand.u32 %v1992, 4294901760
    %1994 = vmatpush1.msra.mxu0 %v1993
    %1995 = vmatprep.subr.mxu0 0.0
    %v1996 = vand.u32 %v535, 4294901760
    %v1997 = vsub.f32 %v535, %v1996
    %v1998 = vand.u32 %v1997, 4294901760
    %1999 = vmatpush1.msra.mxu0 %v1998
    %2000 = vmatprep.subr.mxu0 0.0
    %v2001 = vand.u32 %v534, 4294901760
    %v2002 = vsub.f32 %v534, %v2001
    %v2003 = vand.u32 %v2002, 4294901760
    %2004 = vmatpush1.msra.mxu0 %v2003
    %2005 = vmatprep.subr.mxu0 0.0
    %v2006 = vand.u32 %v533, 4294901760
    %v2007 = vsub.f32 %v533, %v2006
    %v2008 = vand.u32 %v2007, 4294901760
    %2009 = vmatpush1.msra.mxu0 %v2008
    %2010 = vmatprep.subr.mxu0 0.0
    %2011 = vmatpush2.msra.mxu0 0.0
    %2012 = vmatprep.subr.mxu0 0.0
    %2013 = vmatpush2.msra.mxu0 0.0
    %2014 = vmatprep.subr.mxu0 0.0
    %2015 = vmatpush2.msra.mxu0 0.0
    %2016 = vmatprep.subr.mxu0 0.0
    %2017 = vmatpush2.msra.mxu0 0.0
    %2018 = vmatprep.subr.mxu0 0.0
    %2019 = vmatpush2.msra.mxu0 0.0
    %2020 = vmatprep.subr.mxu0 0.0
    %2021 = vmatpush2.msra.mxu0 0.0
    %2022 = vmatprep.subr.mxu0 0.0
    %2023 = vmatpush2.msra.mxu0 0.0
    %2024 = vmatprep.subr.mxu0 0.0
    %2025 = vmatpush2.msra.mxu0 0.0
    %2026 = vmatprep.subr.mxu0 0.0
    %2027 = vmatpush2.msra.mxu0 0.0
    %2028 = vmatprep.subr.mxu0 0.0
    %2029 = vmatpush2.msra.mxu0 0.0
    %2030 = vmatprep.subr.mxu0 0.0
    %2031 = vmatpush2.msra.mxu0 0.0
    %2032 = vmatprep.subr.mxu0 0.0
    %2033 = vmatpush2.msra.mxu0 0.0
    %2034 = vmatprep.subr.mxu0 0.0
    %2035 = vmatpush2.msra.mxu0 0.0
    %2036 = vmatprep.subr.mxu0 0.0
    %2037 = vmatpush2.msra.mxu0 0.0
    %2038 = vmatprep.subr.mxu0 0.0
    %2039 = vmatpush2.msra.mxu0 0.0
    %2040 = vmatprep.subr.mxu0 0.0
    %2041 = vmatpush2.msra.mxu0 0.0
    %2042 = vmatprep.mubr.f32.mxu0 0.0
    %v2043 = vand.u32 %v1637, 4294901760
    %2044 = vmatmul.mubr.f32.gmra.mxu0 %v2043
    %v2045 = vpop.f32.mrf.mxu0
    %v2046 = vadd.f32 %v1963, %v2045
    %v2047 = vpop.f32.mrf.mxu0
    %2048 = vdwg.mxu0
    %2049 = vmatprep.subr.mxu0 0.0
    %2050 = vmatpush1.msra.mxu0 0.0
    %2051 = vmatprep.subr.mxu0 0.0
    %2052 = vmatpush1.msra.mxu0 0.0
    %2053 = vmatprep.subr.mxu0 0.0
    %2054 = vmatpush1.msra.mxu0 0.0
    %2055 = vmatprep.subr.mxu0 0.0
    %2056 = vmatpush1.msra.mxu0 0.0
    %2057 = vmatprep.subr.mxu0 0.0
    %2058 = vmatpush1.msra.mxu0 0.0
    %2059 = vmatprep.subr.mxu0 0.0
    %2060 = vmatpush1.msra.mxu0 0.0
    %2061 = vmatprep.subr.mxu0 0.0
    %2062 = vmatpush1.msra.mxu0 0.0
    %2063 = vmatprep.subr.mxu0 0.0
    %2064 = vmatpush1.msra.mxu0 0.0
    %2065 = vmatprep.subr.mxu0 0.0
    %2066 = vmatpush1.msra.mxu0 0.0
    %2067 = vmatprep.subr.mxu0 0.0
    %2068 = vmatpush1.msra.mxu0 0.0
    %2069 = vmatprep.subr.mxu0 0.0
    %2070 = vmatpush1.msra.mxu0 0.0
    %2071 = vmatprep.subr.mxu0 0.0
    %2072 = vmatpush1.msra.mxu0 0.0
    %2073 = vmatprep.subr.mxu0 0.0
    %v2074 = vand.u32 %v536, 4294901760
    %2075 = vmatpush1.msra.mxu0 %v2074
    %2076 = vmatprep.subr.mxu0 0.0
    %v2077 = vand.u32 %v535, 4294901760
    %2078 = vmatpush1.msra.mxu0 %v2077
    %2079 = vmatprep.subr.mxu0 0.0
    %v2080 = vand.u32 %v534, 4294901760
    %2081 = vmatpush1.msra.mxu0 %v2080
    %2082 = vmatprep.subr.mxu0 0.0
    %v2083 = vand.u32 %v533, 4294901760
    %2084 = vmatpush1.msra.mxu0 %v2083
    %2085 = vmatprep.subr.mxu0 0.0
    %2086 = vmatpush2.msra.mxu0 0.0
    %2087 = vmatprep.subr.mxu0 0.0
    %2088 = vmatpush2.msra.mxu0 0.0
    %2089 = vmatprep.subr.mxu0 0.0
    %2090 = vmatpush2.msra.mxu0 0.0
    %2091 = vmatprep.subr.mxu0 0.0
    %2092 = vmatpush2.msra.mxu0 0.0
    %2093 = vmatprep.subr.mxu0 0.0
    %2094 = vmatpush2.msra.mxu0 0.0
    %2095 = vmatprep.subr.mxu0 0.0
    %2096 = vmatpush2.msra.mxu0 0.0
    %2097 = vmatprep.subr.mxu0 0.0
    %2098 = vmatpush2.msra.mxu0 0.0
    %2099 = vmatprep.subr.mxu0 0.0
    %2100 = vmatpush2.msra.mxu0 0.0
    %2101 = vmatprep.subr.mxu0 0.0
    %2102 = vmatpush2.msra.mxu0 0.0
    %2103 = vmatprep.subr.mxu0 0.0
    %2104 = vmatpush2.msra.mxu0 0.0
    %2105 = vmatprep.subr.mxu0 0.0
    %2106 = vmatpush2.msra.mxu0 0.0
    %2107 = vmatprep.subr.mxu0 0.0
    %2108 = vmatpush2.msra.mxu0 0.0
    %2109 = vmatprep.subr.mxu0 0.0
    %2110 = vmatpush2.msra.mxu0 0.0
    %2111 = vmatprep.subr.mxu0 0.0
    %2112 = vmatpush2.msra.mxu0 0.0
    %2113 = vmatprep.subr.mxu0 0.0
    %2114 = vmatpush2.msra.mxu0 0.0
    %2115 = vmatprep.subr.mxu0 0.0
    %2116 = vmatpush2.msra.mxu0 0.0
    %2117 = vmatprep.mubr.f32.mxu0 0.0
    %v2118 = vand.u32 %v1637, 4294901760
    %2119 = vmatmul.mubr.f32.gmra.mxu0 %v2118
    %v2120 = vpop.f32.mrf.mxu0
    %v2121 = vadd.f32 %v2046, %v2120
    %v2122 = vpop.f32.mrf.mxu0
    %2123 = vdwg.mxu0
    %v2124 = vmul.f32 %v1623, %v1623
    %v2125 = vsel %vm1074, %v2124, 0.0
    %2126 = vadd.xlane.f32.xlu0 %v2125
    %v2127 = vpop.xlane.xlu0 %2126
    %v2128 = vsub.f32 0.0, %v1590
    %v2129 = vstv %s1627
    %v2130 = vadd.f32 %v2129, %v1635
    %v2131 = vstv %s1633
    %v2132 = vrcp.pop %v2130
    %v2133 = vmul.f32 %v2131, %v2132
    %v2134 = vmul.f32 %v2133, %v2133
    %v2135 = vadd.f32 %v2127, %v2134
    %v2136 = vmul.f32 %v1590, %v2135
    %v2137 = vadd.f32 %v2128, %v2136
    %v2138 = vmul.f32 %v2137, 0.1
    %v2139 = vadd.f32 %v1590, %v2138
    %v2140 = vmax.f32 %v2139, 0.0
    %v2141 = vsub.f32 %v2140, %v1635
    %v2142 = vsub.f32 0.0, %v1600
    %v2143 = vmul.f32 %v1634, %v1635
    %v2144 = vadd.f32 %v2142, %v2143
    %v2145 = vadd.f32 %v2144, 1.0
    %v2146 = vmul.f32 %v2141, 0.1
    %v2147 = vadd.f32 %v2145, %v2146
    %v2148 = vmul.f32 %v2147, 0.1
    %v2149 = vadd.f32 %v1600, %v2148
    %v2150 = vsub.f32 0.0, %v1622
    %v2151 = vstv %s1632
    %v2152 = vmul.f32 %v2151, %v530
    %v2154 = vrot.slane %v2152, 2
    %v2156 = vadd.f32 %v2150, %v2154
    %v2157 = vrcp.pop %v1634
    %v2158 = vmul.f32 1.0, %v2157
    %v2159 = vstv %s1631
    %v2160 = vmul.f32 %v2158, %v2159
    %v2161 = vmul.f32 %v2160, %v2121
    %v2162 = vadd.f32 %v2156, %v2161
    %v2163 = vmul.f32 %v2162, 0.2
    %v2164 = vstv %s1625
    %v2165 = vmul.f32 %v2164, %v2121
    %2167 = vrot.lane.b32.xlu0 %v2165, 96
    %v2168 = vpop.permute.xlu0 %2167
    %v2170 = vadd.f32 %v2163, %v2168
    %v2171 = vadd.f32 %v1622, %v2170
    %v2172 = vmax.f32 %v2171, 0.0
    %2173 = vst.msk [vmem:[#allocation2 + $0x4] sm:$0x1] %vm1074, %v2172
    %s2174 = sld [smem:[#allocation3 + $0x3]]
    %s2175 = sld [smem:[#allocation8 + $0x3]]
    %s2176 = smax.f32 %s2175, 0.0
    %s2177 = sadd.f32 %s2176, 1.0
    %v2178 = vstv %s2177
    %v2179 = vrcp.pop %v2178
    %s2180 = vtos %v2179
    %s2181 = smul.f32 %s2176, %s2180
    %s2182 = smul.f32 %s2176, 0.5
    %v2183 = vmax.f32 %v2149, 0.0
    %v2184 = vmin.f32 %v2139, 1.0
    %v2186 = vsel %vm537, %v2172, 0
    %2188 = vmatprep.subr.mxu0 0.0
    %2189 = vmatpush1.msra.mxu0 0.0
    %2190 = vmatprep.subr.mxu0 0.0
    %2191 = vmatpush1.msra.mxu0 0.0
    %2192 = vmatprep.subr.mxu0 0.0
    %2193 = vmatpush1.msra.mxu0 0.0
    %2194 = vmatprep.subr.mxu0 0.0
    %2195 = vmatpush1.msra.mxu0 0.0
    %2196 = vmatprep.subr.mxu0 0.0
    %2197 = vmatpush1.msra.mxu0 0.0
    %2198 = vmatprep.subr.mxu0 0.0
    %2199 = vmatpush1.msra.mxu0 0.0
    %2200 = vmatprep.subr.mxu0 0.0
    %2201 = vmatpush1.msra.mxu0 0.0
    %2202 = vmatprep.subr.mxu0 0.0
    %2203 = vmatpush1.msra.mxu0 0.0
    %2204 = vmatprep.subr.mxu0 0.0
    %2205 = vmatpush1.msra.mxu0 0.0
    %2206 = vmatprep.subr.mxu0 0.0
    %2207 = vmatpush1.msra.mxu0 0.0
    %2208 = vmatprep.subr.mxu0 0.0
    %2209 = vmatpush1.msra.mxu0 0.0
    %2210 = vmatprep.subr.mxu0 0.0
    %2211 = vmatpush1.msra.mxu0 0.0
    %2212 = vmatprep.subr.mxu0 0.0
    %v2213 = vand.u32 %v536, 4294901760
    %2214 = vmatpush1.msra.mxu0 %v2213
    %2215 = vmatprep.subr.mxu0 0.0
    %v2216 = vand.u32 %v535, 4294901760
    %2217 = vmatpush1.msra.mxu0 %v2216
    %2218 = vmatprep.subr.mxu0 0.0
    %v2219 = vand.u32 %v534, 4294901760
    %2220 = vmatpush1.msra.mxu0 %v2219
    %2221 = vmatprep.subr.mxu0 0.0
    %v2222 = vand.u32 %v533, 4294901760
    %2223 = vmatpush1.msra.mxu0 %v2222
    %2224 = vmatprep.subr.mxu0 0.0
    %2225 = vmatpush2.msra.mxu0 0.0
    %2226 = vmatprep.subr.mxu0 0.0
    %2227 = vmatpush2.msra.mxu0 0.0
    %2228 = vmatprep.subr.mxu0 0.0
    %2229 = vmatpush2.msra.mxu0 0.0
    %2230 = vmatprep.subr.mxu0 0.0
    %2231 = vmatpush2.msra.mxu0 0.0
    %2232 = vmatprep.subr.mxu0 0.0
    %2233 = vmatpush2.msra.mxu0 0.0
    %2234 = vmatprep.subr.mxu0 0.0
    %2235 = vmatpush2.msra.mxu0 0.0
    %2236 = vmatprep.subr.mxu0 0.0
    %2237 = vmatpush2.msra.mxu0 0.0
    %2238 = vmatprep.subr.mxu0 0.0
    %2239 = vmatpush2.msra.mxu0 0.0
    %2240 = vmatprep.subr.mxu0 0.0
    %2241 = vmatpush2.msra.mxu0 0.0
    %2242 = vmatprep.subr.mxu0 0.0
    %2243 = vmatpush2.msra.mxu0 0.0
    %2244 = vmatprep.subr.mxu0 0.0
    %2245 = vmatpush2.msra.mxu0 0.0
    %2246 = vmatprep.subr.mxu0 0.0
    %2247 = vmatpush2.msra.mxu0 0.0
    %2248 = vmatprep.subr.mxu0 0.0
    %2249 = vmatpush2.msra.mxu0 0.0
    %2250 = vmatprep.subr.mxu0 0.0
    %2251 = vmatpush2.msra.mxu0 0.0
    %2252 = vmatprep.subr.mxu0 0.0
    %2253 = vmatpush2.msra.mxu0 0.0
    %2254 = vmatprep.subr.mxu0 0.0
    %2255 = vmatpush2.msra.mxu0 0.0
    %2256 = vmatprep.mubr.f32.mxu0 0.0
    %v2257 = vand.u32 %v2186, 4294901760
    %v2258 = vsub.f32 %v2186, %v2257
    %v2259 = vand.u32 %v2258, 4294901760
    %v2260 = vsub.f32 %v2258, %v2259
    %v2261 = vand.u32 %v2260, 4294901760
    %2262 = vmatmul.mubr.f32.gmra.mxu0 %v2261
    %v2263 = vpop.f32.mrf.mxu0
    %v2264 = vadd.f32 0.0, %v2263
    %v2265 = vpop.f32.mrf.mxu0
    %2266 = vdwg.mxu0
    %2267 = vmatprep.subr.mxu0 0.0
    %2268 = vmatpush1.msra.mxu0 0.0
    %2269 = vmatprep.subr.mxu0 0.0
    %2270 = vmatpush1.msra.mxu0 0.0
    %2271 = vmatprep.subr.mxu0 0.0
    %2272 = vmatpush1.msra.mxu0 0.0
    %2273 = vmatprep.subr.mxu0 0.0
    %2274 = vmatpush1.msra.mxu0 0.0
    %2275 = vmatprep.subr.mxu0 0.0
    %2276 = vmatpush1.msra.mxu0 0.0
    %2277 = vmatprep.subr.mxu0 0.0
    %2278 = vmatpush1.msra.mxu0 0.0
    %2279 = vmatprep.subr.mxu0 0.0
    %2280 = vmatpush1.msra.mxu0 0.0
    %2281 = vmatprep.subr.mxu0 0.0
    %2282 = vmatpush1.msra.mxu0 0.0
    %2283 = vmatprep.subr.mxu0 0.0
    %2284 = vmatpush1.msra.mxu0 0.0
    %2285 = vmatprep.subr.mxu0 0.0
    %2286 = vmatpush1.msra.mxu0 0.0
    %2287 = vmatprep.subr.mxu0 0.0
    %2288 = vmatpush1.msra.mxu0 0.0
    %2289 = vmatprep.subr.mxu0 0.0
    %2290 = vmatpush1.msra.mxu0 0.0
    %2291 = vmatprep.subr.mxu0 0.0
    %v2292 = vand.u32 %v536, 4294901760
    %v2293 = vsub.f32 %v536, %v2292
    %v2294 = vand.u32 %v2293, 4294901760
    %v2295 = vsub.f32 %v2293, %v2294
    %v2296 = vand.u32 %v2295, 4294901760
    %2297 = vmatpush1.msra.mxu0 %v2296
    %2298 = vmatprep.subr.mxu0 0.0
    %v2299 = vand.u32 %v535, 4294901760
    %v2300 = vsub.f32 %v535, %v2299
    %v2301 = vand.u32 %v2300, 4294901760
    %v2302 = vsub.f32 %v2300, %v2301
    %v2303 = vand.u32 %v2302, 4294901760
    %2304 = vmatpush1.msra.mxu0 %v2303
    %2305 = vmatprep.subr.mxu0 0.0
    %v2306 = vand.u32 %v534, 4294901760
    %v2307 = vsub.f32 %v534, %v2306
    %v2308 = vand.u32 %v2307, 4294901760
    %v2309 = vsub.f32 %v2307, %v2308
    %v2310 = vand.u32 %v2309, 4294901760
    %2311 = vmatpush1.msra.mxu0 %v2310
    %2312 = vmatprep.subr.mxu0 0.0
    %v2313 = vand.u32 %v533, 4294901760
    %v2314 = vsub.f32 %v533, %v2313
    %v2315 = vand.u32 %v2314, 4294901760
    %v2316 = vsub.f32 %v2314, %v2315
    %v2317 = vand.u32 %v2316, 4294901760
    %2318 = vmatpush1.msra.mxu0 %v2317
    %2319 = vmatprep.subr.mxu0 0.0
    %2320 = vmatpush2.msra.mxu0 0.0
    %2321 = vmatprep.subr.mxu0 0.0
    %2322 = vmatpush2.msra.mxu0 0.0
    %2323 = vmatprep.subr.mxu0 0.0
    %2324 = vmatpush2.msra.mxu0 0.0
    %2325 = vmatprep.subr.mxu0 0.0
    %2326 = vmatpush2.msra.mxu0 0.0
    %2327 = vmatprep.subr.mxu0 0.0
    %2328 = vmatpush2.msra.mxu0 0.0
    %2329 = vmatprep.subr.mxu0 0.0
    %2330 = vmatpush2.msra.mxu0 0.0
    %2331 = vmatprep.subr.mxu0 0.0
    %2332 = vmatpush2.msra.mxu0 0.0
    %2333 = vmatprep.subr.mxu0 0.0
    %2334 = vmatpush2.msra.mxu0 0.0
    %2335 = vmatprep.subr.mxu0 0.0
    %2336 = vmatpush2.msra.mxu0 0.0
    %2337 = vmatprep.subr.mxu0 0.0
    %2338 = vmatpush2.msra.mxu0 0.0
    %2339 = vmatprep.subr.mxu0 0.0
    %2340 = vmatpush2.msra.mxu0 0.0
    %2341 = vmatprep.subr.mxu0 0.0
    %2342 = vmatpush2.msra.mxu0 0.0
    %2343 = vmatprep.subr.mxu0 0.0
    %2344 = vmatpush2.msra.mxu0 0.0
    %2345 = vmatprep.subr.mxu0 0.0
    %2346 = vmatpush2.msra.mxu0 0.0
    %2347 = vmatprep.subr.mxu0 0.0
    %2348 = vmatpush2.msra.mxu0 0.0
    %2349 = vmatprep.subr.mxu0 0.0
    %2350 = vmatpush2.msra.mxu0 0.0
    %2351 = vmatprep.mubr.f32.mxu0 0.0
    %v2352 = vand.u32 %v2186, 4294901760
    %2353 = vmatmul.mubr.f32.gmra.mxu0 %v2352
    %v2354 = vpop.f32.mrf.mxu0
    %v2355 = vadd.f32 %v2264, %v2354
    %v2356 = vpop.f32.mrf.mxu0
    %2357 = vdwg.mxu0
    %2358 = vmatprep.subr.mxu0 0.0
    %2359 = vmatpush1.msra.mxu0 0.0
    %2360 = vmatprep.subr.mxu0 0.0
    %2361 = vmatpush1.msra.mxu0 0.0
    %2362 = vmatprep.subr.mxu0 0.0
    %2363 = vmatpush1.msra.mxu0 0.0
    %2364 = vmatprep.subr.mxu0 0.0
    %2365 = vmatpush1.msra.mxu0 0.0
    %2366 = vmatprep.subr.mxu0 0.0
    %2367 = vmatpush1.msra.mxu0 0.0
    %2368 = vmatprep.subr.mxu0 0.0
    %2369 = vmatpush1.msra.mxu0 0.0
    %2370 = vmatprep.subr.mxu0 0.0
    %2371 = vmatpush1.msra.mxu0 0.0
    %2372 = vmatprep.subr.mxu0 0.0
    %2373 = vmatpush1.msra.mxu0 0.0
    %2374 = vmatprep.subr.mxu0 0.0
    %2375 = vmatpush1.msra.mxu0 0.0
    %2376 = vmatprep.subr.mxu0 0.0
    %2377 = vmatpush1.msra.mxu0 0.0
    %2378 = vmatprep.subr.mxu0 0.0
    %2379 = vmatpush1.msra.mxu0 0.0
    %2380 = vmatprep.subr.mxu0 0.0
    %2381 = vmatpush1.msra.mxu0 0.0
    %2382 = vmatprep.subr.mxu0 0.0
    %v2383 = vand.u32 %v536, 4294901760
    %v2384 = vsub.f32 %v536, %v2383
    %2385 = vmatpush1.msra.mxu0 %v2384
    %2386 = vmatprep.subr.mxu0 0.0
    %v2387 = vand.u32 %v535, 4294901760
    %v2388 = vsub.f32 %v535, %v2387
    %2389 = vmatpush1.msra.mxu0 %v2388
    %2390 = vmatprep.subr.mxu0 0.0
    %v2391 = vand.u32 %v534, 4294901760
    %v2392 = vsub.f32 %v534, %v2391
    %2393 = vmatpush1.msra.mxu0 %v2392
    %2394 = vmatprep.subr.mxu0 0.0
    %v2395 = vand.u32 %v533, 4294901760
    %v2396 = vsub.f32 %v533, %v2395
    %2397 = vmatpush1.msra.mxu0 %v2396
    %2398 = vmatprep.subr.mxu0 0.0
    %2399 = vmatpush2.msra.mxu0 0.0
    %2400 = vmatprep.subr.mxu0 0.0
    %2401 = vmatpush2.msra.mxu0 0.0
    %2402 = vmatprep.subr.mxu0 0.0
    %2403 = vmatpush2.msra.mxu0 0.0
    %2404 = vmatprep.subr.mxu0 0.0
    %2405 = vmatpush2.msra.mxu0 0.0
    %2406 = vmatprep.subr.mxu0 0.0
    %2407 = vmatpush2.msra.mxu0 0.0
    %2408 = vmatprep.subr.mxu0 0.0
    %2409 = vmatpush2.msra.mxu0 0.0
    %2410 = vmatprep.subr.mxu0 0.0
    %2411 = vmatpush2.msra.mxu0 0.0
    %2412 = vmatprep.subr.mxu0 0.0
    %2413 = vmatpush2.msra.mxu0 0.0
    %2414 = vmatprep.subr.mxu0 0.0
    %2415 = vmatpush2.msra.mxu0 0.0
    %2416 = vmatprep.subr.mxu0 0.0
    %2417 = vmatpush2.msra.mxu0 0.0
    %2418 = vmatprep.subr.mxu0 0.0
    %2419 = vmatpush2.msra.mxu0 0.0
    %2420 = vmatprep.subr.mxu0 0.0
    %2421 = vmatpush2.msra.mxu0 0.0
    %2422 = vmatprep.subr.mxu0 0.0
    %2423 = vmatpush2.msra.mxu0 0.0
    %2424 = vmatprep.subr.mxu0 0.0
    %2425 = vmatpush2.msra.mxu0 0.0
    %2426 = vmatprep.subr.mxu0 0.0
    %2427 = vmatpush2.msra.mxu0 0.0
    %2428 = vmatprep.subr.mxu0 0.0
    %2429 = vmatpush2.msra.mxu0 0.0
    %2430 = vmatprep.mubr.f32.mxu0 0.0
    %v2431 = vand.u32 %v2186, 4294901760
    %v2432 = vsub.f32 %v2186, %v2431
    %2433 = vmatmul.mubr.f32.gmra.mxu0 %v2432
    %v2434 = vpop.f32.mrf.mxu0
    %v2435 = vadd.f32 %v2355, %v2434
    %v2436 = vpop.f32.mrf.mxu0
    %2437 = vdwg.mxu0
    %2438 = vmatprep.subr.mxu0 0.0
    %2439 = vmatpush1.msra.mxu0 0.0
    %2440 = vmatprep.subr.mxu0 0.0
    %2441 = vmatpush1.msra.mxu0 0.0
    %2442 = vmatprep.subr.mxu0 0.0
    %2443 = vmatpush1.msra.mxu0 0.0
    %2444 = vmatprep.subr.mxu0 0.0
    %2445 = vmatpush1.msra.mxu0 0.0
    %2446 = vmatprep.subr.mxu0 0.0
    %2447 = vmatpush1.msra.mxu0 0.0
    %2448 = vmatprep.subr.mxu0 0.0
    %2449 = vmatpush1.msra.mxu0 0.0
    %2450 = vmatprep.subr.mxu0 0.0
    %2451 = vmatpush1.msra.mxu0 0.0
    %2452 = vmatprep.subr.mxu0 0.0
    %2453 = vmatpush1.msra.mxu0 0.0
    %2454 = vmatprep.subr.mxu0 0.0
    %2455 = vmatpush1.msra.mxu0 0.0
    %2456 = vmatprep.subr.mxu0 0.0
    %2457 = vmatpush1.msra.mxu0 0.0
    %2458 = vmatprep.subr.mxu0 0.0
    %2459 = vmatpush1.msra.mxu0 0.0
    %2460 = vmatprep.subr.mxu0 0.0
    %2461 = vmatpush1.msra.mxu0 0.0
    %2462 = vmatprep.subr.mxu0 0.0
    %v2463 = vand.u32 %v536, 4294901760
    %2464 = vmatpush1.msra.mxu0 %v2463
    %2465 = vmatprep.subr.mxu0 0.0
    %v2466 = vand.u32 %v535, 4294901760
    %2467 = vmatpush1.msra.mxu0 %v2466
    %2468 = vmatprep.subr.mxu0 0.0
    %v2469 = vand.u32 %v534, 4294901760
    %2470 = vmatpush1.msra.mxu0 %v2469
    %2471 = vmatprep.subr.mxu0 0.0
    %v2472 = vand.u32 %v533, 4294901760
    %2473 = vmatpush1.msra.mxu0 %v2472
    %2474 = vmatprep.subr.mxu0 0.0
    %2475 = vmatpush2.msra.mxu0 0.0
    %2476 = vmatprep.subr.mxu0 0.0
    %2477 = vmatpush2.msra.mxu0 0.0
    %2478 = vmatprep.subr.mxu0 0.0
    %2479 = vmatpush2.msra.mxu0 0.0
    %2480 = vmatprep.subr.mxu0 0.0
    %2481 = vmatpush2.msra.mxu0 0.0
    %2482 = vmatprep.subr.mxu0 0.0
    %2483 = vmatpush2.msra.mxu0 0.0
    %2484 = vmatprep.subr.mxu0 0.0
    %2485 = vmatpush2.msra.mxu0 0.0
    %2486 = vmatprep.subr.mxu0 0.0
    %2487 = vmatpush2.msra.mxu0 0.0
    %2488 = vmatprep.subr.mxu0 0.0
    %2489 = vmatpush2.msra.mxu0 0.0
    %2490 = vmatprep.subr.mxu0 0.0
    %2491 = vmatpush2.msra.mxu0 0.0
    %2492 = vmatprep.subr.mxu0 0.0
    %2493 = vmatpush2.msra.mxu0 0.0
    %2494 = vmatprep.subr.mxu0 0.0
    %2495 = vmatpush2.msra.mxu0 0.0
    %2496 = vmatprep.subr.mxu0 0.0
    %2497 = vmatpush2.msra.mxu0 0.0
    %2498 = vmatprep.subr.mxu0 0.0
    %2499 = vmatpush2.msra.mxu0 0.0
    %2500 = vmatprep.subr.mxu0 0.0
    %2501 = vmatpush2.msra.mxu0 0.0
    %2502 = vmatprep.subr.mxu0 0.0
    %2503 = vmatpush2.msra.mxu0 0.0
    %2504 = vmatprep.subr.mxu0 0.0
    %2505 = vmatpush2.msra.mxu0 0.0
    %2506 = vmatprep.mubr.f32.mxu0 0.0
    %v2507 = vand.u32 %v2186, 4294901760
    %v2508 = vsub.f32 %v2186, %v2507
    %v2509 = vand.u32 %v2508, 4294901760
    %2510 = vmatmul.mubr.f32.gmra.mxu0 %v2509
    %v2511 = vpop.f32.mrf.mxu0
    %v2512 = vadd.f32 %v2435, %v2511
    %v2513 = vpop.f32.mrf.mxu0
    %2514 = vdwg.mxu0
    %2515 = vmatprep.subr.mxu0 0.0
    %2516 = vmatpush1.msra.mxu0 0.0
    %2517 = vmatprep.subr.mxu0 0.0
    %2518 = vmatpush1.msra.mxu0 0.0
    %2519 = vmatprep.subr.mxu0 0.0
    %2520 = vmatpush1.msra.mxu0 0.0
    %2521 = vmatprep.subr.mxu0 0.0
    %2522 = vmatpush1.msra.mxu0 0.0
    %2523 = vmatprep.subr.mxu0 0.0
    %2524 = vmatpush1.msra.mxu0 0.0
    %2525 = vmatprep.subr.mxu0 0.0
    %2526 = vmatpush1.msra.mxu0 0.0
    %2527 = vmatprep.subr.mxu0 0.0
    %2528 = vmatpush1.msra.mxu0 0.0
    %2529 = vmatprep.subr.mxu0 0.0
    %2530 = vmatpush1.msra.mxu0 0.0
    %2531 = vmatprep.subr.mxu0 0.0
    %2532 = vmatpush1.msra.mxu0 0.0
    %2533 = vmatprep.subr.mxu0 0.0
    %2534 = vmatpush1.msra.mxu0 0.0
    %2535 = vmatprep.subr.mxu0 0.0
    %2536 = vmatpush1.msra.mxu0 0.0
    %2537 = vmatprep.subr.mxu0 0.0
    %2538 = vmatpush1.msra.mxu0 0.0
    %2539 = vmatprep.subr.mxu0 0.0
    %v2540 = vand.u32 %v536, 4294901760
    %v2541 = vsub.f32 %v536, %v2540
    %v2542 = vand.u32 %v2541, 4294901760
    %2543 = vmatpush1.msra.mxu0 %v2542
    %2544 = vmatprep.subr.mxu0 0.0
    %v2545 = vand.u32 %v535, 4294901760
    %v2546 = vsub.f32 %v535, %v2545
    %v2547 = vand.u32 %v2546, 4294901760
    %2548 = vmatpush1.msra.mxu0 %v2547
    %2549 = vmatprep.subr.mxu0 0.0
    %v2550 = vand.u32 %v534, 4294901760
    %v2551 = vsub.f32 %v534, %v2550
    %v2552 = vand.u32 %v2551, 4294901760
    %2553 = vmatpush1.msra.mxu0 %v2552
    %2554 = vmatprep.subr.mxu0 0.0
    %v2555 = vand.u32 %v533, 4294901760
    %v2556 = vsub.f32 %v533, %v2555
    %v2557 = vand.u32 %v2556, 4294901760
    %2558 = vmatpush1.msra.mxu0 %v2557
    %2559 = vmatprep.subr.mxu0 0.0
    %2560 = vmatpush2.msra.mxu0 0.0
    %2561 = vmatprep.subr.mxu0 0.0
    %2562 = vmatpush2.msra.mxu0 0.0
    %2563 = vmatprep.subr.mxu0 0.0
    %2564 = vmatpush2.msra.mxu0 0.0
    %2565 = vmatprep.subr.mxu0 0.0
    %2566 = vmatpush2.msra.mxu0 0.0
    %2567 = vmatprep.subr.mxu0 0.0
    %2568 = vmatpush2.msra.mxu0 0.0
    %2569 = vmatprep.subr.mxu0 0.0
    %2570 = vmatpush2.msra.mxu0 0.0
    %2571 = vmatprep.subr.mxu0 0.0
    %2572 = vmatpush2.msra.mxu0 0.0
    %2573 = vmatprep.subr.mxu0 0.0
    %2574 = vmatpush2.msra.mxu0 0.0
    %2575 = vmatprep.subr.mxu0 0.0
    %2576 = vmatpush2.msra.mxu0 0.0
    %2577 = vmatprep.subr.mxu0 0.0
    %2578 = vmatpush2.msra.mxu0 0.0
    %2579 = vmatprep.subr.mxu0 0.0
    %2580 = vmatpush2.msra.mxu0 0.0
    %2581 = vmatprep.subr.mxu0 0.0
    %2582 = vmatpush2.msra.mxu0 0.0
    %2583 = vmatprep.subr.mxu0 0.0
    %2584 = vmatpush2.msra.mxu0 0.0
    %2585 = vmatprep.subr.mxu0 0.0
    %2586 = vmatpush2.msra.mxu0 0.0
    %2587 = vmatprep.subr.mxu0 0.0
    %2588 = vmatpush2.msra.mxu0 0.0
    %2589 = vmatprep.subr.mxu0 0.0
    %2590 = vmatpush2.msra.mxu0 0.0
    %2591 = vmatprep.mubr.f32.mxu0 0.0
    %v2592 = vand.u32 %v2186, 4294901760
    %2593 = vmatmul.mubr.f32.gmra.mxu0 %v2592
    %v2594 = vpop.f32.mrf.mxu0
    %v2595 = vadd.f32 %v2512, %v2594
    %v2596 = vpop.f32.mrf.mxu0
    %2597 = vdwg.mxu0
    %2598 = vmatprep.subr.mxu0 0.0
    %2599 = vmatpush1.msra.mxu0 0.0
    %2600 = vmatprep.subr.mxu0 0.0
    %2601 = vmatpush1.msra.mxu0 0.0
    %2602 = vmatprep.subr.mxu0 0.0
    %2603 = vmatpush1.msra.mxu0 0.0
    %2604 = vmatprep.subr.mxu0 0.0
    %2605 = vmatpush1.msra.mxu0 0.0
    %2606 = vmatprep.subr.mxu0 0.0
    %2607 = vmatpush1.msra.mxu0 0.0
    %2608 = vmatprep.subr.mxu0 0.0
    %2609 = vmatpush1.msra.mxu0 0.0
    %2610 = vmatprep.subr.mxu0 0.0
    %2611 = vmatpush1.msra.mxu0 0.0
    %2612 = vmatprep.subr.mxu0 0.0
    %2613 = vmatpush1.msra.mxu0 0.0
    %2614 = vmatprep.subr.mxu0 0.0
    %2615 = vmatpush1.msra.mxu0 0.0
    %2616 = vmatprep.subr.mxu0 0.0
    %2617 = vmatpush1.msra.mxu0 0.0
    %2618 = vmatprep.subr.mxu0 0.0
    %2619 = vmatpush1.msra.mxu0 0.0
    %2620 = vmatprep.subr.mxu0 0.0
    %2621 = vmatpush1.msra.mxu0 0.0
    %2622 = vmatprep.subr.mxu0 0.0
    %v2623 = vand.u32 %v536, 4294901760
    %2624 = vmatpush1.msra.mxu0 %v2623
    %2625 = vmatprep.subr.mxu0 0.0
    %v2626 = vand.u32 %v535, 4294901760
    %2627 = vmatpush1.msra.mxu0 %v2626
    %2628 = vmatprep.subr.mxu0 0.0
    %v2629 = vand.u32 %v534, 4294901760
    %2630 = vmatpush1.msra.mxu0 %v2629
    %2631 = vmatprep.subr.mxu0 0.0
    %v2632 = vand.u32 %v533, 4294901760
    %2633 = vmatpush1.msra.mxu0 %v2632
    %2634 = vmatprep.subr.mxu0 0.0
    %2635 = vmatpush2.msra.mxu0 0.0
    %2636 = vmatprep.subr.mxu0 0.0
    %2637 = vmatpush2.msra.mxu0 0.0
    %2638 = vmatprep.subr.mxu0 0.0
    %2639 = vmatpush2.msra.mxu0 0.0
    %2640 = vmatprep.subr.mxu0 0.0
    %2641 = vmatpush2.msra.mxu0 0.0
    %2642 = vmatprep.subr.mxu0 0.0
    %2643 = vmatpush2.msra.mxu0 0.0
    %2644 = vmatprep.subr.mxu0 0.0
    %2645 = vmatpush2.msra.mxu0 0.0
    %2646 = vmatprep.subr.mxu0 0.0
    %2647 = vmatpush2.msra.mxu0 0.0
    %2648 = vmatprep.subr.mxu0 0.0
    %2649 = vmatpush2.msra.mxu0 0.0
    %2650 = vmatprep.subr.mxu0 0.0
    %2651 = vmatpush2.msra.mxu0 0.0
    %2652 = vmatprep.subr.mxu0 0.0
    %2653 = vmatpush2.msra.mxu0 0.0
    %2654 = vmatprep.subr.mxu0 0.0
    %2655 = vmatpush2.msra.mxu0 0.0
    %2656 = vmatprep.subr.mxu0 0.0
    %2657 = vmatpush2.msra.mxu0 0.0
    %2658 = vmatprep.subr.mxu0 0.0
    %2659 = vmatpush2.msra.mxu0 0.0
    %2660 = vmatprep.subr.mxu0 0.0
    %2661 = vmatpush2.msra.mxu0 0.0
    %2662 = vmatprep.subr.mxu0 0.0
    %2663 = vmatpush2.msra.mxu0 0.0
    %2664 = vmatprep.subr.mxu0 0.0
    %2665 = vmatpush2.msra.mxu0 0.0
    %2666 = vmatprep.mubr.f32.mxu0 0.0
    %v2667 = vand.u32 %v2186, 4294901760
    %2668 = vmatmul.mubr.f32.gmra.mxu0 %v2667
    %v2669 = vpop.f32.mrf.mxu0
    %v2670 = vadd.f32 %v2595, %v2669
    %v2671 = vpop.f32.mrf.mxu0
    %2672 = vdwg.mxu0
    %v2673 = vmul.f32 %v2172, %v2172
    %v2674 = vsel %vm1074, %v2673, 0.0
    %2675 = vadd.xlane.f32.xlu0 %v2674
    %v2676 = vpop.xlane.xlu0 %2675
    %v2677 = vsub.f32 0.0, %v2139
    %v2678 = vstv %s2176
    %v2679 = vadd.f32 %v2678, %v2184
    %v2680 = vstv %s2182
    %v2681 = vrcp.pop %v2679
    %v2682 = vmul.f32 %v2680, %v2681
    %v2683 = vmul.f32 %v2682, %v2682
    %v2684 = vadd.f32 %v2676, %v2683
    %v2685 = vmul.f32 %v2139, %v2684
    %v2686 = vadd.f32 %v2677, %v2685
    %v2687 = vmul.f32 %v2686, 0.1
    %v2688 = vadd.f32 %v2139, %v2687
    %v2689 = vmax.f32 %v2688, 0.0
    %v2690 = vsub.f32 %v2689, %v2184
    %v2691 = vsub.f32 0.0, %v2149
    %v2692 = vmul.f32 %v2183, %v2184
    %v2693 = vadd.f32 %v2691, %v2692
    %v2694 = vadd.f32 %v2693, 1.0
    %v2695 = vmul.f32 %v2690, 0.1
    %v2696 = vadd.f32 %v2694, %v2695
    %v2697 = vmul.f32 %v2696, 0.1
    %v2698 = vadd.f32 %v2149, %v2697
    %v2699 = vsub.f32 0.0, %v2171
    %v2700 = vstv %s2181
    %v2701 = vmul.f32 %v2700, %v530
    %v2703 = vrot.slane %v2701, 3
    %v2705 = vadd.f32 %v2699, %v2703
    %v2706 = vrcp.pop %v2183
    %v2707 = vmul.f32 1.0, %v2706
    %v2708 = vstv %s2180
    %v2709 = vmul.f32 %v2707, %v2708
    %v2710 = vmul.f32 %v2709, %v2670
    %v2711 = vadd.f32 %v2705, %v2710
    %v2712 = vmul.f32 %v2711, 0.2
    %v2713 = vstv %s2174
    %v2714 = vmul.f32 %v2713, %v2670
    %2716 = vrot.lane.b32.xlu0 %v2714, 96
    %v2717 = vpop.permute.xlu0 %2716
    %v2719 = vadd.f32 %v2712, %v2717
    %v2720 = vadd.f32 %v2171, %v2719
    %v2721 = vmax.f32 %v2720, 0.0
    %2722 = vst.msk [vmem:[#allocation2 + $0x5] sm:$0x1] %vm1074, %v2721
    %s2723 = sld [smem:[#allocation3 + $0x4]]
    %s2724 = sld [smem:[#allocation8 + $0x4]]
    %s2725 = smax.f32 %s2724, 0.0
    %s2726 = sadd.f32 %s2725, 1.0
    %v2727 = vstv %s2726
    %v2728 = vrcp.pop %v2727
    %s2729 = vtos %v2728
    %s2730 = smul.f32 %s2725, %s2729
    %s2731 = smul.f32 %s2725, 0.5
    %v2732 = vmax.f32 %v2698, 0.0
    %v2733 = vmin.f32 %v2688, 1.0
    %v2735 = vsel %vm537, %v2721, 0
    %2737 = vmatprep.subr.mxu0 0.0
    %2738 = vmatpush1.msra.mxu0 0.0
    %2739 = vmatprep.subr.mxu0 0.0
    %2740 = vmatpush1.msra.mxu0 0.0
    %2741 = vmatprep.subr.mxu0 0.0
    %2742 = vmatpush1.msra.mxu0 0.0
    %2743 = vmatprep.subr.mxu0 0.0
    %2744 = vmatpush1.msra.mxu0 0.0
    %2745 = vmatprep.subr.mxu0 0.0
    %2746 = vmatpush1.msra.mxu0 0.0
    %2747 = vmatprep.subr.mxu0 0.0
    %2748 = vmatpush1.msra.mxu0 0.0
    %2749 = vmatprep.subr.mxu0 0.0
    %2750 = vmatpush1.msra.mxu0 0.0
    %2751 = vmatprep.subr.mxu0 0.0
    %2752 = vmatpush1.msra.mxu0 0.0
    %2753 = vmatprep.subr.mxu0 0.0
    %2754 = vmatpush1.msra.mxu0 0.0
    %2755 = vmatprep.subr.mxu0 0.0
    %2756 = vmatpush1.msra.mxu0 0.0
    %2757 = vmatprep.subr.mxu0 0.0
    %2758 = vmatpush1.msra.mxu0 0.0
    %2759 = vmatprep.subr.mxu0 0.0
    %2760 = vmatpush1.msra.mxu0 0.0
    %2761 = vmatprep.subr.mxu0 0.0
    %v2762 = vand.u32 %v536, 4294901760
    %2763 = vmatpush1.msra.mxu0 %v2762
    %2764 = vmatprep.subr.mxu0 0.0
    %v2765 = vand.u32 %v535, 4294901760
    %2766 = vmatpush1.msra.mxu0 %v2765
    %2767 = vmatprep.subr.mxu0 0.0
    %v2768 = vand.u32 %v534, 4294901760
    %2769 = vmatpush1.msra.mxu0 %v2768
    %2770 = vmatprep.subr.mxu0 0.0
    %v2771 = vand.u32 %v533, 4294901760
    %2772 = vmatpush1.msra.mxu0 %v2771
    %2773 = vmatprep.subr.mxu0 0.0
    %2774 = vmatpush2.msra.mxu0 0.0
    %2775 = vmatprep.subr.mxu0 0.0
    %2776 = vmatpush2.msra.mxu0 0.0
    %2777 = vmatprep.subr.mxu0 0.0
    %2778 = vmatpush2.msra.mxu0 0.0
    %2779 = vmatprep.subr.mxu0 0.0
    %2780 = vmatpush2.msra.mxu0 0.0
    %2781 = vmatprep.subr.mxu0 0.0
    %2782 = vmatpush2.msra.mxu0 0.0
    %2783 = vmatprep.subr.mxu0 0.0
    %2784 = vmatpush2.msra.mxu0 0.0
    %2785 = vmatprep.subr.mxu0 0.0
    %2786 = vmatpush2.msra.mxu0 0.0
    %2787 = vmatprep.subr.mxu0 0.0
    %2788 = vmatpush2.msra.mxu0 0.0
    %2789 = vmatprep.subr.mxu0 0.0
    %2790 = vmatpush2.msra.mxu0 0.0
    %2791 = vmatprep.subr.mxu0 0.0
    %2792 = vmatpush2.msra.mxu0 0.0
    %2793 = vmatprep.subr.mxu0 0.0
    %2794 = vmatpush2.msra.mxu0 0.0
    %2795 = vmatprep.subr.mxu0 0.0
    %2796 = vmatpush2.msra.mxu0 0.0
    %2797 = vmatprep.subr.mxu0 0.0
    %2798 = vmatpush2.msra.mxu0 0.0
    %2799 = vmatprep.subr.mxu0 0.0
    %2800 = vmatpush2.msra.mxu0 0.0
    %2801 = vmatprep.subr.mxu0 0.0
    %2802 = vmatpush2.msra.mxu0 0.0
    %2803 = vmatprep.subr.mxu0 0.0
    %2804 = vmatpush2.msra.mxu0 0.0
    %2805 = vmatprep.mubr.f32.mxu0 0.0
    %v2806 = vand.u32 %v2735, 4294901760
    %v2807 = vsub.f32 %v2735, %v2806
    %v2808 = vand.u32 %v2807, 4294901760
    %v2809 = vsub.f32 %v2807, %v2808
    %v2810 = vand.u32 %v2809, 4294901760
    %2811 = vmatmul.mubr.f32.gmra.mxu0 %v2810
    %v2812 = vpop.f32.mrf.mxu0
    %v2813 = vadd.f32 0.0, %v2812
    %v2814 = vpop.f32.mrf.mxu0
    %2815 = vdwg.mxu0
    %2816 = vmatprep.subr.mxu0 0.0
    %2817 = vmatpush1.msra.mxu0 0.0
    %2818 = vmatprep.subr.mxu0 0.0
    %2819 = vmatpush1.msra.mxu0 0.0
    %2820 = vmatprep.subr.mxu0 0.0
    %2821 = vmatpush1.msra.mxu0 0.0
    %2822 = vmatprep.subr.mxu0 0.0
    %2823 = vmatpush1.msra.mxu0 0.0
    %2824 = vmatprep.subr.mxu0 0.0
    %2825 = vmatpush1.msra.mxu0 0.0
    %2826 = vmatprep.subr.mxu0 0.0
    %2827 = vmatpush1.msra.mxu0 0.0
    %2828 = vmatprep.subr.mxu0 0.0
    %2829 = vmatpush1.msra.mxu0 0.0
    %2830 = vmatprep.subr.mxu0 0.0
    %2831 = vmatpush1.msra.mxu0 0.0
    %2832 = vmatprep.subr.mxu0 0.0
    %2833 = vmatpush1.msra.mxu0 0.0
    %2834 = vmatprep.subr.mxu0 0.0
    %2835 = vmatpush1.msra.mxu0 0.0
    %2836 = vmatprep.subr.mxu0 0.0
    %2837 = vmatpush1.msra.mxu0 0.0
    %2838 = vmatprep.subr.mxu0 0.0
    %2839 = vmatpush1.msra.mxu0 0.0
    %2840 = vmatprep.subr.mxu0 0.0
    %v2841 = vand.u32 %v536, 4294901760
    %v2842 = vsub.f32 %v536, %v2841
    %v2843 = vand.u32 %v2842, 4294901760
    %v2844 = vsub.f32 %v2842, %v2843
    %v2845 = vand.u32 %v2844, 4294901760
    %2846 = vmatpush1.msra.mxu0 %v2845
    %2847 = vmatprep.subr.mxu0 0.0
    %v2848 = vand.u32 %v535, 4294901760
    %v2849 = vsub.f32 %v535, %v2848
    %v2850 = vand.u32 %v2849, 4294901760
    %v2851 = vsub.f32 %v2849, %v2850
    %v2852 = vand.u32 %v2851, 4294901760
    %2853 = vmatpush1.msra.mxu0 %v2852
    %2854 = vmatprep.subr.mxu0 0.0
    %v2855 = vand.u32 %v534, 4294901760
    %v2856 = vsub.f32 %v534, %v2855
    %v2857 = vand.u32 %v2856, 4294901760
    %v2858 = vsub.f32 %v2856, %v2857
    %v2859 = vand.u32 %v2858, 4294901760
    %2860 = vmatpush1.msra.mxu0 %v2859
    %2861 = vmatprep.subr.mxu0 0.0
    %v2862 = vand.u32 %v533, 4294901760
    %v2863 = vsub.f32 %v533, %v2862
    %v2864 = vand.u32 %v2863, 4294901760
    %v2865 = vsub.f32 %v2863, %v2864
    %v2866 = vand.u32 %v2865, 4294901760
    %2867 = vmatpush1.msra.mxu0 %v2866
    %2868 = vmatprep.subr.mxu0 0.0
    %2869 = vmatpush2.msra.mxu0 0.0
    %2870 = vmatprep.subr.mxu0 0.0
    %2871 = vmatpush2.msra.mxu0 0.0
    %2872 = vmatprep.subr.mxu0 0.0
    %2873 = vmatpush2.msra.mxu0 0.0
    %2874 = vmatprep.subr.mxu0 0.0
    %2875 = vmatpush2.msra.mxu0 0.0
    %2876 = vmatprep.subr.mxu0 0.0
    %2877 = vmatpush2.msra.mxu0 0.0
    %2878 = vmatprep.subr.mxu0 0.0
    %2879 = vmatpush2.msra.mxu0 0.0
    %2880 = vmatprep.subr.mxu0 0.0
    %2881 = vmatpush2.msra.mxu0 0.0
    %2882 = vmatprep.subr.mxu0 0.0
    %2883 = vmatpush2.msra.mxu0 0.0
    %2884 = vmatprep.subr.mxu0 0.0
    %2885 = vmatpush2.msra.mxu0 0.0
    %2886 = vmatprep.subr.mxu0 0.0
    %2887 = vmatpush2.msra.mxu0 0.0
    %2888 = vmatprep.subr.mxu0 0.0
    %2889 = vmatpush2.msra.mxu0 0.0
    %2890 = vmatprep.subr.mxu0 0.0
    %2891 = vmatpush2.msra.mxu0 0.0
    %2892 = vmatprep.subr.mxu0 0.0
    %2893 = vmatpush2.msra.mxu0 0.0
    %2894 = vmatprep.subr.mxu0 0.0
    %2895 = vmatpush2.msra.mxu0 0.0
    %2896 = vmatprep.subr.mxu0 0.0
    %2897 = vmatpush2.msra.mxu0 0.0
    %2898 = vmatprep.subr.mxu0 0.0
    %2899 = vmatpush2.msra.mxu0 0.0
    %2900 = vmatprep.mubr.f32.mxu0 0.0
    %v2901 = vand.u32 %v2735, 4294901760
    %2902 = vmatmul.mubr.f32.gmra.mxu0 %v2901
    %v2903 = vpop.f32.mrf.mxu0
    %v2904 = vadd.f32 %v2813, %v2903
    %v2905 = vpop.f32.mrf.mxu0
    %2906 = vdwg.mxu0
    %2907 = vmatprep.subr.mxu0 0.0
    %2908 = vmatpush1.msra.mxu0 0.0
    %2909 = vmatprep.subr.mxu0 0.0
    %2910 = vmatpush1.msra.mxu0 0.0
    %2911 = vmatprep.subr.mxu0 0.0
    %2912 = vmatpush1.msra.mxu0 0.0
    %2913 = vmatprep.subr.mxu0 0.0
    %2914 = vmatpush1.msra.mxu0 0.0
    %2915 = vmatprep.subr.mxu0 0.0
    %2916 = vmatpush1.msra.mxu0 0.0
    %2917 = vmatprep.subr.mxu0 0.0
    %2918 = vmatpush1.msra.mxu0 0.0
    %2919 = vmatprep.subr.mxu0 0.0
    %2920 = vmatpush1.msra.mxu0 0.0
    %2921 = vmatprep.subr.mxu0 0.0
    %2922 = vmatpush1.msra.mxu0 0.0
    %2923 = vmatprep.subr.mxu0 0.0
    %2924 = vmatpush1.msra.mxu0 0.0
    %2925 = vmatprep.subr.mxu0 0.0
    %2926 = vmatpush1.msra.mxu0 0.0
    %2927 = vmatprep.subr.mxu0 0.0
    %2928 = vmatpush1.msra.mxu0 0.0
    %2929 = vmatprep.subr.mxu0 0.0
    %2930 = vmatpush1.msra.mxu0 0.0
    %2931 = vmatprep.subr.mxu0 0.0
    %v2932 = vand.u32 %v536, 4294901760
    %v2933 = vsub.f32 %v536, %v2932
    %2934 = vmatpush1.msra.mxu0 %v2933
    %2935 = vmatprep.subr.mxu0 0.0
    %v2936 = vand.u32 %v535, 4294901760
    %v2937 = vsub.f32 %v535, %v2936
    %2938 = vmatpush1.msra.mxu0 %v2937
    %2939 = vmatprep.subr.mxu0 0.0
    %v2940 = vand.u32 %v534, 4294901760
    %v2941 = vsub.f32 %v534, %v2940
    %2942 = vmatpush1.msra.mxu0 %v2941
    %2943 = vmatprep.subr.mxu0 0.0
    %v2944 = vand.u32 %v533, 4294901760
    %v2945 = vsub.f32 %v533, %v2944
    %2946 = vmatpush1.msra.mxu0 %v2945
    %2947 = vmatprep.subr.mxu0 0.0
    %2948 = vmatpush2.msra.mxu0 0.0
    %2949 = vmatprep.subr.mxu0 0.0
    %2950 = vmatpush2.msra.mxu0 0.0
    %2951 = vmatprep.subr.mxu0 0.0
    %2952 = vmatpush2.msra.mxu0 0.0
    %2953 = vmatprep.subr.mxu0 0.0
    %2954 = vmatpush2.msra.mxu0 0.0
    %2955 = vmatprep.subr.mxu0 0.0
    %2956 = vmatpush2.msra.mxu0 0.0
    %2957 = vmatprep.subr.mxu0 0.0
    %2958 = vmatpush2.msra.mxu0 0.0
    %2959 = vmatprep.subr.mxu0 0.0
    %2960 = vmatpush2.msra.mxu0 0.0
    %2961 = vmatprep.subr.mxu0 0.0
    %2962 = vmatpush2.msra.mxu0 0.0
    %2963 = vmatprep.subr.mxu0 0.0
    %2964 = vmatpush2.msra.mxu0 0.0
    %2965 = vmatprep.subr.mxu0 0.0
    %2966 = vmatpush2.msra.mxu0 0.0
    %2967 = vmatprep.subr.mxu0 0.0
    %2968 = vmatpush2.msra.mxu0 0.0
    %2969 = vmatprep.subr.mxu0 0.0
    %2970 = vmatpush2.msra.mxu0 0.0
    %2971 = vmatprep.subr.mxu0 0.0
    %2972 = vmatpush2.msra.mxu0 0.0
    %2973 = vmatprep.subr.mxu0 0.0
    %2974 = vmatpush2.msra.mxu0 0.0
    %2975 = vmatprep.subr.mxu0 0.0
    %2976 = vmatpush2.msra.mxu0 0.0
    %2977 = vmatprep.subr.mxu0 0.0
    %2978 = vmatpush2.msra.mxu0 0.0
    %2979 = vmatprep.mubr.f32.mxu0 0.0
    %v2980 = vand.u32 %v2735, 4294901760
    %v2981 = vsub.f32 %v2735, %v2980
    %2982 = vmatmul.mubr.f32.gmra.mxu0 %v2981
    %v2983 = vpop.f32.mrf.mxu0
    %v2984 = vadd.f32 %v2904, %v2983
    %v2985 = vpop.f32.mrf.mxu0
    %2986 = vdwg.mxu0
    %2987 = vmatprep.subr.mxu0 0.0
    %2988 = vmatpush1.msra.mxu0 0.0
    %2989 = vmatprep.subr.mxu0 0.0
    %2990 = vmatpush1.msra.mxu0 0.0
    %2991 = vmatprep.subr.mxu0 0.0
    %2992 = vmatpush1.msra.mxu0 0.0
    %2993 = vmatprep.subr.mxu0 0.0
    %2994 = vmatpush1.msra.mxu0 0.0
    %2995 = vmatprep.subr.mxu0 0.0
    %2996 = vmatpush1.msra.mxu0 0.0
    %2997 = vmatprep.subr.mxu0 0.0
    %2998 = vmatpush1.msra.mxu0 0.0
    %2999 = vmatprep.subr.mxu0 0.0
    %3000 = vmatpush1.msra.mxu0 0.0
    %3001 = vmatprep.subr.mxu0 0.0
    %3002 = vmatpush1.msra.mxu0 0.0
    %3003 = vmatprep.subr.mxu0 0.0
    %3004 = vmatpush1.msra.mxu0 0.0
    %3005 = vmatprep.subr.mxu0 0.0
    %3006 = vmatpush1.msra.mxu0 0.0
    %3007 = vmatprep.subr.mxu0 0.0
    %3008 = vmatpush1.msra.mxu0 0.0
    %3009 = vmatprep.subr.mxu0 0.0
    %3010 = vmatpush1.msra.mxu0 0.0
    %3011 = vmatprep.subr.mxu0 0.0
    %v3012 = vand.u32 %v536, 4294901760
    %3013 = vmatpush1.msra.mxu0 %v3012
    %3014 = vmatprep.subr.mxu0 0.0
    %v3015 = vand.u32 %v535, 4294901760
    %3016 = vmatpush1.msra.mxu0 %v3015
    %3017 = vmatprep.subr.mxu0 0.0
    %v3018 = vand.u32 %v534, 4294901760
    %3019 = vmatpush1.msra.mxu0 %v3018
    %3020 = vmatprep.subr.mxu0 0.0
    %v3021 = vand.u32 %v533, 4294901760
    %3022 = vmatpush1.msra.mxu0 %v3021
    %3023 = vmatprep.subr.mxu0 0.0
    %3024 = vmatpush2.msra.mxu0 0.0
    %3025 = vmatprep.subr.mxu0 0.0
    %3026 = vmatpush2.msra.mxu0 0.0
    %3027 = vmatprep.subr.mxu0 0.0
    %3028 = vmatpush2.msra.mxu0 0.0
    %3029 = vmatprep.subr.mxu0 0.0
    %3030 = vmatpush2.msra.mxu0 0.0
    %3031 = vmatprep.subr.mxu0 0.0
    %3032 = vmatpush2.msra.mxu0 0.0
    %3033 = vmatprep.subr.mxu0 0.0
    %3034 = vmatpush2.msra.mxu0 0.0
    %3035 = vmatprep.subr.mxu0 0.0
    %3036 = vmatpush2.msra.mxu0 0.0
    %3037 = vmatprep.subr.mxu0 0.0
    %3038 = vmatpush2.msra.mxu0 0.0
    %3039 = vmatprep.subr.mxu0 0.0
    %3040 = vmatpush2.msra.mxu0 0.0
    %3041 = vmatprep.subr.mxu0 0.0
    %3042 = vmatpush2.msra.mxu0 0.0
    %3043 = vmatprep.subr.mxu0 0.0
    %3044 = vmatpush2.msra.mxu0 0.0
    %3045 = vmatprep.subr.mxu0 0.0
    %3046 = vmatpush2.msra.mxu0 0.0
    %3047 = vmatprep.subr.mxu0 0.0
    %3048 = vmatpush2.msra.mxu0 0.0
    %3049 = vmatprep.subr.mxu0 0.0
    %3050 = vmatpush2.msra.mxu0 0.0
    %3051 = vmatprep.subr.mxu0 0.0
    %3052 = vmatpush2.msra.mxu0 0.0
    %3053 = vmatprep.subr.mxu0 0.0
    %3054 = vmatpush2.msra.mxu0 0.0
    %3055 = vmatprep.mubr.f32.mxu0 0.0
    %v3056 = vand.u32 %v2735, 4294901760
    %v3057 = vsub.f32 %v2735, %v3056
    %v3058 = vand.u32 %v3057, 4294901760
    %3059 = vmatmul.mubr.f32.gmra.mxu0 %v3058
    %v3060 = vpop.f32.mrf.mxu0
    %v3061 = vadd.f32 %v2984, %v3060
    %v3062 = vpop.f32.mrf.mxu0
    %3063 = vdwg.mxu0
    %3064 = vmatprep.subr.mxu0 0.0
    %3065 = vmatpush1.msra.mxu0 0.0
    %3066 = vmatprep.subr.mxu0 0.0
    %3067 = vmatpush1.msra.mxu0 0.0
    %3068 = vmatprep.subr.mxu0 0.0
    %3069 = vmatpush1.msra.mxu0 0.0
    %3070 = vmatprep.subr.mxu0 0.0
    %3071 = vmatpush1.msra.mxu0 0.0
    %3072 = vmatprep.subr.mxu0 0.0
    %3073 = vmatpush1.msra.mxu0 0.0
    %3074 = vmatprep.subr.mxu0 0.0
    %3075 = vmatpush1.msra.mxu0 0.0
    %3076 = vmatprep.subr.mxu0 0.0
    %3077 = vmatpush1.msra.mxu0 0.0
    %3078 = vmatprep.subr.mxu0 0.0
    %3079 = vmatpush1.msra.mxu0 0.0
    %3080 = vmatprep.subr.mxu0 0.0
    %3081 = vmatpush1.msra.mxu0 0.0
    %3082 = vmatprep.subr.mxu0 0.0
    %3083 = vmatpush1.msra.mxu0 0.0
    %3084 = vmatprep.subr.mxu0 0.0
    %3085 = vmatpush1.msra.mxu0 0.0
    %3086 = vmatprep.subr.mxu0 0.0
    %3087 = vmatpush1.msra.mxu0 0.0
    %3088 = vmatprep.subr.mxu0 0.0
    %v3089 = vand.u32 %v536, 4294901760
    %v3090 = vsub.f32 %v536, %v3089
    %v3091 = vand.u32 %v3090, 4294901760
    %3092 = vmatpush1.msra.mxu0 %v3091
    %3093 = vmatprep.subr.mxu0 0.0
    %v3094 = vand.u32 %v535, 4294901760
    %v3095 = vsub.f32 %v535, %v3094
    %v3096 = vand.u32 %v3095, 4294901760
    %3097 = vmatpush1.msra.mxu0 %v3096
    %3098 = vmatprep.subr.mxu0 0.0
    %v3099 = vand.u32 %v534, 4294901760
    %v3100 = vsub.f32 %v534, %v3099
    %v3101 = vand.u32 %v3100, 4294901760
    %3102 = vmatpush1.msra.mxu0 %v3101
    %3103 = vmatprep.subr.mxu0 0.0
    %v3104 = vand.u32 %v533, 4294901760
    %v3105 = vsub.f32 %v533, %v3104
    %v3106 = vand.u32 %v3105, 4294901760
    %3107 = vmatpush1.msra.mxu0 %v3106
    %3108 = vmatprep.subr.mxu0 0.0
    %3109 = vmatpush2.msra.mxu0 0.0
    %3110 = vmatprep.subr.mxu0 0.0
    %3111 = vmatpush2.msra.mxu0 0.0
    %3112 = vmatprep.subr.mxu0 0.0
    %3113 = vmatpush2.msra.mxu0 0.0
    %3114 = vmatprep.subr.mxu0 0.0
    %3115 = vmatpush2.msra.mxu0 0.0
    %3116 = vmatprep.subr.mxu0 0.0
    %3117 = vmatpush2.msra.mxu0 0.0
    %3118 = vmatprep.subr.mxu0 0.0
    %3119 = vmatpush2.msra.mxu0 0.0
    %3120 = vmatprep.subr.mxu0 0.0
    %3121 = vmatpush2.msra.mxu0 0.0
    %3122 = vmatprep.subr.mxu0 0.0
    %3123 = vmatpush2.msra.mxu0 0.0
    %3124 = vmatprep.subr.mxu0 0.0
    %3125 = vmatpush2.msra.mxu0 0.0
    %3126 = vmatprep.subr.mxu0 0.0
    %3127 = vmatpush2.msra.mxu0 0.0
    %3128 = vmatprep.subr.mxu0 0.0
    %3129 = vmatpush2.msra.mxu0 0.0
    %3130 = vmatprep.subr.mxu0 0.0
    %3131 = vmatpush2.msra.mxu0 0.0
    %3132 = vmatprep.subr.mxu0 0.0
    %3133 = vmatpush2.msra.mxu0 0.0
    %3134 = vmatprep.subr.mxu0 0.0
    %3135 = vmatpush2.msra.mxu0 0.0
    %3136 = vmatprep.subr.mxu0 0.0
    %3137 = vmatpush2.msra.mxu0 0.0
    %3138 = vmatprep.subr.mxu0 0.0
    %3139 = vmatpush2.msra.mxu0 0.0
    %3140 = vmatprep.mubr.f32.mxu0 0.0
    %v3141 = vand.u32 %v2735, 4294901760
    %3142 = vmatmul.mubr.f32.gmra.mxu0 %v3141
    %v3143 = vpop.f32.mrf.mxu0
    %v3144 = vadd.f32 %v3061, %v3143
    %v3145 = vpop.f32.mrf.mxu0
    %3146 = vdwg.mxu0
    %3147 = vmatprep.subr.mxu0 0.0
    %3148 = vmatpush1.msra.mxu0 0.0
    %3149 = vmatprep.subr.mxu0 0.0
    %3150 = vmatpush1.msra.mxu0 0.0
    %3151 = vmatprep.subr.mxu0 0.0
    %3152 = vmatpush1.msra.mxu0 0.0
    %3153 = vmatprep.subr.mxu0 0.0
    %3154 = vmatpush1.msra.mxu0 0.0
    %3155 = vmatprep.subr.mxu0 0.0
    %3156 = vmatpush1.msra.mxu0 0.0
    %3157 = vmatprep.subr.mxu0 0.0
    %3158 = vmatpush1.msra.mxu0 0.0
    %3159 = vmatprep.subr.mxu0 0.0
    %3160 = vmatpush1.msra.mxu0 0.0
    %3161 = vmatprep.subr.mxu0 0.0
    %3162 = vmatpush1.msra.mxu0 0.0
    %3163 = vmatprep.subr.mxu0 0.0
    %3164 = vmatpush1.msra.mxu0 0.0
    %3165 = vmatprep.subr.mxu0 0.0
    %3166 = vmatpush1.msra.mxu0 0.0
    %3167 = vmatprep.subr.mxu0 0.0
    %3168 = vmatpush1.msra.mxu0 0.0
    %3169 = vmatprep.subr.mxu0 0.0
    %3170 = vmatpush1.msra.mxu0 0.0
    %3171 = vmatprep.subr.mxu0 0.0
    %v3172 = vand.u32 %v536, 4294901760
    %3173 = vmatpush1.msra.mxu0 %v3172
    %3174 = vmatprep.subr.mxu0 0.0
    %v3175 = vand.u32 %v535, 4294901760
    %3176 = vmatpush1.msra.mxu0 %v3175
    %3177 = vmatprep.subr.mxu0 0.0
    %v3178 = vand.u32 %v534, 4294901760
    %3179 = vmatpush1.msra.mxu0 %v3178
    %3180 = vmatprep.subr.mxu0 0.0
    %v3181 = vand.u32 %v533, 4294901760
    %3182 = vmatpush1.msra.mxu0 %v3181
    %3183 = vmatprep.subr.mxu0 0.0
    %3184 = vmatpush2.msra.mxu0 0.0
    %3185 = vmatprep.subr.mxu0 0.0
    %3186 = vmatpush2.msra.mxu0 0.0
    %3187 = vmatprep.subr.mxu0 0.0
    %3188 = vmatpush2.msra.mxu0 0.0
    %3189 = vmatprep.subr.mxu0 0.0
    %3190 = vmatpush2.msra.mxu0 0.0
    %3191 = vmatprep.subr.mxu0 0.0
    %3192 = vmatpush2.msra.mxu0 0.0
    %3193 = vmatprep.subr.mxu0 0.0
    %3194 = vmatpush2.msra.mxu0 0.0
    %3195 = vmatprep.subr.mxu0 0.0
    %3196 = vmatpush2.msra.mxu0 0.0
    %3197 = vmatprep.subr.mxu0 0.0
    %3198 = vmatpush2.msra.mxu0 0.0
    %3199 = vmatprep.subr.mxu0 0.0
    %3200 = vmatpush2.msra.mxu0 0.0
    %3201 = vmatprep.subr.mxu0 0.0
    %3202 = vmatpush2.msra.mxu0 0.0
    %3203 = vmatprep.subr.mxu0 0.0
    %3204 = vmatpush2.msra.mxu0 0.0
    %3205 = vmatprep.subr.mxu0 0.0
    %3206 = vmatpush2.msra.mxu0 0.0
    %3207 = vmatprep.subr.mxu0 0.0
    %3208 = vmatpush2.msra.mxu0 0.0
    %3209 = vmatprep.subr.mxu0 0.0
    %3210 = vmatpush2.msra.mxu0 0.0
    %3211 = vmatprep.subr.mxu0 0.0
    %3212 = vmatpush2.msra.mxu0 0.0
    %3213 = vmatprep.subr.mxu0 0.0
    %3214 = vmatpush2.msra.mxu0 0.0
    %3215 = vmatprep.mubr.f32.mxu0 0.0
    %v3216 = vand.u32 %v2735, 4294901760
    %3217 = vmatmul.mubr.f32.gmra.mxu0 %v3216
    %v3218 = vpop.f32.mrf.mxu0
    %v3219 = vadd.f32 %v3144, %v3218
    %v3220 = vpop.f32.mrf.mxu0
    %3221 = vdwg.mxu0
    %v3222 = vmul.f32 %v2721, %v2721
    %v3223 = vsel %vm1074, %v3222, 0.0
    %3224 = vadd.xlane.f32.xlu0 %v3223
    %v3225 = vpop.xlane.xlu0 %3224
    %v3226 = vsub.f32 0.0, %v2688
    %v3227 = vstv %s2725
    %v3228 = vadd.f32 %v3227, %v2733
    %v3229 = vstv %s2731
    %v3230 = vrcp.pop %v3228
    %v3231 = vmul.f32 %v3229, %v3230
    %v3232 = vmul.f32 %v3231, %v3231
    %v3233 = vadd.f32 %v3225, %v3232
    %v3234 = vmul.f32 %v2688, %v3233
    %v3235 = vadd.f32 %v3226, %v3234
    %v3236 = vmul.f32 %v3235, 0.1
    %v3237 = vadd.f32 %v2688, %v3236
    %v3238 = vmax.f32 %v3237, 0.0
    %v3239 = vsub.f32 %v3238, %v2733
    %v3240 = vsub.f32 0.0, %v2698
    %v3241 = vmul.f32 %v2732, %v2733
    %v3242 = vadd.f32 %v3240, %v3241
    %v3243 = vadd.f32 %v3242, 1.0
    %v3244 = vmul.f32 %v3239, 0.1
    %v3245 = vadd.f32 %v3243, %v3244
    %v3246 = vmul.f32 %v3245, 0.1
    %v3247 = vadd.f32 %v2698, %v3246
    %v3248 = vsub.f32 0.0, %v2720
    %v3249 = vstv %s2730
    %v3250 = vmul.f32 %v3249, %v530
    %v3252 = vrot.slane %v3250, 4
    %v3254 = vadd.f32 %v3248, %v3252
    %v3255 = vrcp.pop %v2732
    %v3256 = vmul.f32 1.0, %v3255
    %v3257 = vstv %s2729
    %v3258 = vmul.f32 %v3256, %v3257
    %v3259 = vmul.f32 %v3258, %v3219
    %v3260 = vadd.f32 %v3254, %v3259
    %v3261 = vmul.f32 %v3260, 0.2
    %v3262 = vstv %s2723
    %v3263 = vmul.f32 %v3262, %v3219
    %3265 = vrot.lane.b32.xlu0 %v3263, 96
    %v3266 = vpop.permute.xlu0 %3265
    %v3268 = vadd.f32 %v3261, %v3266
    %v3269 = vadd.f32 %v2720, %v3268
    %v3270 = vmax.f32 %v3269, 0.0
    %3271 = vst.msk [vmem:[#allocation2 + $0x6] sm:$0x1] %vm1074, %v3270
    %s3272 = sld [smem:[#allocation3 + $0x5]]
    %s3273 = sld [smem:[#allocation8 + $0x5]]
    %s3274 = smax.f32 %s3273, 0.0
    %s3275 = sadd.f32 %s3274, 1.0
    %v3276 = vstv %s3275
    %v3277 = vrcp.pop %v3276
    %s3278 = vtos %v3277
    %s3279 = smul.f32 %s3274, %s3278
    %s3280 = smul.f32 %s3274, 0.5
    %v3281 = vmax.f32 %v3247, 0.0
    %v3282 = vmin.f32 %v3237, 1.0
    %v3284 = vsel %vm537, %v3270, 0
    %3286 = vmatprep.subr.mxu0 0.0
    %3287 = vmatpush1.msra.mxu0 0.0
    %3288 = vmatprep.subr.mxu0 0.0
    %3289 = vmatpush1.msra.mxu0 0.0
    %3290 = vmatprep.subr.mxu0 0.0
    %3291 = vmatpush1.msra.mxu0 0.0
    %3292 = vmatprep.subr.mxu0 0.0
    %3293 = vmatpush1.msra.mxu0 0.0
    %3294 = vmatprep.subr.mxu0 0.0
    %3295 = vmatpush1.msra.mxu0 0.0
    %3296 = vmatprep.subr.mxu0 0.0
    %3297 = vmatpush1.msra.mxu0 0.0
    %3298 = vmatprep.subr.mxu0 0.0
    %3299 = vmatpush1.msra.mxu0 0.0
    %3300 = vmatprep.subr.mxu0 0.0
    %3301 = vmatpush1.msra.mxu0 0.0
    %3302 = vmatprep.subr.mxu0 0.0
    %3303 = vmatpush1.msra.mxu0 0.0
    %3304 = vmatprep.subr.mxu0 0.0
    %3305 = vmatpush1.msra.mxu0 0.0
    %3306 = vmatprep.subr.mxu0 0.0
    %3307 = vmatpush1.msra.mxu0 0.0
    %3308 = vmatprep.subr.mxu0 0.0
    %3309 = vmatpush1.msra.mxu0 0.0
    %3310 = vmatprep.subr.mxu0 0.0
    %v3311 = vand.u32 %v536, 4294901760
    %3312 = vmatpush1.msra.mxu0 %v3311
    %3313 = vmatprep.subr.mxu0 0.0
    %v3314 = vand.u32 %v535, 4294901760
    %3315 = vmatpush1.msra.mxu0 %v3314
    %3316 = vmatprep.subr.mxu0 0.0
    %v3317 = vand.u32 %v534, 4294901760
    %3318 = vmatpush1.msra.mxu0 %v3317
    %3319 = vmatprep.subr.mxu0 0.0
    %v3320 = vand.u32 %v533, 4294901760
    %3321 = vmatpush1.msra.mxu0 %v3320
    %3322 = vmatprep.subr.mxu0 0.0
    %3323 = vmatpush2.msra.mxu0 0.0
    %3324 = vmatprep.subr.mxu0 0.0
    %3325 = vmatpush2.msra.mxu0 0.0
    %3326 = vmatprep.subr.mxu0 0.0
    %3327 = vmatpush2.msra.mxu0 0.0
    %3328 = vmatprep.subr.mxu0 0.0
    %3329 = vmatpush2.msra.mxu0 0.0
    %3330 = vmatprep.subr.mxu0 0.0
    %3331 = vmatpush2.msra.mxu0 0.0
    %3332 = vmatprep.subr.mxu0 0.0
    %3333 = vmatpush2.msra.mxu0 0.0
    %3334 = vmatprep.subr.mxu0 0.0
    %3335 = vmatpush2.msra.mxu0 0.0
    %3336 = vmatprep.subr.mxu0 0.0
    %3337 = vmatpush2.msra.mxu0 0.0
    %3338 = vmatprep.subr.mxu0 0.0
    %3339 = vmatpush2.msra.mxu0 0.0
    %3340 = vmatprep.subr.mxu0 0.0
    %3341 = vmatpush2.msra.mxu0 0.0
    %3342 = vmatprep.subr.mxu0 0.0
    %3343 = vmatpush2.msra.mxu0 0.0
    %3344 = vmatprep.subr.mxu0 0.0
    %3345 = vmatpush2.msra.mxu0 0.0
    %3346 = vmatprep.subr.mxu0 0.0
    %3347 = vmatpush2.msra.mxu0 0.0
    %3348 = vmatprep.subr.mxu0 0.0
    %3349 = vmatpush2.msra.mxu0 0.0
    %3350 = vmatprep.subr.mxu0 0.0
    %3351 = vmatpush2.msra.mxu0 0.0
    %3352 = vmatprep.subr.mxu0 0.0
    %3353 = vmatpush2.msra.mxu0 0.0
    %3354 = vmatprep.mubr.f32.mxu0 0.0
    %v3355 = vand.u32 %v3284, 4294901760
    %v3356 = vsub.f32 %v3284, %v3355
    %v3357 = vand.u32 %v3356, 4294901760
    %v3358 = vsub.f32 %v3356, %v3357
    %v3359 = vand.u32 %v3358, 4294901760
    %3360 = vmatmul.mubr.f32.gmra.mxu0 %v3359
    %v3361 = vpop.f32.mrf.mxu0
    %v3362 = vadd.f32 0.0, %v3361
    %v3363 = vpop.f32.mrf.mxu0
    %3364 = vdwg.mxu0
    %3365 = vmatprep.subr.mxu0 0.0
    %3366 = vmatpush1.msra.mxu0 0.0
    %3367 = vmatprep.subr.mxu0 0.0
    %3368 = vmatpush1.msra.mxu0 0.0
    %3369 = vmatprep.subr.mxu0 0.0
    %3370 = vmatpush1.msra.mxu0 0.0
    %3371 = vmatprep.subr.mxu0 0.0
    %3372 = vmatpush1.msra.mxu0 0.0
    %3373 = vmatprep.subr.mxu0 0.0
    %3374 = vmatpush1.msra.mxu0 0.0
    %3375 = vmatprep.subr.mxu0 0.0
    %3376 = vmatpush1.msra.mxu0 0.0
    %3377 = vmatprep.subr.mxu0 0.0
    %3378 = vmatpush1.msra.mxu0 0.0
    %3379 = vmatprep.subr.mxu0 0.0
    %3380 = vmatpush1.msra.mxu0 0.0
    %3381 = vmatprep.subr.mxu0 0.0
    %3382 = vmatpush1.msra.mxu0 0.0
    %3383 = vmatprep.subr.mxu0 0.0
    %3384 = vmatpush1.msra.mxu0 0.0
    %3385 = vmatprep.subr.mxu0 0.0
    %3386 = vmatpush1.msra.mxu0 0.0
    %3387 = vmatprep.subr.mxu0 0.0
    %3388 = vmatpush1.msra.mxu0 0.0
    %3389 = vmatprep.subr.mxu0 0.0
    %v3390 = vand.u32 %v536, 4294901760
    %v3391 = vsub.f32 %v536, %v3390
    %v3392 = vand.u32 %v3391, 4294901760
    %v3393 = vsub.f32 %v3391, %v3392
    %v3394 = vand.u32 %v3393, 4294901760
    %3395 = vmatpush1.msra.mxu0 %v3394
    %3396 = vmatprep.subr.mxu0 0.0
    %v3397 = vand.u32 %v535, 4294901760
    %v3398 = vsub.f32 %v535, %v3397
    %v3399 = vand.u32 %v3398, 4294901760
    %v3400 = vsub.f32 %v3398, %v3399
    %v3401 = vand.u32 %v3400, 4294901760
    %3402 = vmatpush1.msra.mxu0 %v3401
    %3403 = vmatprep.subr.mxu0 0.0
    %v3404 = vand.u32 %v534, 4294901760
    %v3405 = vsub.f32 %v534, %v3404
    %v3406 = vand.u32 %v3405, 4294901760
    %v3407 = vsub.f32 %v3405, %v3406
    %v3408 = vand.u32 %v3407, 4294901760
    %3409 = vmatpush1.msra.mxu0 %v3408
    %3410 = vmatprep.subr.mxu0 0.0
    %v3411 = vand.u32 %v533, 4294901760
    %v3412 = vsub.f32 %v533, %v3411
    %v3413 = vand.u32 %v3412, 4294901760
    %v3414 = vsub.f32 %v3412, %v3413
    %v3415 = vand.u32 %v3414, 4294901760
    %3416 = vmatpush1.msra.mxu0 %v3415
    %3417 = vmatprep.subr.mxu0 0.0
    %3418 = vmatpush2.msra.mxu0 0.0
    %3419 = vmatprep.subr.mxu0 0.0
    %3420 = vmatpush2.msra.mxu0 0.0
    %3421 = vmatprep.subr.mxu0 0.0
    %3422 = vmatpush2.msra.mxu0 0.0
    %3423 = vmatprep.subr.mxu0 0.0
    %3424 = vmatpush2.msra.mxu0 0.0
    %3425 = vmatprep.subr.mxu0 0.0
    %3426 = vmatpush2.msra.mxu0 0.0
    %3427 = vmatprep.subr.mxu0 0.0
    %3428 = vmatpush2.msra.mxu0 0.0
    %3429 = vmatprep.subr.mxu0 0.0
    %3430 = vmatpush2.msra.mxu0 0.0
    %3431 = vmatprep.subr.mxu0 0.0
    %3432 = vmatpush2.msra.mxu0 0.0
    %3433 = vmatprep.subr.mxu0 0.0
    %3434 = vmatpush2.msra.mxu0 0.0
    %3435 = vmatprep.subr.mxu0 0.0
    %3436 = vmatpush2.msra.mxu0 0.0
    %3437 = vmatprep.subr.mxu0 0.0
    %3438 = vmatpush2.msra.mxu0 0.0
    %3439 = vmatprep.subr.mxu0 0.0
    %3440 = vmatpush2.msra.mxu0 0.0
    %3441 = vmatprep.subr.mxu0 0.0
    %3442 = vmatpush2.msra.mxu0 0.0
    %3443 = vmatprep.subr.mxu0 0.0
    %3444 = vmatpush2.msra.mxu0 0.0
    %3445 = vmatprep.subr.mxu0 0.0
    %3446 = vmatpush2.msra.mxu0 0.0
    %3447 = vmatprep.subr.mxu0 0.0
    %3448 = vmatpush2.msra.mxu0 0.0
    %3449 = vmatprep.mubr.f32.mxu0 0.0
    %v3450 = vand.u32 %v3284, 4294901760
    %3451 = vmatmul.mubr.f32.gmra.mxu0 %v3450
    %v3452 = vpop.f32.mrf.mxu0
    %v3453 = vadd.f32 %v3362, %v3452
    %v3454 = vpop.f32.mrf.mxu0
    %3455 = vdwg.mxu0
    %3456 = vmatprep.subr.mxu0 0.0
    %3457 = vmatpush1.msra.mxu0 0.0
    %3458 = vmatprep.subr.mxu0 0.0
    %3459 = vmatpush1.msra.mxu0 0.0
    %3460 = vmatprep.subr.mxu0 0.0
    %3461 = vmatpush1.msra.mxu0 0.0
    %3462 = vmatprep.subr.mxu0 0.0
    %3463 = vmatpush1.msra.mxu0 0.0
    %3464 = vmatprep.subr.mxu0 0.0
    %3465 = vmatpush1.msra.mxu0 0.0
    %3466 = vmatprep.subr.mxu0 0.0
    %3467 = vmatpush1.msra.mxu0 0.0
    %3468 = vmatprep.subr.mxu0 0.0
    %3469 = vmatpush1.msra.mxu0 0.0
    %3470 = vmatprep.subr.mxu0 0.0
    %3471 = vmatpush1.msra.mxu0 0.0
    %3472 = vmatprep.subr.mxu0 0.0
    %3473 = vmatpush1.msra.mxu0 0.0
    %3474 = vmatprep.subr.mxu0 0.0
    %3475 = vmatpush1.msra.mxu0 0.0
    %3476 = vmatprep.subr.mxu0 0.0
    %3477 = vmatpush1.msra.mxu0 0.0
    %3478 = vmatprep.subr.mxu0 0.0
    %3479 = vmatpush1.msra.mxu0 0.0
    %3480 = vmatprep.subr.mxu0 0.0
    %v3481 = vand.u32 %v536, 4294901760
    %v3482 = vsub.f32 %v536, %v3481
    %3483 = vmatpush1.msra.mxu0 %v3482
    %3484 = vmatprep.subr.mxu0 0.0
    %v3485 = vand.u32 %v535, 4294901760
    %v3486 = vsub.f32 %v535, %v3485
    %3487 = vmatpush1.msra.mxu0 %v3486
    %3488 = vmatprep.subr.mxu0 0.0
    %v3489 = vand.u32 %v534, 4294901760
    %v3490 = vsub.f32 %v534, %v3489
    %3491 = vmatpush1.msra.mxu0 %v3490
    %3492 = vmatprep.subr.mxu0 0.0
    %v3493 = vand.u32 %v533, 4294901760
    %v3494 = vsub.f32 %v533, %v3493
    %3495 = vmatpush1.msra.mxu0 %v3494
    %3496 = vmatprep.subr.mxu0 0.0
    %3497 = vmatpush2.msra.mxu0 0.0
    %3498 = vmatprep.subr.mxu0 0.0
    %3499 = vmatpush2.msra.mxu0 0.0
    %3500 = vmatprep.subr.mxu0 0.0
    %3501 = vmatpush2.msra.mxu0 0.0
    %3502 = vmatprep.subr.mxu0 0.0
    %3503 = vmatpush2.msra.mxu0 0.0
    %3504 = vmatprep.subr.mxu0 0.0
    %3505 = vmatpush2.msra.mxu0 0.0
    %3506 = vmatprep.subr.mxu0 0.0
    %3507 = vmatpush2.msra.mxu0 0.0
    %3508 = vmatprep.subr.mxu0 0.0
    %3509 = vmatpush2.msra.mxu0 0.0
    %3510 = vmatprep.subr.mxu0 0.0
    %3511 = vmatpush2.msra.mxu0 0.0
    %3512 = vmatprep.subr.mxu0 0.0
    %3513 = vmatpush2.msra.mxu0 0.0
    %3514 = vmatprep.subr.mxu0 0.0
    %3515 = vmatpush2.msra.mxu0 0.0
    %3516 = vmatprep.subr.mxu0 0.0
    %3517 = vmatpush2.msra.mxu0 0.0
    %3518 = vmatprep.subr.mxu0 0.0
    %3519 = vmatpush2.msra.mxu0 0.0
    %3520 = vmatprep.subr.mxu0 0.0
    %3521 = vmatpush2.msra.mxu0 0.0
    %3522 = vmatprep.subr.mxu0 0.0
    %3523 = vmatpush2.msra.mxu0 0.0
    %3524 = vmatprep.subr.mxu0 0.0
    %3525 = vmatpush2.msra.mxu0 0.0
    %3526 = vmatprep.subr.mxu0 0.0
    %3527 = vmatpush2.msra.mxu0 0.0
    %3528 = vmatprep.mubr.f32.mxu0 0.0
    %v3529 = vand.u32 %v3284, 4294901760
    %v3530 = vsub.f32 %v3284, %v3529
    %3531 = vmatmul.mubr.f32.gmra.mxu0 %v3530
    %v3532 = vpop.f32.mrf.mxu0
    %v3533 = vadd.f32 %v3453, %v3532
    %v3534 = vpop.f32.mrf.mxu0
    %3535 = vdwg.mxu0
    %3536 = vmatprep.subr.mxu0 0.0
    %3537 = vmatpush1.msra.mxu0 0.0
    %3538 = vmatprep.subr.mxu0 0.0
    %3539 = vmatpush1.msra.mxu0 0.0
    %3540 = vmatprep.subr.mxu0 0.0
    %3541 = vmatpush1.msra.mxu0 0.0
    %3542 = vmatprep.subr.mxu0 0.0
    %3543 = vmatpush1.msra.mxu0 0.0
    %3544 = vmatprep.subr.mxu0 0.0
    %3545 = vmatpush1.msra.mxu0 0.0
    %3546 = vmatprep.subr.mxu0 0.0
    %3547 = vmatpush1.msra.mxu0 0.0
    %3548 = vmatprep.subr.mxu0 0.0
    %3549 = vmatpush1.msra.mxu0 0.0
    %3550 = vmatprep.subr.mxu0 0.0
    %3551 = vmatpush1.msra.mxu0 0.0
    %3552 = vmatprep.subr.mxu0 0.0
    %3553 = vmatpush1.msra.mxu0 0.0
    %3554 = vmatprep.subr.mxu0 0.0
    %3555 = vmatpush1.msra.mxu0 0.0
    %3556 = vmatprep.subr.mxu0 0.0
    %3557 = vmatpush1.msra.mxu0 0.0
    %3558 = vmatprep.subr.mxu0 0.0
    %3559 = vmatpush1.msra.mxu0 0.0
    %3560 = vmatprep.subr.mxu0 0.0
    %v3561 = vand.u32 %v536, 4294901760
    %3562 = vmatpush1.msra.mxu0 %v3561
    %3563 = vmatprep.subr.mxu0 0.0
    %v3564 = vand.u32 %v535, 4294901760
    %3565 = vmatpush1.msra.mxu0 %v3564
    %3566 = vmatprep.subr.mxu0 0.0
    %v3567 = vand.u32 %v534, 4294901760
    %3568 = vmatpush1.msra.mxu0 %v3567
    %3569 = vmatprep.subr.mxu0 0.0
    %v3570 = vand.u32 %v533, 4294901760
    %3571 = vmatpush1.msra.mxu0 %v3570
    %3572 = vmatprep.subr.mxu0 0.0
    %3573 = vmatpush2.msra.mxu0 0.0
    %3574 = vmatprep.subr.mxu0 0.0
    %3575 = vmatpush2.msra.mxu0 0.0
    %3576 = vmatprep.subr.mxu0 0.0
    %3577 = vmatpush2.msra.mxu0 0.0
    %3578 = vmatprep.subr.mxu0 0.0
    %3579 = vmatpush2.msra.mxu0 0.0
    %3580 = vmatprep.subr.mxu0 0.0
    %3581 = vmatpush2.msra.mxu0 0.0
    %3582 = vmatprep.subr.mxu0 0.0
    %3583 = vmatpush2.msra.mxu0 0.0
    %3584 = vmatprep.subr.mxu0 0.0
    %3585 = vmatpush2.msra.mxu0 0.0
    %3586 = vmatprep.subr.mxu0 0.0
    %3587 = vmatpush2.msra.mxu0 0.0
    %3588 = vmatprep.subr.mxu0 0.0
    %3589 = vmatpush2.msra.mxu0 0.0
    %3590 = vmatprep.subr.mxu0 0.0
    %3591 = vmatpush2.msra.mxu0 0.0
    %3592 = vmatprep.subr.mxu0 0.0
    %3593 = vmatpush2.msra.mxu0 0.0
    %3594 = vmatprep.subr.mxu0 0.0
    %3595 = vmatpush2.msra.mxu0 0.0
    %3596 = vmatprep.subr.mxu0 0.0
    %3597 = vmatpush2.msra.mxu0 0.0
    %3598 = vmatprep.subr.mxu0 0.0
    %3599 = vmatpush2.msra.mxu0 0.0
    %3600 = vmatprep.subr.mxu0 0.0
    %3601 = vmatpush2.msra.mxu0 0.0
    %3602 = vmatprep.subr.mxu0 0.0
    %3603 = vmatpush2.msra.mxu0 0.0
    %3604 = vmatprep.mubr.f32.mxu0 0.0
    %v3605 = vand.u32 %v3284, 4294901760
    %v3606 = vsub.f32 %v3284, %v3605
    %v3607 = vand.u32 %v3606, 4294901760
    %3608 = vmatmul.mubr.f32.gmra.mxu0 %v3607
    %v3609 = vpop.f32.mrf.mxu0
    %v3610 = vadd.f32 %v3533, %v3609
    %v3611 = vpop.f32.mrf.mxu0
    %3612 = vdwg.mxu0
    %3613 = vmatprep.subr.mxu0 0.0
    %3614 = vmatpush1.msra.mxu0 0.0
    %3615 = vmatprep.subr.mxu0 0.0
    %3616 = vmatpush1.msra.mxu0 0.0
    %3617 = vmatprep.subr.mxu0 0.0
    %3618 = vmatpush1.msra.mxu0 0.0
    %3619 = vmatprep.subr.mxu0 0.0
    %3620 = vmatpush1.msra.mxu0 0.0
    %3621 = vmatprep.subr.mxu0 0.0
    %3622 = vmatpush1.msra.mxu0 0.0
    %3623 = vmatprep.subr.mxu0 0.0
    %3624 = vmatpush1.msra.mxu0 0.0
    %3625 = vmatprep.subr.mxu0 0.0
    %3626 = vmatpush1.msra.mxu0 0.0
    %3627 = vmatprep.subr.mxu0 0.0
    %3628 = vmatpush1.msra.mxu0 0.0
    %3629 = vmatprep.subr.mxu0 0.0
    %3630 = vmatpush1.msra.mxu0 0.0
    %3631 = vmatprep.subr.mxu0 0.0
    %3632 = vmatpush1.msra.mxu0 0.0
    %3633 = vmatprep.subr.mxu0 0.0
    %3634 = vmatpush1.msra.mxu0 0.0
    %3635 = vmatprep.subr.mxu0 0.0
    %3636 = vmatpush1.msra.mxu0 0.0
    %3637 = vmatprep.subr.mxu0 0.0
    %v3638 = vand.u32 %v536, 4294901760
    %v3639 = vsub.f32 %v536, %v3638
    %v3640 = vand.u32 %v3639, 4294901760
    %3641 = vmatpush1.msra.mxu0 %v3640
    %3642 = vmatprep.subr.mxu0 0.0
    %v3643 = vand.u32 %v535, 4294901760
    %v3644 = vsub.f32 %v535, %v3643
    %v3645 = vand.u32 %v3644, 4294901760
    %3646 = vmatpush1.msra.mxu0 %v3645
    %3647 = vmatprep.subr.mxu0 0.0
    %v3648 = vand.u32 %v534, 4294901760
    %v3649 = vsub.f32 %v534, %v3648
    %v3650 = vand.u32 %v3649, 4294901760
    %3651 = vmatpush1.msra.mxu0 %v3650
    %3652 = vmatprep.subr.mxu0 0.0
    %v3653 = vand.u32 %v533, 4294901760
    %v3654 = vsub.f32 %v533, %v3653
    %v3655 = vand.u32 %v3654, 4294901760
    %3656 = vmatpush1.msra.mxu0 %v3655
    %3657 = vmatprep.subr.mxu0 0.0
    %3658 = vmatpush2.msra.mxu0 0.0
    %3659 = vmatprep.subr.mxu0 0.0
    %3660 = vmatpush2.msra.mxu0 0.0
    %3661 = vmatprep.subr.mxu0 0.0
    %3662 = vmatpush2.msra.mxu0 0.0
    %3663 = vmatprep.subr.mxu0 0.0
    %3664 = vmatpush2.msra.mxu0 0.0
    %3665 = vmatprep.subr.mxu0 0.0
    %3666 = vmatpush2.msra.mxu0 0.0
    %3667 = vmatprep.subr.mxu0 0.0
    %3668 = vmatpush2.msra.mxu0 0.0
    %3669 = vmatprep.subr.mxu0 0.0
    %3670 = vmatpush2.msra.mxu0 0.0
    %3671 = vmatprep.subr.mxu0 0.0
    %3672 = vmatpush2.msra.mxu0 0.0
    %3673 = vmatprep.subr.mxu0 0.0
    %3674 = vmatpush2.msra.mxu0 0.0
    %3675 = vmatprep.subr.mxu0 0.0
    %3676 = vmatpush2.msra.mxu0 0.0
    %3677 = vmatprep.subr.mxu0 0.0
    %3678 = vmatpush2.msra.mxu0 0.0
    %3679 = vmatprep.subr.mxu0 0.0
    %3680 = vmatpush2.msra.mxu0 0.0
    %3681 = vmatprep.subr.mxu0 0.0
    %3682 = vmatpush2.msra.mxu0 0.0
    %3683 = vmatprep.subr.mxu0 0.0
    %3684 = vmatpush2.msra.mxu0 0.0
    %3685 = vmatprep.subr.mxu0 0.0
    %3686 = vmatpush2.msra.mxu0 0.0
    %3687 = vmatprep.subr.mxu0 0.0
    %3688 = vmatpush2.msra.mxu0 0.0
    %3689 = vmatprep.mubr.f32.mxu0 0.0
    %v3690 = vand.u32 %v3284, 4294901760
    %3691 = vmatmul.mubr.f32.gmra.mxu0 %v3690
    %v3692 = vpop.f32.mrf.mxu0
    %v3693 = vadd.f32 %v3610, %v3692
    %v3694 = vpop.f32.mrf.mxu0
    %3695 = vdwg.mxu0
    %3696 = vmatprep.subr.mxu0 0.0
    %3697 = vmatpush1.msra.mxu0 0.0
    %3698 = vmatprep.subr.mxu0 0.0
    %3699 = vmatpush1.msra.mxu0 0.0
    %3700 = vmatprep.subr.mxu0 0.0
    %3701 = vmatpush1.msra.mxu0 0.0
    %3702 = vmatprep.subr.mxu0 0.0
    %3703 = vmatpush1.msra.mxu0 0.0
    %3704 = vmatprep.subr.mxu0 0.0
    %3705 = vmatpush1.msra.mxu0 0.0
    %3706 = vmatprep.subr.mxu0 0.0
    %3707 = vmatpush1.msra.mxu0 0.0
    %3708 = vmatprep.subr.mxu0 0.0
    %3709 = vmatpush1.msra.mxu0 0.0
    %3710 = vmatprep.subr.mxu0 0.0
    %3711 = vmatpush1.msra.mxu0 0.0
    %3712 = vmatprep.subr.mxu0 0.0
    %3713 = vmatpush1.msra.mxu0 0.0
    %3714 = vmatprep.subr.mxu0 0.0
    %3715 = vmatpush1.msra.mxu0 0.0
    %3716 = vmatprep.subr.mxu0 0.0
    %3717 = vmatpush1.msra.mxu0 0.0
    %3718 = vmatprep.subr.mxu0 0.0
    %3719 = vmatpush1.msra.mxu0 0.0
    %3720 = vmatprep.subr.mxu0 0.0
    %v3721 = vand.u32 %v536, 4294901760
    %3722 = vmatpush1.msra.mxu0 %v3721
    %3723 = vmatprep.subr.mxu0 0.0
    %v3724 = vand.u32 %v535, 4294901760
    %3725 = vmatpush1.msra.mxu0 %v3724
    %3726 = vmatprep.subr.mxu0 0.0
    %v3727 = vand.u32 %v534, 4294901760
    %3728 = vmatpush1.msra.mxu0 %v3727
    %3729 = vmatprep.subr.mxu0 0.0
    %v3730 = vand.u32 %v533, 4294901760
    %3731 = vmatpush1.msra.mxu0 %v3730
    %3732 = vmatprep.subr.mxu0 0.0
    %3733 = vmatpush2.msra.mxu0 0.0
    %3734 = vmatprep.subr.mxu0 0.0
    %3735 = vmatpush2.msra.mxu0 0.0
    %3736 = vmatprep.subr.mxu0 0.0
    %3737 = vmatpush2.msra.mxu0 0.0
    %3738 = vmatprep.subr.mxu0 0.0
    %3739 = vmatpush2.msra.mxu0 0.0
    %3740 = vmatprep.subr.mxu0 0.0
    %3741 = vmatpush2.msra.mxu0 0.0
    %3742 = vmatprep.subr.mxu0 0.0
    %3743 = vmatpush2.msra.mxu0 0.0
    %3744 = vmatprep.subr.mxu0 0.0
    %3745 = vmatpush2.msra.mxu0 0.0
    %3746 = vmatprep.subr.mxu0 0.0
    %3747 = vmatpush2.msra.mxu0 0.0
    %3748 = vmatprep.subr.mxu0 0.0
    %3749 = vmatpush2.msra.mxu0 0.0
    %3750 = vmatprep.subr.mxu0 0.0
    %3751 = vmatpush2.msra.mxu0 0.0
    %3752 = vmatprep.subr.mxu0 0.0
    %3753 = vmatpush2.msra.mxu0 0.0
    %3754 = vmatprep.subr.mxu0 0.0
    %3755 = vmatpush2.msra.mxu0 0.0
    %3756 = vmatprep.subr.mxu0 0.0
    %3757 = vmatpush2.msra.mxu0 0.0
    %3758 = vmatprep.subr.mxu0 0.0
    %3759 = vmatpush2.msra.mxu0 0.0
    %3760 = vmatprep.subr.mxu0 0.0
    %3761 = vmatpush2.msra.mxu0 0.0
    %3762 = vmatprep.subr.mxu0 0.0
    %3763 = vmatpush2.msra.mxu0 0.0
    %3764 = vmatprep.mubr.f32.mxu0 0.0
    %v3765 = vand.u32 %v3284, 4294901760
    %3766 = vmatmul.mubr.f32.gmra.mxu0 %v3765
    %v3767 = vpop.f32.mrf.mxu0
    %v3768 = vadd.f32 %v3693, %v3767
    %v3769 = vpop.f32.mrf.mxu0
    %3770 = vdwg.mxu0
    %v3771 = vmul.f32 %v3270, %v3270
    %v3772 = vsel %vm1074, %v3771, 0.0
    %3773 = vadd.xlane.f32.xlu0 %v3772
    %v3774 = vpop.xlane.xlu0 %3773
    %v3775 = vsub.f32 0.0, %v3237
    %v3776 = vstv %s3274
    %v3777 = vadd.f32 %v3776, %v3282
    %v3778 = vstv %s3280
    %v3779 = vrcp.pop %v3777
    %v3780 = vmul.f32 %v3778, %v3779
    %v3781 = vmul.f32 %v3780, %v3780
    %v3782 = vadd.f32 %v3774, %v3781
    %v3783 = vmul.f32 %v3237, %v3782
    %v3784 = vadd.f32 %v3775, %v3783
    %v3785 = vmul.f32 %v3784, 0.1
    %v3786 = vadd.f32 %v3237, %v3785
    %v3787 = vmax.f32 %v3786, 0.0
    %v3788 = vsub.f32 %v3787, %v3282
    %v3789 = vsub.f32 0.0, %v3247
    %v3790 = vmul.f32 %v3281, %v3282
    %v3791 = vadd.f32 %v3789, %v3790
    %v3792 = vadd.f32 %v3791, 1.0
    %v3793 = vmul.f32 %v3788, 0.1
    %v3794 = vadd.f32 %v3792, %v3793
    %v3795 = vmul.f32 %v3794, 0.1
    %v3796 = vadd.f32 %v3247, %v3795
    %v3797 = vsub.f32 0.0, %v3269
    %v3798 = vstv %s3279
    %v3799 = vmul.f32 %v3798, %v530
    %v3801 = vrot.slane %v3799, 5
    %v3803 = vadd.f32 %v3797, %v3801
    %v3804 = vrcp.pop %v3281
    %v3805 = vmul.f32 1.0, %v3804
    %v3806 = vstv %s3278
    %v3807 = vmul.f32 %v3805, %v3806
    %v3808 = vmul.f32 %v3807, %v3768
    %v3809 = vadd.f32 %v3803, %v3808
    %v3810 = vmul.f32 %v3809, 0.2
    %v3811 = vstv %s3272
    %v3812 = vmul.f32 %v3811, %v3768
    %3814 = vrot.lane.b32.xlu0 %v3812, 96
    %v3815 = vpop.permute.xlu0 %3814
    %v3817 = vadd.f32 %v3810, %v3815
    %v3818 = vadd.f32 %v3269, %v3817
    %v3819 = vmax.f32 %v3818, 0.0
    %3820 = vst.msk [vmem:[#allocation2 + $0x7] sm:$0x1] %vm1074, %v3819
    %s3821 = sld [smem:[#allocation3 + $0x6]]
    %s3822 = sld [smem:[#allocation8 + $0x6]]
    %s3823 = smax.f32 %s3822, 0.0
    %s3824 = sadd.f32 %s3823, 1.0
    %v3825 = vstv %s3824
    %v3826 = vrcp.pop %v3825
    %s3827 = vtos %v3826
    %s3828 = smul.f32 %s3823, %s3827
    %s3829 = smul.f32 %s3823, 0.5
    %v3830 = vmax.f32 %v3796, 0.0
    %v3831 = vmin.f32 %v3786, 1.0
    %v3833 = vsel %vm537, %v3819, 0
    %3835 = vmatprep.subr.mxu0 0.0
    %3836 = vmatpush1.msra.mxu0 0.0
    %3837 = vmatprep.subr.mxu0 0.0
    %3838 = vmatpush1.msra.mxu0 0.0
    %3839 = vmatprep.subr.mxu0 0.0
    %3840 = vmatpush1.msra.mxu0 0.0
    %3841 = vmatprep.subr.mxu0 0.0
    %3842 = vmatpush1.msra.mxu0 0.0
    %3843 = vmatprep.subr.mxu0 0.0
    %3844 = vmatpush1.msra.mxu0 0.0
    %3845 = vmatprep.subr.mxu0 0.0
    %3846 = vmatpush1.msra.mxu0 0.0
    %3847 = vmatprep.subr.mxu0 0.0
    %3848 = vmatpush1.msra.mxu0 0.0
    %3849 = vmatprep.subr.mxu0 0.0
    %3850 = vmatpush1.msra.mxu0 0.0
    %3851 = vmatprep.subr.mxu0 0.0
    %3852 = vmatpush1.msra.mxu0 0.0
    %3853 = vmatprep.subr.mxu0 0.0
    %3854 = vmatpush1.msra.mxu0 0.0
    %3855 = vmatprep.subr.mxu0 0.0
    %3856 = vmatpush1.msra.mxu0 0.0
    %3857 = vmatprep.subr.mxu0 0.0
    %3858 = vmatpush1.msra.mxu0 0.0
    %3859 = vmatprep.subr.mxu0 0.0
    %v3860 = vand.u32 %v536, 4294901760
    %3861 = vmatpush1.msra.mxu0 %v3860
    %3862 = vmatprep.subr.mxu0 0.0
    %v3863 = vand.u32 %v535, 4294901760
    %3864 = vmatpush1.msra.mxu0 %v3863
    %3865 = vmatprep.subr.mxu0 0.0
    %v3866 = vand.u32 %v534, 4294901760
    %3867 = vmatpush1.msra.mxu0 %v3866
    %3868 = vmatprep.subr.mxu0 0.0
    %v3869 = vand.u32 %v533, 4294901760
    %3870 = vmatpush1.msra.mxu0 %v3869
    %3871 = vmatprep.subr.mxu0 0.0
    %3872 = vmatpush2.msra.mxu0 0.0
    %3873 = vmatprep.subr.mxu0 0.0
    %3874 = vmatpush2.msra.mxu0 0.0
    %3875 = vmatprep.subr.mxu0 0.0
    %3876 = vmatpush2.msra.mxu0 0.0
    %3877 = vmatprep.subr.mxu0 0.0
    %3878 = vmatpush2.msra.mxu0 0.0
    %3879 = vmatprep.subr.mxu0 0.0
    %3880 = vmatpush2.msra.mxu0 0.0
    %3881 = vmatprep.subr.mxu0 0.0
    %3882 = vmatpush2.msra.mxu0 0.0
    %3883 = vmatprep.subr.mxu0 0.0
    %3884 = vmatpush2.msra.mxu0 0.0
    %3885 = vmatprep.subr.mxu0 0.0
    %3886 = vmatpush2.msra.mxu0 0.0
    %3887 = vmatprep.subr.mxu0 0.0
    %3888 = vmatpush2.msra.mxu0 0.0
    %3889 = vmatprep.subr.mxu0 0.0
    %3890 = vmatpush2.msra.mxu0 0.0
    %3891 = vmatprep.subr.mxu0 0.0
    %3892 = vmatpush2.msra.mxu0 0.0
    %3893 = vmatprep.subr.mxu0 0.0
    %3894 = vmatpush2.msra.mxu0 0.0
    %3895 = vmatprep.subr.mxu0 0.0
    %3896 = vmatpush2.msra.mxu0 0.0
    %3897 = vmatprep.subr.mxu0 0.0
    %3898 = vmatpush2.msra.mxu0 0.0
    %3899 = vmatprep.subr.mxu0 0.0
    %3900 = vmatpush2.msra.mxu0 0.0
    %3901 = vmatprep.subr.mxu0 0.0
    %3902 = vmatpush2.msra.mxu0 0.0
    %3903 = vmatprep.mubr.f32.mxu0 0.0
    %v3904 = vand.u32 %v3833, 4294901760
    %v3905 = vsub.f32 %v3833, %v3904
    %v3906 = vand.u32 %v3905, 4294901760
    %v3907 = vsub.f32 %v3905, %v3906
    %v3908 = vand.u32 %v3907, 4294901760
    %3909 = vmatmul.mubr.f32.gmra.mxu0 %v3908
    %v3910 = vpop.f32.mrf.mxu0
    %v3911 = vadd.f32 0.0, %v3910
    %v3912 = vpop.f32.mrf.mxu0
    %3913 = vdwg.mxu0
    %3914 = vmatprep.subr.mxu0 0.0
    %3915 = vmatpush1.msra.mxu0 0.0
    %3916 = vmatprep.subr.mxu0 0.0
    %3917 = vmatpush1.msra.mxu0 0.0
    %3918 = vmatprep.subr.mxu0 0.0
    %3919 = vmatpush1.msra.mxu0 0.0
    %3920 = vmatprep.subr.mxu0 0.0
    %3921 = vmatpush1.msra.mxu0 0.0
    %3922 = vmatprep.subr.mxu0 0.0
    %3923 = vmatpush1.msra.mxu0 0.0
    %3924 = vmatprep.subr.mxu0 0.0
    %3925 = vmatpush1.msra.mxu0 0.0
    %3926 = vmatprep.subr.mxu0 0.0
    %3927 = vmatpush1.msra.mxu0 0.0
    %3928 = vmatprep.subr.mxu0 0.0
    %3929 = vmatpush1.msra.mxu0 0.0
    %3930 = vmatprep.subr.mxu0 0.0
    %3931 = vmatpush1.msra.mxu0 0.0
    %3932 = vmatprep.subr.mxu0 0.0
    %3933 = vmatpush1.msra.mxu0 0.0
    %3934 = vmatprep.subr.mxu0 0.0
    %3935 = vmatpush1.msra.mxu0 0.0
    %3936 = vmatprep.subr.mxu0 0.0
    %3937 = vmatpush1.msra.mxu0 0.0
    %3938 = vmatprep.subr.mxu0 0.0
    %v3939 = vand.u32 %v536, 4294901760
    %v3940 = vsub.f32 %v536, %v3939
    %v3941 = vand.u32 %v3940, 4294901760
    %v3942 = vsub.f32 %v3940, %v3941
    %v3943 = vand.u32 %v3942, 4294901760
    %3944 = vmatpush1.msra.mxu0 %v3943
    %3945 = vmatprep.subr.mxu0 0.0
    %v3946 = vand.u32 %v535, 4294901760
    %v3947 = vsub.f32 %v535, %v3946
    %v3948 = vand.u32 %v3947, 4294901760
    %v3949 = vsub.f32 %v3947, %v3948
    %v3950 = vand.u32 %v3949, 4294901760
    %3951 = vmatpush1.msra.mxu0 %v3950
    %3952 = vmatprep.subr.mxu0 0.0
    %v3953 = vand.u32 %v534, 4294901760
    %v3954 = vsub.f32 %v534, %v3953
    %v3955 = vand.u32 %v3954, 4294901760
    %v3956 = vsub.f32 %v3954, %v3955
    %v3957 = vand.u32 %v3956, 4294901760
    %3958 = vmatpush1.msra.mxu0 %v3957
    %3959 = vmatprep.subr.mxu0 0.0
    %v3960 = vand.u32 %v533, 4294901760
    %v3961 = vsub.f32 %v533, %v3960
    %v3962 = vand.u32 %v3961, 4294901760
    %v3963 = vsub.f32 %v3961, %v3962
    %v3964 = vand.u32 %v3963, 4294901760
    %3965 = vmatpush1.msra.mxu0 %v3964
    %3966 = vmatprep.subr.mxu0 0.0
    %3967 = vmatpush2.msra.mxu0 0.0
    %3968 = vmatprep.subr.mxu0 0.0
    %3969 = vmatpush2.msra.mxu0 0.0
    %3970 = vmatprep.subr.mxu0 0.0
    %3971 = vmatpush2.msra.mxu0 0.0
    %3972 = vmatprep.subr.mxu0 0.0
    %3973 = vmatpush2.msra.mxu0 0.0
    %3974 = vmatprep.subr.mxu0 0.0
    %3975 = vmatpush2.msra.mxu0 0.0
    %3976 = vmatprep.subr.mxu0 0.0
    %3977 = vmatpush2.msra.mxu0 0.0
    %3978 = vmatprep.subr.mxu0 0.0
    %3979 = vmatpush2.msra.mxu0 0.0
    %3980 = vmatprep.subr.mxu0 0.0
    %3981 = vmatpush2.msra.mxu0 0.0
    %3982 = vmatprep.subr.mxu0 0.0
    %3983 = vmatpush2.msra.mxu0 0.0
    %3984 = vmatprep.subr.mxu0 0.0
    %3985 = vmatpush2.msra.mxu0 0.0
    %3986 = vmatprep.subr.mxu0 0.0
    %3987 = vmatpush2.msra.mxu0 0.0
    %3988 = vmatprep.subr.mxu0 0.0
    %3989 = vmatpush2.msra.mxu0 0.0
    %3990 = vmatprep.subr.mxu0 0.0
    %3991 = vmatpush2.msra.mxu0 0.0
    %3992 = vmatprep.subr.mxu0 0.0
    %3993 = vmatpush2.msra.mxu0 0.0
    %3994 = vmatprep.subr.mxu0 0.0
    %3995 = vmatpush2.msra.mxu0 0.0
    %3996 = vmatprep.subr.mxu0 0.0
    %3997 = vmatpush2.msra.mxu0 0.0
    %3998 = vmatprep.mubr.f32.mxu0 0.0
    %v3999 = vand.u32 %v3833, 4294901760
    %4000 = vmatmul.mubr.f32.gmra.mxu0 %v3999
    %v4001 = vpop.f32.mrf.mxu0
    %v4002 = vadd.f32 %v3911, %v4001
    %v4003 = vpop.f32.mrf.mxu0
    %4004 = vdwg.mxu0
    %4005 = vmatprep.subr.mxu0 0.0
    %4006 = vmatpush1.msra.mxu0 0.0
    %4007 = vmatprep.subr.mxu0 0.0
    %4008 = vmatpush1.msra.mxu0 0.0
    %4009 = vmatprep.subr.mxu0 0.0
    %4010 = vmatpush1.msra.mxu0 0.0
    %4011 = vmatprep.subr.mxu0 0.0
    %4012 = vmatpush1.msra.mxu0 0.0
    %4013 = vmatprep.subr.mxu0 0.0
    %4014 = vmatpush1.msra.mxu0 0.0
    %4015 = vmatprep.subr.mxu0 0.0
    %4016 = vmatpush1.msra.mxu0 0.0
    %4017 = vmatprep.subr.mxu0 0.0
    %4018 = vmatpush1.msra.mxu0 0.0
    %4019 = vmatprep.subr.mxu0 0.0
    %4020 = vmatpush1.msra.mxu0 0.0
    %4021 = vmatprep.subr.mxu0 0.0
    %4022 = vmatpush1.msra.mxu0 0.0
    %4023 = vmatprep.subr.mxu0 0.0
    %4024 = vmatpush1.msra.mxu0 0.0
    %4025 = vmatprep.subr.mxu0 0.0
    %4026 = vmatpush1.msra.mxu0 0.0
    %4027 = vmatprep.subr.mxu0 0.0
    %4028 = vmatpush1.msra.mxu0 0.0
    %4029 = vmatprep.subr.mxu0 0.0
    %v4030 = vand.u32 %v536, 4294901760
    %v4031 = vsub.f32 %v536, %v4030
    %4032 = vmatpush1.msra.mxu0 %v4031
    %4033 = vmatprep.subr.mxu0 0.0
    %v4034 = vand.u32 %v535, 4294901760
    %v4035 = vsub.f32 %v535, %v4034
    %4036 = vmatpush1.msra.mxu0 %v4035
    %4037 = vmatprep.subr.mxu0 0.0
    %v4038 = vand.u32 %v534, 4294901760
    %v4039 = vsub.f32 %v534, %v4038
    %4040 = vmatpush1.msra.mxu0 %v4039
    %4041 = vmatprep.subr.mxu0 0.0
    %v4042 = vand.u32 %v533, 4294901760
    %v4043 = vsub.f32 %v533, %v4042
    %4044 = vmatpush1.msra.mxu0 %v4043
    %4045 = vmatprep.subr.mxu0 0.0
    %4046 = vmatpush2.msra.mxu0 0.0
    %4047 = vmatprep.subr.mxu0 0.0
    %4048 = vmatpush2.msra.mxu0 0.0
    %4049 = vmatprep.subr.mxu0 0.0
    %4050 = vmatpush2.msra.mxu0 0.0
    %4051 = vmatprep.subr.mxu0 0.0
    %4052 = vmatpush2.msra.mxu0 0.0
    %4053 = vmatprep.subr.mxu0 0.0
    %4054 = vmatpush2.msra.mxu0 0.0
    %4055 = vmatprep.subr.mxu0 0.0
    %4056 = vmatpush2.msra.mxu0 0.0
    %4057 = vmatprep.subr.mxu0 0.0
    %4058 = vmatpush2.msra.mxu0 0.0
    %4059 = vmatprep.subr.mxu0 0.0
    %4060 = vmatpush2.msra.mxu0 0.0
    %4061 = vmatprep.subr.mxu0 0.0
    %4062 = vmatpush2.msra.mxu0 0.0
    %4063 = vmatprep.subr.mxu0 0.0
    %4064 = vmatpush2.msra.mxu0 0.0
    %4065 = vmatprep.subr.mxu0 0.0
    %4066 = vmatpush2.msra.mxu0 0.0
    %4067 = vmatprep.subr.mxu0 0.0
    %4068 = vmatpush2.msra.mxu0 0.0
    %4069 = vmatprep.subr.mxu0 0.0
    %4070 = vmatpush2.msra.mxu0 0.0
    %4071 = vmatprep.subr.mxu0 0.0
    %4072 = vmatpush2.msra.mxu0 0.0
    %4073 = vmatprep.subr.mxu0 0.0
    %4074 = vmatpush2.msra.mxu0 0.0
    %4075 = vmatprep.subr.mxu0 0.0
    %4076 = vmatpush2.msra.mxu0 0.0
    %4077 = vmatprep.mubr.f32.mxu0 0.0
    %v4078 = vand.u32 %v3833, 4294901760
    %v4079 = vsub.f32 %v3833, %v4078
    %4080 = vmatmul.mubr.f32.gmra.mxu0 %v4079
    %v4081 = vpop.f32.mrf.mxu0
    %v4082 = vadd.f32 %v4002, %v4081
    %v4083 = vpop.f32.mrf.mxu0
    %4084 = vdwg.mxu0
    %4085 = vmatprep.subr.mxu0 0.0
    %4086 = vmatpush1.msra.mxu0 0.0
    %4087 = vmatprep.subr.mxu0 0.0
    %4088 = vmatpush1.msra.mxu0 0.0
    %4089 = vmatprep.subr.mxu0 0.0
    %4090 = vmatpush1.msra.mxu0 0.0
    %4091 = vmatprep.subr.mxu0 0.0
    %4092 = vmatpush1.msra.mxu0 0.0
    %4093 = vmatprep.subr.mxu0 0.0
    %4094 = vmatpush1.msra.mxu0 0.0
    %4095 = vmatprep.subr.mxu0 0.0
    %4096 = vmatpush1.msra.mxu0 0.0
    %4097 = vmatprep.subr.mxu0 0.0
    %4098 = vmatpush1.msra.mxu0 0.0
    %4099 = vmatprep.subr.mxu0 0.0
    %4100 = vmatpush1.msra.mxu0 0.0
    %4101 = vmatprep.subr.mxu0 0.0
    %4102 = vmatpush1.msra.mxu0 0.0
    %4103 = vmatprep.subr.mxu0 0.0
    %4104 = vmatpush1.msra.mxu0 0.0
    %4105 = vmatprep.subr.mxu0 0.0
    %4106 = vmatpush1.msra.mxu0 0.0
    %4107 = vmatprep.subr.mxu0 0.0
    %4108 = vmatpush1.msra.mxu0 0.0
    %4109 = vmatprep.subr.mxu0 0.0
    %v4110 = vand.u32 %v536, 4294901760
    %4111 = vmatpush1.msra.mxu0 %v4110
    %4112 = vmatprep.subr.mxu0 0.0
    %v4113 = vand.u32 %v535, 4294901760
    %4114 = vmatpush1.msra.mxu0 %v4113
    %4115 = vmatprep.subr.mxu0 0.0
    %v4116 = vand.u32 %v534, 4294901760
    %4117 = vmatpush1.msra.mxu0 %v4116
    %4118 = vmatprep.subr.mxu0 0.0
    %v4119 = vand.u32 %v533, 4294901760
    %4120 = vmatpush1.msra.mxu0 %v4119
    %4121 = vmatprep.subr.mxu0 0.0
    %4122 = vmatpush2.msra.mxu0 0.0
    %4123 = vmatprep.subr.mxu0 0.0
    %4124 = vmatpush2.msra.mxu0 0.0
    %4125 = vmatprep.subr.mxu0 0.0
    %4126 = vmatpush2.msra.mxu0 0.0
    %4127 = vmatprep.subr.mxu0 0.0
    %4128 = vmatpush2.msra.mxu0 0.0
    %4129 = vmatprep.subr.mxu0 0.0
    %4130 = vmatpush2.msra.mxu0 0.0
    %4131 = vmatprep.subr.mxu0 0.0
    %4132 = vmatpush2.msra.mxu0 0.0
    %4133 = vmatprep.subr.mxu0 0.0
    %4134 = vmatpush2.msra.mxu0 0.0
    %4135 = vmatprep.subr.mxu0 0.0
    %4136 = vmatpush2.msra.mxu0 0.0
    %4137 = vmatprep.subr.mxu0 0.0
    %4138 = vmatpush2.msra.mxu0 0.0
    %4139 = vmatprep.subr.mxu0 0.0
    %4140 = vmatpush2.msra.mxu0 0.0
    %4141 = vmatprep.subr.mxu0 0.0
    %4142 = vmatpush2.msra.mxu0 0.0
    %4143 = vmatprep.subr.mxu0 0.0
    %4144 = vmatpush2.msra.mxu0 0.0
    %4145 = vmatprep.subr.mxu0 0.0
    %4146 = vmatpush2.msra.mxu0 0.0
    %4147 = vmatprep.subr.mxu0 0.0
    %4148 = vmatpush2.msra.mxu0 0.0
    %4149 = vmatprep.subr.mxu0 0.0
    %4150 = vmatpush2.msra.mxu0 0.0
    %4151 = vmatprep.subr.mxu0 0.0
    %4152 = vmatpush2.msra.mxu0 0.0
    %4153 = vmatprep.mubr.f32.mxu0 0.0
    %v4154 = vand.u32 %v3833, 4294901760
    %v4155 = vsub.f32 %v3833, %v4154
    %v4156 = vand.u32 %v4155, 4294901760
    %4157 = vmatmul.mubr.f32.gmra.mxu0 %v4156
    %v4158 = vpop.f32.mrf.mxu0
    %v4159 = vadd.f32 %v4082, %v4158
    %v4160 = vpop.f32.mrf.mxu0
    %4161 = vdwg.mxu0
    %4162 = vmatprep.subr.mxu0 0.0
    %4163 = vmatpush1.msra.mxu0 0.0
    %4164 = vmatprep.subr.mxu0 0.0
    %4165 = vmatpush1.msra.mxu0 0.0
    %4166 = vmatprep.subr.mxu0 0.0
    %4167 = vmatpush1.msra.mxu0 0.0
    %4168 = vmatprep.subr.mxu0 0.0
    %4169 = vmatpush1.msra.mxu0 0.0
    %4170 = vmatprep.subr.mxu0 0.0
    %4171 = vmatpush1.msra.mxu0 0.0
    %4172 = vmatprep.subr.mxu0 0.0
    %4173 = vmatpush1.msra.mxu0 0.0
    %4174 = vmatprep.subr.mxu0 0.0
    %4175 = vmatpush1.msra.mxu0 0.0
    %4176 = vmatprep.subr.mxu0 0.0
    %4177 = vmatpush1.msra.mxu0 0.0
    %4178 = vmatprep.subr.mxu0 0.0
    %4179 = vmatpush1.msra.mxu0 0.0
    %4180 = vmatprep.subr.mxu0 0.0
    %4181 = vmatpush1.msra.mxu0 0.0
    %4182 = vmatprep.subr.mxu0 0.0
    %4183 = vmatpush1.msra.mxu0 0.0
    %4184 = vmatprep.subr.mxu0 0.0
    %4185 = vmatpush1.msra.mxu0 0.0
    %4186 = vmatprep.subr.mxu0 0.0
    %v4187 = vand.u32 %v536, 4294901760
    %v4188 = vsub.f32 %v536, %v4187
    %v4189 = vand.u32 %v4188, 4294901760
    %4190 = vmatpush1.msra.mxu0 %v4189
    %4191 = vmatprep.subr.mxu0 0.0
    %v4192 = vand.u32 %v535, 4294901760
    %v4193 = vsub.f32 %v535, %v4192
    %v4194 = vand.u32 %v4193, 4294901760
    %4195 = vmatpush1.msra.mxu0 %v4194
    %4196 = vmatprep.subr.mxu0 0.0
    %v4197 = vand.u32 %v534, 4294901760
    %v4198 = vsub.f32 %v534, %v4197
    %v4199 = vand.u32 %v4198, 4294901760
    %4200 = vmatpush1.msra.mxu0 %v4199
    %4201 = vmatprep.subr.mxu0 0.0
    %v4202 = vand.u32 %v533, 4294901760
    %v4203 = vsub.f32 %v533, %v4202
    %v4204 = vand.u32 %v4203, 4294901760
    %4205 = vmatpush1.msra.mxu0 %v4204
    %4206 = vmatprep.subr.mxu0 0.0
    %4207 = vmatpush2.msra.mxu0 0.0
    %4208 = vmatprep.subr.mxu0 0.0
    %4209 = vmatpush2.msra.mxu0 0.0
    %4210 = vmatprep.subr.mxu0 0.0
    %4211 = vmatpush2.msra.mxu0 0.0
    %4212 = vmatprep.subr.mxu0 0.0
    %4213 = vmatpush2.msra.mxu0 0.0
    %4214 = vmatprep.subr.mxu0 0.0
    %4215 = vmatpush2.msra.mxu0 0.0
    %4216 = vmatprep.subr.mxu0 0.0
    %4217 = vmatpush2.msra.mxu0 0.0
    %4218 = vmatprep.subr.mxu0 0.0
    %4219 = vmatpush2.msra.mxu0 0.0
    %4220 = vmatprep.subr.mxu0 0.0
    %4221 = vmatpush2.msra.mxu0 0.0
    %4222 = vmatprep.subr.mxu0 0.0
    %4223 = vmatpush2.msra.mxu0 0.0
    %4224 = vmatprep.subr.mxu0 0.0
    %4225 = vmatpush2.msra.mxu0 0.0
    %4226 = vmatprep.subr.mxu0 0.0
    %4227 = vmatpush2.msra.mxu0 0.0
    %4228 = vmatprep.subr.mxu0 0.0
    %4229 = vmatpush2.msra.mxu0 0.0
    %4230 = vmatprep.subr.mxu0 0.0
    %4231 = vmatpush2.msra.mxu0 0.0
    %4232 = vmatprep.subr.mxu0 0.0
    %4233 = vmatpush2.msra.mxu0 0.0
    %4234 = vmatprep.subr.mxu0 0.0
    %4235 = vmatpush2.msra.mxu0 0.0
    %4236 = vmatprep.subr.mxu0 0.0
    %4237 = vmatpush2.msra.mxu0 0.0
    %4238 = vmatprep.mubr.f32.mxu0 0.0
    %v4239 = vand.u32 %v3833, 4294901760
    %4240 = vmatmul.mubr.f32.gmra.mxu0 %v4239
    %v4241 = vpop.f32.mrf.mxu0
    %v4242 = vadd.f32 %v4159, %v4241
    %v4243 = vpop.f32.mrf.mxu0
    %4244 = vdwg.mxu0
    %4245 = vmatprep.subr.mxu0 0.0
    %4246 = vmatpush1.msra.mxu0 0.0
    %4247 = vmatprep.subr.mxu0 0.0
    %4248 = vmatpush1.msra.mxu0 0.0
    %4249 = vmatprep.subr.mxu0 0.0
    %4250 = vmatpush1.msra.mxu0 0.0
    %4251 = vmatprep.subr.mxu0 0.0
    %4252 = vmatpush1.msra.mxu0 0.0
    %4253 = vmatprep.subr.mxu0 0.0
    %4254 = vmatpush1.msra.mxu0 0.0
    %4255 = vmatprep.subr.mxu0 0.0
    %4256 = vmatpush1.msra.mxu0 0.0
    %4257 = vmatprep.subr.mxu0 0.0
    %4258 = vmatpush1.msra.mxu0 0.0
    %4259 = vmatprep.subr.mxu0 0.0
    %4260 = vmatpush1.msra.mxu0 0.0
    %4261 = vmatprep.subr.mxu0 0.0
    %4262 = vmatpush1.msra.mxu0 0.0
    %4263 = vmatprep.subr.mxu0 0.0
    %4264 = vmatpush1.msra.mxu0 0.0
    %4265 = vmatprep.subr.mxu0 0.0
    %4266 = vmatpush1.msra.mxu0 0.0
    %4267 = vmatprep.subr.mxu0 0.0
    %4268 = vmatpush1.msra.mxu0 0.0
    %4269 = vmatprep.subr.mxu0 0.0
    %v4270 = vand.u32 %v536, 4294901760
    %4271 = vmatpush1.msra.mxu0 %v4270
    %4272 = vmatprep.subr.mxu0 0.0
    %v4273 = vand.u32 %v535, 4294901760
    %4274 = vmatpush1.msra.mxu0 %v4273
    %4275 = vmatprep.subr.mxu0 0.0
    %v4276 = vand.u32 %v534, 4294901760
    %4277 = vmatpush1.msra.mxu0 %v4276
    %4278 = vmatprep.subr.mxu0 0.0
    %v4279 = vand.u32 %v533, 4294901760
    %4280 = vmatpush1.msra.mxu0 %v4279
    %4281 = vmatprep.subr.mxu0 0.0
    %4282 = vmatpush2.msra.mxu0 0.0
    %4283 = vmatprep.subr.mxu0 0.0
    %4284 = vmatpush2.msra.mxu0 0.0
    %4285 = vmatprep.subr.mxu0 0.0
    %4286 = vmatpush2.msra.mxu0 0.0
    %4287 = vmatprep.subr.mxu0 0.0
    %4288 = vmatpush2.msra.mxu0 0.0
    %4289 = vmatprep.subr.mxu0 0.0
    %4290 = vmatpush2.msra.mxu0 0.0
    %4291 = vmatprep.subr.mxu0 0.0
    %4292 = vmatpush2.msra.mxu0 0.0
    %4293 = vmatprep.subr.mxu0 0.0
    %4294 = vmatpush2.msra.mxu0 0.0
    %4295 = vmatprep.subr.mxu0 0.0
    %4296 = vmatpush2.msra.mxu0 0.0
    %4297 = vmatprep.subr.mxu0 0.0
    %4298 = vmatpush2.msra.mxu0 0.0
    %4299 = vmatprep.subr.mxu0 0.0
    %4300 = vmatpush2.msra.mxu0 0.0
    %4301 = vmatprep.subr.mxu0 0.0
    %4302 = vmatpush2.msra.mxu0 0.0
    %4303 = vmatprep.subr.mxu0 0.0
    %4304 = vmatpush2.msra.mxu0 0.0
    %4305 = vmatprep.subr.mxu0 0.0
    %4306 = vmatpush2.msra.mxu0 0.0
    %4307 = vmatprep.subr.mxu0 0.0
    %4308 = vmatpush2.msra.mxu0 0.0
    %4309 = vmatprep.subr.mxu0 0.0
    %4310 = vmatpush2.msra.mxu0 0.0
    %4311 = vmatprep.subr.mxu0 0.0
    %4312 = vmatpush2.msra.mxu0 0.0
    %4313 = vmatprep.mubr.f32.mxu0 0.0
    %v4314 = vand.u32 %v3833, 4294901760
    %4315 = vmatmul.mubr.f32.gmra.mxu0 %v4314
    %v4316 = vpop.f32.mrf.mxu0
    %v4317 = vadd.f32 %v4242, %v4316
    %v4318 = vpop.f32.mrf.mxu0
    %4319 = vdwg.mxu0
    %v4320 = vmul.f32 %v3819, %v3819
    %v4321 = vsel %vm1074, %v4320, 0.0
    %4322 = vadd.xlane.f32.xlu0 %v4321
    %v4323 = vpop.xlane.xlu0 %4322
    %v4324 = vsub.f32 0.0, %v3786
    %v4325 = vstv %s3823
    %v4326 = vadd.f32 %v4325, %v3831
    %v4327 = vstv %s3829
    %v4328 = vrcp.pop %v4326
    %v4329 = vmul.f32 %v4327, %v4328
    %v4330 = vmul.f32 %v4329, %v4329
    %v4331 = vadd.f32 %v4323, %v4330
    %v4332 = vmul.f32 %v3786, %v4331
    %v4333 = vadd.f32 %v4324, %v4332
    %v4334 = vmul.f32 %v4333, 0.1
    %v4335 = vadd.f32 %v3786, %v4334
    %v4336 = vmax.f32 %v4335, 0.0
    %v4337 = vsub.f32 %v4336, %v3831
    %v4338 = vsub.f32 0.0, %v3796
    %v4339 = vmul.f32 %v3830, %v3831
    %v4340 = vadd.f32 %v4338, %v4339
    %v4341 = vadd.f32 %v4340, 1.0
    %v4342 = vmul.f32 %v4337, 0.1
    %v4343 = vadd.f32 %v4341, %v4342
    %v4344 = vmul.f32 %v4343, 0.1
    %v4345 = vadd.f32 %v3796, %v4344
    %v4346 = vsub.f32 0.0, %v3818
    %v4347 = vstv %s3828
    %v4348 = vmul.f32 %v4347, %v530
    %v4350 = vrot.slane %v4348, 6
    %v4352 = vadd.f32 %v4346, %v4350
    %v4353 = vrcp.pop %v3830
    %v4354 = vmul.f32 1.0, %v4353
    %v4355 = vstv %s3827
    %v4356 = vmul.f32 %v4354, %v4355
    %v4357 = vmul.f32 %v4356, %v4317
    %v4358 = vadd.f32 %v4352, %v4357
    %v4359 = vmul.f32 %v4358, 0.2
    %v4360 = vstv %s3821
    %v4361 = vmul.f32 %v4360, %v4317
    %4363 = vrot.lane.b32.xlu0 %v4361, 96
    %v4364 = vpop.permute.xlu0 %4363
    %v4366 = vadd.f32 %v4359, %v4364
    %v4367 = vadd.f32 %v3818, %v4366
    %v4368 = vmax.f32 %v4367, 0.0
    %4369 = vst.msk [vmem:[#allocation2 + $0x8] sm:$0x1] %vm1074, %v4368
    %s4370 = sld [smem:[#allocation3 + $0x7]]
    %s4371 = sld [smem:[#allocation8 + $0x7]]
    %s4372 = smax.f32 %s4371, 0.0
    %s4373 = sadd.f32 %s4372, 1.0
    %v4374 = vstv %s4373
    %v4375 = vrcp.pop %v4374
    %s4376 = vtos %v4375
    %s4377 = smul.f32 %s4372, %s4376
    %v4378 = vmax.f32 %v4345, 0.0
    %v4380 = vsel %vm537, %v4368, 0
    %4382 = vmatprep.subr.mxu0 0.0
    %4383 = vmatpush1.msra.mxu0 0.0
    %4384 = vmatprep.subr.mxu0 0.0
    %4385 = vmatpush1.msra.mxu0 0.0
    %4386 = vmatprep.subr.mxu0 0.0
    %4387 = vmatpush1.msra.mxu0 0.0
    %4388 = vmatprep.subr.mxu0 0.0
    %4389 = vmatpush1.msra.mxu0 0.0
    %4390 = vmatprep.subr.mxu0 0.0
    %4391 = vmatpush1.msra.mxu0 0.0
    %4392 = vmatprep.subr.mxu0 0.0
    %4393 = vmatpush1.msra.mxu0 0.0
    %4394 = vmatprep.subr.mxu0 0.0
    %4395 = vmatpush1.msra.mxu0 0.0
    %4396 = vmatprep.subr.mxu0 0.0
    %4397 = vmatpush1.msra.mxu0 0.0
    %4398 = vmatprep.subr.mxu0 0.0
    %4399 = vmatpush1.msra.mxu0 0.0
    %4400 = vmatprep.subr.mxu0 0.0
    %4401 = vmatpush1.msra.mxu0 0.0
    %4402 = vmatprep.subr.mxu0 0.0
    %4403 = vmatpush1.msra.mxu0 0.0
    %4404 = vmatprep.subr.mxu0 0.0
    %4405 = vmatpush1.msra.mxu0 0.0
    %4406 = vmatprep.subr.mxu0 0.0
    %v4407 = vand.u32 %v536, 4294901760
    %4408 = vmatpush1.msra.mxu0 %v4407
    %4409 = vmatprep.subr.mxu0 0.0
    %v4410 = vand.u32 %v535, 4294901760
    %4411 = vmatpush1.msra.mxu0 %v4410
    %4412 = vmatprep.subr.mxu0 0.0
    %v4413 = vand.u32 %v534, 4294901760
    %4414 = vmatpush1.msra.mxu0 %v4413
    %4415 = vmatprep.subr.mxu0 0.0
    %v4416 = vand.u32 %v533, 4294901760
    %4417 = vmatpush1.msra.mxu0 %v4416
    %4418 = vmatprep.subr.mxu0 0.0
    %4419 = vmatpush2.msra.mxu0 0.0
    %4420 = vmatprep.subr.mxu0 0.0
    %4421 = vmatpush2.msra.mxu0 0.0
    %4422 = vmatprep.subr.mxu0 0.0
    %4423 = vmatpush2.msra.mxu0 0.0
    %4424 = vmatprep.subr.mxu0 0.0
    %4425 = vmatpush2.msra.mxu0 0.0
    %4426 = vmatprep.subr.mxu0 0.0
    %4427 = vmatpush2.msra.mxu0 0.0
    %4428 = vmatprep.subr.mxu0 0.0
    %4429 = vmatpush2.msra.mxu0 0.0
    %4430 = vmatprep.subr.mxu0 0.0
    %4431 = vmatpush2.msra.mxu0 0.0
    %4432 = vmatprep.subr.mxu0 0.0
    %4433 = vmatpush2.msra.mxu0 0.0
    %4434 = vmatprep.subr.mxu0 0.0
    %4435 = vmatpush2.msra.mxu0 0.0
    %4436 = vmatprep.subr.mxu0 0.0
    %4437 = vmatpush2.msra.mxu0 0.0
    %4438 = vmatprep.subr.mxu0 0.0
    %4439 = vmatpush2.msra.mxu0 0.0
    %4440 = vmatprep.subr.mxu0 0.0
    %4441 = vmatpush2.msra.mxu0 0.0
    %4442 = vmatprep.subr.mxu0 0.0
    %4443 = vmatpush2.msra.mxu0 0.0
    %4444 = vmatprep.subr.mxu0 0.0
    %4445 = vmatpush2.msra.mxu0 0.0
    %4446 = vmatprep.subr.mxu0 0.0
    %4447 = vmatpush2.msra.mxu0 0.0
    %4448 = vmatprep.subr.mxu0 0.0
    %4449 = vmatpush2.msra.mxu0 0.0
    %4450 = vmatprep.mubr.f32.mxu0 0.0
    %v4451 = vand.u32 %v4380, 4294901760
    %v4452 = vsub.f32 %v4380, %v4451
    %v4453 = vand.u32 %v4452, 4294901760
    %v4454 = vsub.f32 %v4452, %v4453
    %v4455 = vand.u32 %v4454, 4294901760
    %4456 = vmatmul.mubr.f32.gmra.mxu0 %v4455
    %v4457 = vpop.f32.mrf.mxu0
    %v4458 = vadd.f32 0.0, %v4457
    %v4459 = vpop.f32.mrf.mxu0
    %4460 = vdwg.mxu0
    %4461 = vmatprep.subr.mxu0 0.0
    %4462 = vmatpush1.msra.mxu0 0.0
    %4463 = vmatprep.subr.mxu0 0.0
    %4464 = vmatpush1.msra.mxu0 0.0
    %4465 = vmatprep.subr.mxu0 0.0
    %4466 = vmatpush1.msra.mxu0 0.0
    %4467 = vmatprep.subr.mxu0 0.0
    %4468 = vmatpush1.msra.mxu0 0.0
    %4469 = vmatprep.subr.mxu0 0.0
    %4470 = vmatpush1.msra.mxu0 0.0
    %4471 = vmatprep.subr.mxu0 0.0
    %4472 = vmatpush1.msra.mxu0 0.0
    %4473 = vmatprep.subr.mxu0 0.0
    %4474 = vmatpush1.msra.mxu0 0.0
    %4475 = vmatprep.subr.mxu0 0.0
    %4476 = vmatpush1.msra.mxu0 0.0
    %4477 = vmatprep.subr.mxu0 0.0
    %4478 = vmatpush1.msra.mxu0 0.0
    %4479 = vmatprep.subr.mxu0 0.0
    %4480 = vmatpush1.msra.mxu0 0.0
    %4481 = vmatprep.subr.mxu0 0.0
    %4482 = vmatpush1.msra.mxu0 0.0
    %4483 = vmatprep.subr.mxu0 0.0
    %4484 = vmatpush1.msra.mxu0 0.0
    %4485 = vmatprep.subr.mxu0 0.0
    %v4486 = vand.u32 %v536, 4294901760
    %v4487 = vsub.f32 %v536, %v4486
    %v4488 = vand.u32 %v4487, 4294901760
    %v4489 = vsub.f32 %v4487, %v4488
    %v4490 = vand.u32 %v4489, 4294901760
    %4491 = vmatpush1.msra.mxu0 %v4490
    %4492 = vmatprep.subr.mxu0 0.0
    %v4493 = vand.u32 %v535, 4294901760
    %v4494 = vsub.f32 %v535, %v4493
    %v4495 = vand.u32 %v4494, 4294901760
    %v4496 = vsub.f32 %v4494, %v4495
    %v4497 = vand.u32 %v4496, 4294901760
    %4498 = vmatpush1.msra.mxu0 %v4497
    %4499 = vmatprep.subr.mxu0 0.0
    %v4500 = vand.u32 %v534, 4294901760
    %v4501 = vsub.f32 %v534, %v4500
    %v4502 = vand.u32 %v4501, 4294901760
    %v4503 = vsub.f32 %v4501, %v4502
    %v4504 = vand.u32 %v4503, 4294901760
    %4505 = vmatpush1.msra.mxu0 %v4504
    %4506 = vmatprep.subr.mxu0 0.0
    %v4507 = vand.u32 %v533, 4294901760
    %v4508 = vsub.f32 %v533, %v4507
    %v4509 = vand.u32 %v4508, 4294901760
    %v4510 = vsub.f32 %v4508, %v4509
    %v4511 = vand.u32 %v4510, 4294901760
    %4512 = vmatpush1.msra.mxu0 %v4511
    %4513 = vmatprep.subr.mxu0 0.0
    %4514 = vmatpush2.msra.mxu0 0.0
    %4515 = vmatprep.subr.mxu0 0.0
    %4516 = vmatpush2.msra.mxu0 0.0
    %4517 = vmatprep.subr.mxu0 0.0
    %4518 = vmatpush2.msra.mxu0 0.0
    %4519 = vmatprep.subr.mxu0 0.0
    %4520 = vmatpush2.msra.mxu0 0.0
    %4521 = vmatprep.subr.mxu0 0.0
    %4522 = vmatpush2.msra.mxu0 0.0
    %4523 = vmatprep.subr.mxu0 0.0
    %4524 = vmatpush2.msra.mxu0 0.0
    %4525 = vmatprep.subr.mxu0 0.0
    %4526 = vmatpush2.msra.mxu0 0.0
    %4527 = vmatprep.subr.mxu0 0.0
    %4528 = vmatpush2.msra.mxu0 0.0
    %4529 = vmatprep.subr.mxu0 0.0
    %4530 = vmatpush2.msra.mxu0 0.0
    %4531 = vmatprep.subr.mxu0 0.0
    %4532 = vmatpush2.msra.mxu0 0.0
    %4533 = vmatprep.subr.mxu0 0.0
    %4534 = vmatpush2.msra.mxu0 0.0
    %4535 = vmatprep.subr.mxu0 0.0
    %4536 = vmatpush2.msra.mxu0 0.0
    %4537 = vmatprep.subr.mxu0 0.0
    %4538 = vmatpush2.msra.mxu0 0.0
    %4539 = vmatprep.subr.mxu0 0.0
    %4540 = vmatpush2.msra.mxu0 0.0
    %4541 = vmatprep.subr.mxu0 0.0
    %4542 = vmatpush2.msra.mxu0 0.0
    %4543 = vmatprep.subr.mxu0 0.0
    %4544 = vmatpush2.msra.mxu0 0.0
    %4545 = vmatprep.mubr.f32.mxu0 0.0
    %v4546 = vand.u32 %v4380, 4294901760
    %4547 = vmatmul.mubr.f32.gmra.mxu0 %v4546
    %v4548 = vpop.f32.mrf.mxu0
    %v4549 = vadd.f32 %v4458, %v4548
    %v4550 = vpop.f32.mrf.mxu0
    %4551 = vdwg.mxu0
    %4552 = vmatprep.subr.mxu0 0.0
    %4553 = vmatpush1.msra.mxu0 0.0
    %4554 = vmatprep.subr.mxu0 0.0
    %4555 = vmatpush1.msra.mxu0 0.0
    %4556 = vmatprep.subr.mxu0 0.0
    %4557 = vmatpush1.msra.mxu0 0.0
    %4558 = vmatprep.subr.mxu0 0.0
    %4559 = vmatpush1.msra.mxu0 0.0
    %4560 = vmatprep.subr.mxu0 0.0
    %4561 = vmatpush1.msra.mxu0 0.0
    %4562 = vmatprep.subr.mxu0 0.0
    %4563 = vmatpush1.msra.mxu0 0.0
    %4564 = vmatprep.subr.mxu0 0.0
    %4565 = vmatpush1.msra.mxu0 0.0
    %4566 = vmatprep.subr.mxu0 0.0
    %4567 = vmatpush1.msra.mxu0 0.0
    %4568 = vmatprep.subr.mxu0 0.0
    %4569 = vmatpush1.msra.mxu0 0.0
    %4570 = vmatprep.subr.mxu0 0.0
    %4571 = vmatpush1.msra.mxu0 0.0
    %4572 = vmatprep.subr.mxu0 0.0
    %4573 = vmatpush1.msra.mxu0 0.0
    %4574 = vmatprep.subr.mxu0 0.0
    %4575 = vmatpush1.msra.mxu0 0.0
    %4576 = vmatprep.subr.mxu0 0.0
    %v4577 = vand.u32 %v536, 4294901760
    %v4578 = vsub.f32 %v536, %v4577
    %4579 = vmatpush1.msra.mxu0 %v4578
    %4580 = vmatprep.subr.mxu0 0.0
    %v4581 = vand.u32 %v535, 4294901760
    %v4582 = vsub.f32 %v535, %v4581
    %4583 = vmatpush1.msra.mxu0 %v4582
    %4584 = vmatprep.subr.mxu0 0.0
    %v4585 = vand.u32 %v534, 4294901760
    %v4586 = vsub.f32 %v534, %v4585
    %4587 = vmatpush1.msra.mxu0 %v4586
    %4588 = vmatprep.subr.mxu0 0.0
    %v4589 = vand.u32 %v533, 4294901760
    %v4590 = vsub.f32 %v533, %v4589
    %4591 = vmatpush1.msra.mxu0 %v4590
    %4592 = vmatprep.subr.mxu0 0.0
    %4593 = vmatpush2.msra.mxu0 0.0
    %4594 = vmatprep.subr.mxu0 0.0
    %4595 = vmatpush2.msra.mxu0 0.0
    %4596 = vmatprep.subr.mxu0 0.0
    %4597 = vmatpush2.msra.mxu0 0.0
    %4598 = vmatprep.subr.mxu0 0.0
    %4599 = vmatpush2.msra.mxu0 0.0
    %4600 = vmatprep.subr.mxu0 0.0
    %4601 = vmatpush2.msra.mxu0 0.0
    %4602 = vmatprep.subr.mxu0 0.0
    %4603 = vmatpush2.msra.mxu0 0.0
    %4604 = vmatprep.subr.mxu0 0.0
    %4605 = vmatpush2.msra.mxu0 0.0
    %4606 = vmatprep.subr.mxu0 0.0
    %4607 = vmatpush2.msra.mxu0 0.0
    %4608 = vmatprep.subr.mxu0 0.0
    %4609 = vmatpush2.msra.mxu0 0.0
    %4610 = vmatprep.subr.mxu0 0.0
    %4611 = vmatpush2.msra.mxu0 0.0
    %4612 = vmatprep.subr.mxu0 0.0
    %4613 = vmatpush2.msra.mxu0 0.0
    %4614 = vmatprep.subr.mxu0 0.0
    %4615 = vmatpush2.msra.mxu0 0.0
    %4616 = vmatprep.subr.mxu0 0.0
    %4617 = vmatpush2.msra.mxu0 0.0
    %4618 = vmatprep.subr.mxu0 0.0
    %4619 = vmatpush2.msra.mxu0 0.0
    %4620 = vmatprep.subr.mxu0 0.0
    %4621 = vmatpush2.msra.mxu0 0.0
    %4622 = vmatprep.subr.mxu0 0.0
    %4623 = vmatpush2.msra.mxu0 0.0
    %4624 = vmatprep.mubr.f32.mxu0 0.0
    %v4625 = vand.u32 %v4380, 4294901760
    %v4626 = vsub.f32 %v4380, %v4625
    %4627 = vmatmul.mubr.f32.gmra.mxu0 %v4626
    %v4628 = vpop.f32.mrf.mxu0
    %v4629 = vadd.f32 %v4549, %v4628
    %v4630 = vpop.f32.mrf.mxu0
    %4631 = vdwg.mxu0
    %4632 = vmatprep.subr.mxu0 0.0
    %4633 = vmatpush1.msra.mxu0 0.0
    %4634 = vmatprep.subr.mxu0 0.0
    %4635 = vmatpush1.msra.mxu0 0.0
    %4636 = vmatprep.subr.mxu0 0.0
    %4637 = vmatpush1.msra.mxu0 0.0
    %4638 = vmatprep.subr.mxu0 0.0
    %4639 = vmatpush1.msra.mxu0 0.0
    %4640 = vmatprep.subr.mxu0 0.0
    %4641 = vmatpush1.msra.mxu0 0.0
    %4642 = vmatprep.subr.mxu0 0.0
    %4643 = vmatpush1.msra.mxu0 0.0
    %4644 = vmatprep.subr.mxu0 0.0
    %4645 = vmatpush1.msra.mxu0 0.0
    %4646 = vmatprep.subr.mxu0 0.0
    %4647 = vmatpush1.msra.mxu0 0.0
    %4648 = vmatprep.subr.mxu0 0.0
    %4649 = vmatpush1.msra.mxu0 0.0
    %4650 = vmatprep.subr.mxu0 0.0
    %4651 = vmatpush1.msra.mxu0 0.0
    %4652 = vmatprep.subr.mxu0 0.0
    %4653 = vmatpush1.msra.mxu0 0.0
    %4654 = vmatprep.subr.mxu0 0.0
    %4655 = vmatpush1.msra.mxu0 0.0
    %4656 = vmatprep.subr.mxu0 0.0
    %v4657 = vand.u32 %v536, 4294901760
    %4658 = vmatpush1.msra.mxu0 %v4657
    %4659 = vmatprep.subr.mxu0 0.0
    %v4660 = vand.u32 %v535, 4294901760
    %4661 = vmatpush1.msra.mxu0 %v4660
    %4662 = vmatprep.subr.mxu0 0.0
    %v4663 = vand.u32 %v534, 4294901760
    %4664 = vmatpush1.msra.mxu0 %v4663
    %4665 = vmatprep.subr.mxu0 0.0
    %v4666 = vand.u32 %v533, 4294901760
    %4667 = vmatpush1.msra.mxu0 %v4666
    %4668 = vmatprep.subr.mxu0 0.0
    %4669 = vmatpush2.msra.mxu0 0.0
    %4670 = vmatprep.subr.mxu0 0.0
    %4671 = vmatpush2.msra.mxu0 0.0
    %4672 = vmatprep.subr.mxu0 0.0
    %4673 = vmatpush2.msra.mxu0 0.0
    %4674 = vmatprep.subr.mxu0 0.0
    %4675 = vmatpush2.msra.mxu0 0.0
    %4676 = vmatprep.subr.mxu0 0.0
    %4677 = vmatpush2.msra.mxu0 0.0
    %4678 = vmatprep.subr.mxu0 0.0
    %4679 = vmatpush2.msra.mxu0 0.0
    %4680 = vmatprep.subr.mxu0 0.0
    %4681 = vmatpush2.msra.mxu0 0.0
    %4682 = vmatprep.subr.mxu0 0.0
    %4683 = vmatpush2.msra.mxu0 0.0
    %4684 = vmatprep.subr.mxu0 0.0
    %4685 = vmatpush2.msra.mxu0 0.0
    %4686 = vmatprep.subr.mxu0 0.0
    %4687 = vmatpush2.msra.mxu0 0.0
    %4688 = vmatprep.subr.mxu0 0.0
    %4689 = vmatpush2.msra.mxu0 0.0
    %4690 = vmatprep.subr.mxu0 0.0
    %4691 = vmatpush2.msra.mxu0 0.0
    %4692 = vmatprep.subr.mxu0 0.0
    %4693 = vmatpush2.msra.mxu0 0.0
    %4694 = vmatprep.subr.mxu0 0.0
    %4695 = vmatpush2.msra.mxu0 0.0
    %4696 = vmatprep.subr.mxu0 0.0
    %4697 = vmatpush2.msra.mxu0 0.0
    %4698 = vmatprep.subr.mxu0 0.0
    %4699 = vmatpush2.msra.mxu0 0.0
    %4700 = vmatprep.mubr.f32.mxu0 0.0
    %v4701 = vand.u32 %v4380, 4294901760
    %v4702 = vsub.f32 %v4380, %v4701
    %v4703 = vand.u32 %v4702, 4294901760
    %4704 = vmatmul.mubr.f32.gmra.mxu0 %v4703
    %v4705 = vpop.f32.mrf.mxu0
    %v4706 = vadd.f32 %v4629, %v4705
    %v4707 = vpop.f32.mrf.mxu0
    %4708 = vdwg.mxu0
    %4709 = vmatprep.subr.mxu0 0.0
    %4710 = vmatpush1.msra.mxu0 0.0
    %4711 = vmatprep.subr.mxu0 0.0
    %4712 = vmatpush1.msra.mxu0 0.0
    %4713 = vmatprep.subr.mxu0 0.0
    %4714 = vmatpush1.msra.mxu0 0.0
    %4715 = vmatprep.subr.mxu0 0.0
    %4716 = vmatpush1.msra.mxu0 0.0
    %4717 = vmatprep.subr.mxu0 0.0
    %4718 = vmatpush1.msra.mxu0 0.0
    %4719 = vmatprep.subr.mxu0 0.0
    %4720 = vmatpush1.msra.mxu0 0.0
    %4721 = vmatprep.subr.mxu0 0.0
    %4722 = vmatpush1.msra.mxu0 0.0
    %4723 = vmatprep.subr.mxu0 0.0
    %4724 = vmatpush1.msra.mxu0 0.0
    %4725 = vmatprep.subr.mxu0 0.0
    %4726 = vmatpush1.msra.mxu0 0.0
    %4727 = vmatprep.subr.mxu0 0.0
    %4728 = vmatpush1.msra.mxu0 0.0
    %4729 = vmatprep.subr.mxu0 0.0
    %4730 = vmatpush1.msra.mxu0 0.0
    %4731 = vmatprep.subr.mxu0 0.0
    %4732 = vmatpush1.msra.mxu0 0.0
    %4733 = vmatprep.subr.mxu0 0.0
    %v4734 = vand.u32 %v536, 4294901760
    %v4735 = vsub.f32 %v536, %v4734
    %v4736 = vand.u32 %v4735, 4294901760
    %4737 = vmatpush1.msra.mxu0 %v4736
    %4738 = vmatprep.subr.mxu0 0.0
    %v4739 = vand.u32 %v535, 4294901760
    %v4740 = vsub.f32 %v535, %v4739
    %v4741 = vand.u32 %v4740, 4294901760
    %4742 = vmatpush1.msra.mxu0 %v4741
    %4743 = vmatprep.subr.mxu0 0.0
    %v4744 = vand.u32 %v534, 4294901760
    %v4745 = vsub.f32 %v534, %v4744
    %v4746 = vand.u32 %v4745, 4294901760
    %4747 = vmatpush1.msra.mxu0 %v4746
    %4748 = vmatprep.subr.mxu0 0.0
    %v4749 = vand.u32 %v533, 4294901760
    %v4750 = vsub.f32 %v533, %v4749
    %v4751 = vand.u32 %v4750, 4294901760
    %4752 = vmatpush1.msra.mxu0 %v4751
    %4753 = vmatprep.subr.mxu0 0.0
    %4754 = vmatpush2.msra.mxu0 0.0
    %4755 = vmatprep.subr.mxu0 0.0
    %4756 = vmatpush2.msra.mxu0 0.0
    %4757 = vmatprep.subr.mxu0 0.0
    %4758 = vmatpush2.msra.mxu0 0.0
    %4759 = vmatprep.subr.mxu0 0.0
    %4760 = vmatpush2.msra.mxu0 0.0
    %4761 = vmatprep.subr.mxu0 0.0
    %4762 = vmatpush2.msra.mxu0 0.0
    %4763 = vmatprep.subr.mxu0 0.0
    %4764 = vmatpush2.msra.mxu0 0.0
    %4765 = vmatprep.subr.mxu0 0.0
    %4766 = vmatpush2.msra.mxu0 0.0
    %4767 = vmatprep.subr.mxu0 0.0
    %4768 = vmatpush2.msra.mxu0 0.0
    %4769 = vmatprep.subr.mxu0 0.0
    %4770 = vmatpush2.msra.mxu0 0.0
    %4771 = vmatprep.subr.mxu0 0.0
    %4772 = vmatpush2.msra.mxu0 0.0
    %4773 = vmatprep.subr.mxu0 0.0
    %4774 = vmatpush2.msra.mxu0 0.0
    %4775 = vmatprep.subr.mxu0 0.0
    %4776 = vmatpush2.msra.mxu0 0.0
    %4777 = vmatprep.subr.mxu0 0.0
    %4778 = vmatpush2.msra.mxu0 0.0
    %4779 = vmatprep.subr.mxu0 0.0
    %4780 = vmatpush2.msra.mxu0 0.0
    %4781 = vmatprep.subr.mxu0 0.0
    %4782 = vmatpush2.msra.mxu0 0.0
    %4783 = vmatprep.subr.mxu0 0.0
    %4784 = vmatpush2.msra.mxu0 0.0
    %4785 = vmatprep.mubr.f32.mxu0 0.0
    %v4786 = vand.u32 %v4380, 4294901760
    %4787 = vmatmul.mubr.f32.gmra.mxu0 %v4786
    %v4788 = vpop.f32.mrf.mxu0
    %v4789 = vadd.f32 %v4706, %v4788
    %v4790 = vpop.f32.mrf.mxu0
    %4791 = vdwg.mxu0
    %4792 = vmatprep.subr.mxu0 0.0
    %4793 = vmatpush1.msra.mxu0 0.0
    %4794 = vmatprep.subr.mxu0 0.0
    %4795 = vmatpush1.msra.mxu0 0.0
    %4796 = vmatprep.subr.mxu0 0.0
    %4797 = vmatpush1.msra.mxu0 0.0
    %4798 = vmatprep.subr.mxu0 0.0
    %4799 = vmatpush1.msra.mxu0 0.0
    %4800 = vmatprep.subr.mxu0 0.0
    %4801 = vmatpush1.msra.mxu0 0.0
    %4802 = vmatprep.subr.mxu0 0.0
    %4803 = vmatpush1.msra.mxu0 0.0
    %4804 = vmatprep.subr.mxu0 0.0
    %4805 = vmatpush1.msra.mxu0 0.0
    %4806 = vmatprep.subr.mxu0 0.0
    %4807 = vmatpush1.msra.mxu0 0.0
    %4808 = vmatprep.subr.mxu0 0.0
    %4809 = vmatpush1.msra.mxu0 0.0
    %4810 = vmatprep.subr.mxu0 0.0
    %4811 = vmatpush1.msra.mxu0 0.0
    %4812 = vmatprep.subr.mxu0 0.0
    %4813 = vmatpush1.msra.mxu0 0.0
    %4814 = vmatprep.subr.mxu0 0.0
    %4815 = vmatpush1.msra.mxu0 0.0
    %4816 = vmatprep.subr.mxu0 0.0
    %v4817 = vand.u32 %v536, 4294901760
    %4818 = vmatpush1.msra.mxu0 %v4817
    %4819 = vmatprep.subr.mxu0 0.0
    %v4820 = vand.u32 %v535, 4294901760
    %4821 = vmatpush1.msra.mxu0 %v4820
    %4822 = vmatprep.subr.mxu0 0.0
    %v4823 = vand.u32 %v534, 4294901760
    %4824 = vmatpush1.msra.mxu0 %v4823
    %4825 = vmatprep.subr.mxu0 0.0
    %v4826 = vand.u32 %v533, 4294901760
    %4827 = vmatpush1.msra.mxu0 %v4826
    %4828 = vmatprep.subr.mxu0 0.0
    %4829 = vmatpush2.msra.mxu0 0.0
    %4830 = vmatprep.subr.mxu0 0.0
    %4831 = vmatpush2.msra.mxu0 0.0
    %4832 = vmatprep.subr.mxu0 0.0
    %4833 = vmatpush2.msra.mxu0 0.0
    %4834 = vmatprep.subr.mxu0 0.0
    %4835 = vmatpush2.msra.mxu0 0.0
    %4836 = vmatprep.subr.mxu0 0.0
    %4837 = vmatpush2.msra.mxu0 0.0
    %4838 = vmatprep.subr.mxu0 0.0
    %4839 = vmatpush2.msra.mxu0 0.0
    %4840 = vmatprep.subr.mxu0 0.0
    %4841 = vmatpush2.msra.mxu0 0.0
    %4842 = vmatprep.subr.mxu0 0.0
    %4843 = vmatpush2.msra.mxu0 0.0
    %4844 = vmatprep.subr.mxu0 0.0
    %4845 = vmatpush2.msra.mxu0 0.0
    %4846 = vmatprep.subr.mxu0 0.0
    %4847 = vmatpush2.msra.mxu0 0.0
    %4848 = vmatprep.subr.mxu0 0.0
    %4849 = vmatpush2.msra.mxu0 0.0
    %4850 = vmatprep.subr.mxu0 0.0
    %4851 = vmatpush2.msra.mxu0 0.0
    %4852 = vmatprep.subr.mxu0 0.0
    %4853 = vmatpush2.msra.mxu0 0.0
    %4854 = vmatprep.subr.mxu0 0.0
    %4855 = vmatpush2.msra.mxu0 0.0
    %4856 = vmatprep.subr.mxu0 0.0
    %4857 = vmatpush2.msra.mxu0 0.0
    %4858 = vmatprep.subr.mxu0 0.0
    %4859 = vmatpush2.msra.mxu0 0.0
    %4860 = vmatprep.mubr.f32.mxu0 0.0
    %v4861 = vand.u32 %v4380, 4294901760
    %4862 = vmatmul.mubr.f32.gmra.mxu0 %v4861
    %v4863 = vpop.f32.mrf.mxu0
    %v4864 = vadd.f32 %v4789, %v4863
    %v4865 = vpop.f32.mrf.mxu0
    %4866 = vdwg.mxu0
    %v4867 = vsub.f32 0.0, %v4367
    %v4868 = vstv %s4377
    %v4869 = vmul.f32 %v4868, %v530
    %v4871 = vrot.slane %v4869, 7
    %v4873 = vadd.f32 %v4867, %v4871
    %v4874 = vrcp.pop %v4378
    %v4875 = vmul.f32 1.0, %v4874
    %v4876 = vstv %s4376
    %v4877 = vmul.f32 %v4875, %v4876
    %v4878 = vmul.f32 %v4877, %v4864
    %v4879 = vadd.f32 %v4873, %v4878
    %v4880 = vmul.f32 %v4879, 0.2
    %v4881 = vstv %s4370
    %v4882 = vmul.f32 %v4881, %v4864
    %4884 = vrot.lane.b32.xlu0 %v4882, 96
    %v4885 = vpop.permute.xlu0 %4884
    %v4887 = vadd.f32 %v4880, %v4885
    %v4888 = vadd.f32 %v4367, %v4887
    %v4889 = vmax.f32 %v4888, 0.0
    %4890 = vst.msk [vmem:[#allocation2 + $0x9] sm:$0x1] %vm1074, %v4889
    %v4891 = vld [vmem:[#allocation2] sm:$0xff]
    %v4892 = vmul.f32 %v4891, 0.09242116
    %v4893 = vld [vmem:[#allocation2 + $0x1] sm:$0xff]
    %v4894 = vmul.f32 %v4893, 0.24137603
    %v4895 = vadd.f32 %v4892, %v4894
    %v4896 = vld [vmem:[#allocation2 + $0x2] sm:$0xff]
    %v4897 = vmul.f32 %v4896, 0.33240563
    %v4898 = vadd.f32 %v4895, %v4897
    %v4899 = vld [vmem:[#allocation2 + $0x3] sm:$0xff]
    %v4900 = vmul.f32 %v4899, 0.24137603
    %v4901 = vadd.f32 %v4898, %v4900
    %v4902 = vld [vmem:[#allocation2 + $0x4] sm:$0xff]
    %v4903 = vmul.f32 %v4902, 0.09242116
    %v4904 = vadd.f32 %v4901, %v4903
    %4905 = vst.msk [vmem:[#allocation13] sm:$0xff] %vm537, %v4904
    // Predicated region
    $region42: #{tpu_custom_call.1} parent=1 // pred_check
      _
    $region43: #{tpu_custom_call.1} parent=1 // pred_check_branch
      %4907 = sbr.rel (0) target = $region45
    $region44: #{tpu_custom_call.1} parent=1 // pred_region
      %s4909 = ssub.s32 128, 128
      %4910 = vsyncadd [#allocation5], %s4909
      %s4912 = sshll.u32 [#allocation13], 4
      %s4913 = int_to_ptr.vmem [resolvable:$true] %s4912
      %4915 = dma.vmem_to_hbm [thread:$0]  %s4913, 128, %s5, [#allocation5]
    $region45: #{tpu_custom_call.1} parent=1 // pred_fallthru
      _
    // Predicated region
    $region46: #{tpu_custom_call.1} parent=1 // pred_check
      _
    $region47: #{tpu_custom_call.1} parent=1 // pred_check_branch
      %4917 = sbr.rel (0) target = $region49
    $region48: #{tpu_custom_call.1} parent=1 // pred_region
      %4918 = dma.done [#allocation5], 128
    $region49: #{tpu_custom_call.1} parent=1 // pred_fallthru
      _
    %4919 = vsyncpa [#allocation4], 1
    %4920 = vsyncpa [#allocation11], 1
    %4921 = vsyncpa [#allocation5], 1
    %4922 = vsyncpa [#allocation6], 1
    %4923 = vsyncpa [#allocation7], 1

</llo_original>
